<compile_context>
chip_gen: v7x
topology: tpu7x:2x2x1
jax: 0.10.0
libtpu: 0.0.40
codegen_flags: <defaults>
</compile_context>

<pallas_src>
import functools

import jax
import jax.numpy as jnp
from jax.experimental import pallas as pl
from jax.experimental.pallas import tpu as pltpu


def _vmem():
    return pl.BlockSpec(memory_space=pltpu.MemorySpace.VMEM)


def _diag_mask(n):
    row = jax.lax.broadcasted_iota(jnp.int32, (n, n), 0)
    col = jax.lax.broadcasted_iota(jnp.int32, (n, n), 1)
    return row == col


# --------------------------------------------------------------------------
# Kernel A: fused setup
#   adjacency_sub = A - diag(w); reg = w * sum(f(diag));
#   bbt = -(B B^T) / (2 rho);   c_bot = 2 * S @ reference   (all transitions)
# --------------------------------------------------------------------------
def _setup_kernel(a_ref, w_ref, b_ref, bt_ref, t_ref, ref_ref,
                  a_sub_ref, bbt_ref, cbot_ref, reg_ref,
                  *, reg_weight, reg_type, inv_2rho):
    n = a_ref.shape[0]
    diag = _diag_mask(n)
    a_sub = a_ref[...] - jnp.where(diag, w_ref[...], jnp.float32(0.0))
    a_sub_ref[...] = a_sub
    dvals = jnp.where(diag, a_sub, jnp.float32(0.0))   # only diagonal nonzero
    per = jnp.abs(dvals) if reg_type == "l1" else dvals * dvals
    reg_ref[...] = reg_weight * jnp.sum(per, axis=(0, 1), keepdims=True)
    bbt_ref[...] = (-inv_2rho) * jnp.dot(
        b_ref[...], bt_ref[...], preferred_element_type=jnp.float32)
    cbot_ref[...] = 2.0 * jnp.dot(
        t_ref[...], ref_ref[...], preferred_element_type=jnp.float32)


def setup_fused(adjacency_norm, weights, control_set, traj_constraints,
                reference_state, rho, reg_weight, reg_type):
    n = adjacency_norm.shape[0]
    k = control_set.shape[1]
    nt = reference_state.shape[1]
    kernel = functools.partial(
        _setup_kernel, reg_weight=float(reg_weight), reg_type=reg_type,
        inv_2rho=1.0 / (2.0 * float(rho)))
    return pl.pallas_call(
        kernel,
        out_shape=(jax.ShapeDtypeStruct((n, n), jnp.float32),   # adjacency_sub
                   jax.ShapeDtypeStruct((n, n), jnp.float32),   # -(B B^T)/(2rho)
                   jax.ShapeDtypeStruct((n, nt), jnp.float32),  # 2*S@ref
                   jax.ShapeDtypeStruct((1, 1), jnp.float32)),  # reg scalar
        in_specs=[_vmem()] * 6,
        out_specs=(_vmem(),) * 4,
        cost_estimate=pl.CostEstimate(
            flops=2 * n * k * n + 2 * n * n * nt,
            transcendentals=0,
            bytes_accessed=4 * (4 * n * n + n + 2 * n * k + 2 * n * nt + 1)),
    )(adjacency_norm, weights, control_set, jnp.transpose(control_set),
      traj_constraints, reference_state)


# --------------------------------------------------------------------------
# Kernel B: top rows of E = EIp @ EIp, fused with the batched l0 RHS
#   E11 = EIp[:n,:] @ EIp[:,:n]     (never written back)
#   E12 = EIp[:n,:] @ EIp[:,n:]     (output, needed for the solve)
#   rhs = XT - E11@X0 - (E11 - I)@C_top - E12@C_bot
# --------------------------------------------------------------------------
def _e_rhs_kernel(etop_ref, eleft_ref, eright_ref, x0_ref, xt_ref, ct_ref, cb_ref,
                  e12_ref, rhs_ref):
    n = eleft_ref.shape[1]
    e_top = etop_ref[...]
    e11 = jnp.dot(e_top, eleft_ref[...], preferred_element_type=jnp.float32)
    e12 = jnp.dot(e_top, eright_ref[...], preferred_element_type=jnp.float32)
    e12_ref[...] = e12
    ident = _diag_mask(n).astype(jnp.float32)
    rhs_ref[...] = (
        xt_ref[...]
        - jnp.dot(e11, x0_ref[...], preferred_element_type=jnp.float32)
        - jnp.dot(e11 - ident, ct_ref[...], preferred_element_type=jnp.float32)
        - jnp.dot(e12, cb_ref[...], preferred_element_type=jnp.float32))


def e_and_rhs(eip, x0, xt, c_top, c_bot):
    two_n = eip.shape[0]
    n = two_n // 2
    nt = x0.shape[1]
    flops = 2 * 2 * n * two_n * n + 3 * 2 * n * n * nt
    bytes_acc = 4 * (3 * n * two_n + 4 * n * nt + n * n + n * nt)
    return pl.pallas_call(
        _e_rhs_kernel,
        out_shape=(jax.ShapeDtypeStruct((n, n), jnp.float32),   # E12
                   jax.ShapeDtypeStruct((n, nt), jnp.float32)), # batched rhs
        in_specs=[_vmem()] * 7,
        out_specs=(_vmem(), _vmem()),
        cost_estimate=pl.CostEstimate(flops=flops, transcendentals=0,
                                      bytes_accessed=bytes_acc),
    )(eip[:n, :], eip[:, :n], eip[:, n:], x0, xt, c_top, c_bot)


# Large-N variant: RHS only (E11/E12 come from the tiled matmul path).
def _rhs_only_kernel(e11_ref, e12_ref, x0_ref, xt_ref, ct_ref, cb_ref, rhs_ref):
    n = e11_ref.shape[0]
    ident = _diag_mask(n).astype(jnp.float32)
    e11 = e11_ref[...]
    rhs_ref[...] = (
        xt_ref[...]
        - jnp.dot(e11, x0_ref[...], preferred_element_type=jnp.float32)
        - jnp.dot(e11 - ident, ct_ref[...], preferred_element_type=jnp.float32)
        - jnp.dot(e12_ref[...], cb_ref[...], preferred_element_type=jnp.float32))


def rhs_only(e11, e12, x0, xt, c_top, c_bot):
    n, nt = x0.shape
    return pl.pallas_call(
        _rhs_only_kernel,
        out_shape=jax.ShapeDtypeStruct((n, nt), jnp.float32),
        in_specs=[_vmem()] * 6,
        out_specs=_vmem(),
    )(e11, e12, x0, xt, c_top, c_bot)


# --------------------------------------------------------------------------
# Kernel C: batched trajectory error (all transitions -> one scalar)
#   xI = A1@X0 + A2@L0 + (A1 - I)@C_top + A2@C_bot      (A1|A2 = EIp[:n, :])
#   err = sum_t ||xI[:,t] - ref[:,t]||_2 / n_transitions
# --------------------------------------------------------------------------
def _traj_err_kernel(a1_ref, a2_ref, x0_ref, l0_ref, ct_ref, cb_ref, ref_ref,
                     err_ref, *, inv_nt):
    n = a1_ref.shape[0]
    a1 = a1_ref[...]
    a2 = a2_ref[...]
    ident = _diag_mask(n).astype(jnp.float32)
    xi = (jnp.dot(a1, x0_ref[...], preferred_element_type=jnp.float32)
          + jnp.dot(a2, l0_ref[...], preferred_element_type=jnp.float32)
          + jnp.dot(a1 - ident, ct_ref[...], preferred_element_type=jnp.float32)
          + jnp.dot(a2, cb_ref[...], preferred_element_type=jnp.float32))
    d = xi - ref_ref[...]
    col_norm = jnp.sqrt(jnp.sum(d * d, axis=0, keepdims=True))          # (1, T)
    err_ref[...] = inv_nt * jnp.sum(col_norm, axis=(0, 1), keepdims=True)


def trajectory_error(eip, x0, l0, c_top, c_bot, ref_state, inv_nt):
    two_n = eip.shape[0]
    n = two_n // 2
    nt = x0.shape[1]
    kernel = functools.partial(_traj_err_kernel, inv_nt=float(inv_nt))
    return pl.pallas_call(
        kernel,
        out_shape=jax.ShapeDtypeStruct((1, 1), jnp.float32),
        in_specs=[_vmem()] * 7,
        out_specs=_vmem(),
        cost_estimate=pl.CostEstimate(flops=4 * 2 * n * n * nt, transcendentals=nt,
                                      bytes_accessed=4 * (2 * n * n + 5 * n * nt + 1)),
    )(eip[:n, :n], eip[:n, n:], x0, l0, c_top, c_bot, ref_state)


# --------------------------------------------------------------------------
# Kernel D: run_null branch, fully fused
#   a_sub + reg + sum((A_sub@A_sub@X0 - XT)^2)/T
# --------------------------------------------------------------------------
def _null_kernel(a_ref, w_ref, x0_ref, xt_ref, a_sub_ref, reg_ref, err_ref,
                 *, reg_weight, reg_type, inv_nt):
    n = a_ref.shape[0]
    diag = _diag_mask(n)
    a_sub = a_ref[...] - jnp.where(diag, w_ref[...], jnp.float32(0.0))
    a_sub_ref[...] = a_sub
    dvals = jnp.where(diag, a_sub, jnp.float32(0.0))
    per = jnp.abs(dvals) if reg_type == "l1" else dvals * dvals
    reg_ref[...] = reg_weight * jnp.sum(per, axis=(0, 1), keepdims=True)
    a2 = jnp.dot(a_sub, a_sub, preferred_element_type=jnp.float32)
    r = jnp.dot(a2, x0_ref[...], preferred_element_type=jnp.float32) - xt_ref[...]
    err_ref[...] = inv_nt * jnp.sum(r * r, axis=(0, 1), keepdims=True)


# --------------------------------------------------------------------------
# Tiled / pipelined matmul for large EIp products (gated; unused at small N).
# --------------------------------------------------------------------------
def _tiled_matmul_kernel(a_ref, b_ref, o_ref, acc_ref):
    @pl.when(pl.program_id(2) == 0)
    def _():
        acc_ref[...] = jnp.zeros_like(acc_ref)
    acc_ref[...] += jnp.dot(a_ref[...], b_ref[...],
                            preferred_element_type=jnp.float32)
    o_ref[...] = acc_ref[...].astype(o_ref.dtype)


def _pick_tile(dim):
    for c in (512, 256, 128):
        if dim % c == 0:
            return c
    return dim


def tiled_matmul(a, b):
    m, k = a.shape
    _, n = b.shape
    tm, tn, tk = _pick_tile(m), _pick_tile(n), _pick_tile(k)
    return pl.pallas_call(
        _tiled_matmul_kernel,
        out_shape=jax.ShapeDtypeStruct((m, n), jnp.float32),
        grid_spec=pltpu.PrefetchScalarGridSpec(
            num_scalar_prefetch=0,
            grid=(m // tm, n // tn, k // tk),
            in_specs=[pl.BlockSpec((tm, tk), lambda i, j, kk: (i, kk)),
                      pl.BlockSpec((tk, tn), lambda i, j, kk: (kk, j))],
            out_specs=pl.BlockSpec((tm, tn), lambda i, j, kk: (i, j)),
            scratch_shapes=[pltpu.VMEM((tm, tn), jnp.float32)]),
        compiler_params=pltpu.CompilerParams(
            dimension_semantics=("parallel", "parallel", "arbitrary"),
            vmem_limit_bytes=48 * 1024 * 1024),
        cost_estimate=pl.CostEstimate(
            flops=2 * m * n * k, transcendentals=0,
            bytes_accessed=4 * (m * k + k * n + m * n)),
    )(a, b)


# --------------------------------------------------------------------------
# NCT forward (mirrors the PyTorch module)
# --------------------------------------------------------------------------
def nct_forward(
    adjacency_weights,
    adjacency_norm,
    initial_state,
    target_state,
    reference_state,
    control_set,
    trajectory_constraints,
    *,
    time_horizon,
    rho,
    eig_weight=0.1,
    reg_weight=1e-4,
    reg_type="l2",
    run_null=False,
):
    f32 = jnp.float32
    adjacency_weights = adjacency_weights.astype(f32)
    adjacency_norm = adjacency_norm.astype(f32)
    initial_state = initial_state.astype(f32)
    target_state = target_state.astype(f32)
    reference_state = reference_state.astype(f32)
    control_set = control_set.astype(f32)
    trajectory_constraints = trajectory_constraints.astype(f32)

    n = adjacency_norm.shape[0]
    nt = initial_state.shape[1]
    inv_nt = 1.0 / float(nt)

    if run_null:
        kernel = functools.partial(_null_kernel, reg_weight=float(reg_weight),
                                   reg_type=reg_type, inv_nt=inv_nt)
        a_sub, reg, nerr = pl.pallas_call(
            kernel,
            out_shape=(jax.ShapeDtypeStruct((n, n), f32),
                       jax.ShapeDtypeStruct((1, 1), f32),
                       jax.ShapeDtypeStruct((1, 1), f32)),
            in_specs=[_vmem()] * 4,
            out_specs=(_vmem(),) * 3,
        )(adjacency_norm, adjacency_weights, initial_state, target_state)
        # TODO(synk): symmetric eigendecomposition has no Pallas equivalent.
        eig = jnp.linalg.eigvalsh(a_sub)
        eig_loss = jnp.mean(-(eig_weight / eig))
        return reg[0, 0] + eig_loss + nerr[0, 0]

    # --- fused setup kernel ------------------------------------------------
    a_sub, bbt_scaled, c_bot2, reg = setup_fused(
        adjacency_norm, adjacency_weights, control_set, trajectory_constraints,
        reference_state, rho, reg_weight, reg_type)

    # TODO(synk): eigvalsh has no Pallas equivalent; plain JAX.
    eig = jnp.linalg.eigvalsh(a_sub)
    eig_loss = jnp.mean(-(eig_weight / eig))

    # M = [[A_sub, -BB^T/(2rho)], [-2S, -A_sub^T]]; assembly kept in XLA (glue).
    m_top = jnp.concatenate([a_sub, bbt_scaled], axis=1)
    m_bot = jnp.concatenate([-2.0 * trajectory_constraints, -a_sub.T], axis=1)
    m_mat = jnp.concatenate([m_top, m_bot], axis=0)
    c_rhs = jnp.concatenate([jnp.zeros((n, nt), f32), c_bot2], axis=0)

    # TODO(synk): matrix exponential / dense LU solve have no Pallas equivalent.
    eip = jax.scipy.linalg.expm(m_mat * (time_horizon / 2.0))
    c_all = jnp.linalg.solve(m_mat, c_rhs)          # one LU, all transitions
    c_top, c_bot = c_all[:n, :], c_all[n:, :]

    use_tiled = (2 * n > 512) and (n % 128 == 0)
    if use_tiled:
        eip_top = eip[:n, :]
        e11 = tiled_matmul(eip_top, eip[:, :n])
        e12 = tiled_matmul(eip_top, eip[:, n:])
        rhs = rhs_only(e11, e12, initial_state, target_state, c_top, c_bot)
    else:
        e12, rhs = e_and_rhs(eip, initial_state, target_state, c_top, c_bot)

    l0 = jnp.linalg.solve(e12, rhs)                 # batched over transitions
    err = trajectory_error(eip, initial_state, l0, c_top, c_bot,
                           reference_state, inv_nt)
    return reg[0, 0] + eig_loss + err[0, 0]


# --------------------------------------------------------------------------
if __name__ == "__main__":
    key = jax.random.PRNGKey(0)
    n_nodes = 16
    n_transitions = 2
    k1, k2, k3, k4 = jax.random.split(key, 4)

    # symmetric "adjacency_norm" with spectral radius < 1
    r = jax.random.normal(k1, (n_nodes, n_nodes), jnp.float32)
    sym = 0.5 * (r + r.T)
    adjacency_norm = 0.9 * sym / jnp.max(jnp.sum(jnp.abs(sym), axis=1))

    initial_state = jax.random.normal(k2, (n_nodes, n_transitions), jnp.float32)
    target_state = jax.random.normal(k3, (n_nodes, n_transitions), jnp.float32)
    reference_state = jax.random.normal(k4, (n_nodes, n_transitions), jnp.float32)
    control_set = jnp.eye(n_nodes, dtype=jnp.float32)
    trajectory_constraints = jnp.eye(n_nodes, dtype=jnp.float32)
    adjacency_weights = jnp.ones((n_nodes, 1), jnp.float32)   # init_weights='one'

    fwd = jax.jit(
        functools.partial(
            nct_forward,
            time_horizon=1.0,
            rho=1.0,
            eig_weight=0.1,
            reg_weight=1e-4,
            reg_type="l2",
            run_null=False,
        )
    )
    loss = fwd(
        adjacency_weights,
        adjacency_norm,
        initial_state,
        target_state,
        reference_state,
        control_set,
        trajectory_constraints,
    )
    jax.block_until_ready(loss)
    print("KERNEL_OK")
</pallas_src>

<mosaic_0001>
module attributes {stable_mosaic.version = 11 : i64} {
  func.func @_setup_kernel(%arg0: memref<16x16xf32, #tpu.memory_space<vmem>>, %arg1: memref<16x1xf32, #tpu.memory_space<vmem>>, %arg2: memref<16x16xf32, #tpu.memory_space<vmem>>, %arg3: memref<16x16xf32, #tpu.memory_space<vmem>>, %arg4: memref<16x16xf32, #tpu.memory_space<vmem>>, %arg5: memref<16x2xf32, #tpu.memory_space<vmem>>, %arg6: memref<16x16xf32, #tpu.memory_space<vmem>>, %arg7: memref<16x16xf32, #tpu.memory_space<vmem>>, %arg8: memref<16x2xf32, #tpu.memory_space<vmem>>, %arg9: memref<1x1xf32, #tpu.memory_space<vmem>>) attributes {dimension_semantics = [], scalar_prefetch = 0 : i64, scratch_operands = 0 : i64, tpu.core_type = #tpu.core_type<tc>} {
    %0 = tpu.iota {dimensions = array<i32: 0>} : vector<16x16xi32>
    %1 = tpu.iota {dimensions = array<i32: 1>} : vector<16x16xi32>
    %2 = arith.cmpi eq, %0, %1 : vector<16x16xi32>
    %c0 = arith.constant 0 : index
    %c0_0 = arith.constant 0 : index
    %3 = vector.load %arg0[%c0, %c0_0] : memref<16x16xf32, #tpu.memory_space<vmem>>, vector<16x16xf32>
    %c0_1 = arith.constant 0 : index
    %c0_2 = arith.constant 0 : index
    %4 = vector.load %arg1[%c0_1, %c0_2] : memref<16x1xf32, #tpu.memory_space<vmem>>, vector<16x1xf32>
    %cst = arith.constant 0.000000e+00 : f32
    %5 = vector.shape_cast %4 : vector<16x1xf32> to vector<16x1xf32>
    %6 = vector.broadcast %5 : vector<16x1xf32> to vector<16x16xf32>
    %7 = vector.broadcast %cst : f32 to vector<16x16xf32>
    %8 = arith.select %2, %6, %7 : vector<16x16xi1>, vector<16x16xf32>
    %9 = arith.subf %3, %8 : vector<16x16xf32>
    %c0_3 = arith.constant 0 : index
    %c0_4 = arith.constant 0 : index
    %10 = vector.load %arg6[%c0_3, %c0_4] : memref<16x16xf32, #tpu.memory_space<vmem>>, vector<16x16xf32>
    tpu.vector_store %arg6[%c0_3, %c0_4], %9 {strides = array<i32>} : memref<16x16xf32, #tpu.memory_space<vmem>>, vector<16x16xf32>,
    %cst_5 = arith.constant 0.000000e+00 : f32
    %11 = vector.broadcast %cst_5 : f32 to vector<16x16xf32>
    %12 = arith.select %2, %9, %11 : vector<16x16xi1>, vector<16x16xf32>
    %13 = arith.mulf %12, %12 : vector<16x16xf32>
    %14 = vector.shape_cast %13 : vector<16x16xf32> to vector<1x16x16xf32>
    %cst_6 = arith.constant dense<0.000000e+00> : vector<1xf32>
    %15 = vector.multi_reduction <add>, %14, %cst_6 [1, 2] : vector<1x16x16xf32> to vector<1xf32>
    %16 = vector.shape_cast %15 : vector<1xf32> to vector<1x1x1xf32>
    %17 = vector.extract %16[0, 0, 0] : f32 from vector<1x1x1xf32>
    %18 = vector.broadcast %17 : f32 to vector<1x1xf32>
    %cst_7 = arith.constant 9.99999974E-5 : f32
    %19 = vector.broadcast %cst_7 : f32 to vector<1x1xf32>
    %20 = arith.mulf %19, %18 : vector<1x1xf32>
    %c0_8 = arith.constant 0 : index
    %c0_9 = arith.constant 0 : index
    %21 = vector.load %arg9[%c0_8, %c0_9] : memref<1x1xf32, #tpu.memory_space<vmem>>, vector<1x1xf32>
    tpu.vector_store %arg9[%c0_8, %c0_9], %20 {strides = array<i32>} : memref<1x1xf32, #tpu.memory_space<vmem>>, vector<1x1xf32>,
    %c0_10 = arith.constant 0 : index
    %c0_11 = arith.constant 0 : index
    %22 = vector.load %arg2[%c0_10, %c0_11] : memref<16x16xf32, #tpu.memory_space<vmem>>, vector<16x16xf32>
    %c0_12 = arith.constant 0 : index
    %c0_13 = arith.constant 0 : index
    %23 = vector.load %arg3[%c0_12, %c0_13] : memref<16x16xf32, #tpu.memory_space<vmem>>, vector<16x16xf32>
    %cst_14 = arith.constant dense<0.000000e+00> : vector<16x16xf32>
    %24 = tpu.matmul %22, %23, %cst_14 {dimension_numbers = #tpu.dot_dimension_numbers<[1], [0], [0], [1], [0, 0, 1, 1], [], []>} : vector<16x16xf32>, vector<16x16xf32>, vector<16x16xf32> -> vector<16x16xf32>
    %cst_15 = arith.constant -5.000000e-01 : f32
    %25 = vector.broadcast %cst_15 : f32 to vector<16x16xf32>
    %26 = arith.mulf %25, %24 : vector<16x16xf32>
    %c0_16 = arith.constant 0 : index
    %c0_17 = arith.constant 0 : index
    %27 = vector.load %arg7[%c0_16, %c0_17] : memref<16x16xf32, #tpu.memory_space<vmem>>, vector<16x16xf32>
    tpu.vector_store %arg7[%c0_16, %c0_17], %26 {strides = array<i32>} : memref<16x16xf32, #tpu.memory_space<vmem>>, vector<16x16xf32>,
    %c0_18 = arith.constant 0 : index
    %c0_19 = arith.constant 0 : index
    %28 = vector.load %arg4[%c0_18, %c0_19] : memref<16x16xf32, #tpu.memory_space<vmem>>, vector<16x16xf32>
    %c0_20 = arith.constant 0 : index
    %c0_21 = arith.constant 0 : index
    %29 = vector.load %arg5[%c0_20, %c0_21] : memref<16x2xf32, #tpu.memory_space<vmem>>, vector<16x2xf32>
    %cst_22 = arith.constant dense<0.000000e+00> : vector<16x2xf32>
    %30 = tpu.matmul %28, %29, %cst_22 {dimension_numbers = #tpu.dot_dimension_numbers<[1], [0], [0], [1], [0, 0, 1, 1], [], []>} : vector<16x16xf32>, vector<16x2xf32>, vector<16x2xf32> -> vector<16x2xf32>
    %cst_23 = arith.constant 2.000000e+00 : f32
    %31 = vector.broadcast %cst_23 : f32 to vector<16x2xf32>
    %32 = arith.mulf %31, %30 : vector<16x2xf32>
    %c0_24 = arith.constant 0 : index
    %c0_25 = arith.constant 0 : index
    %33 = vector.load %arg8[%c0_24, %c0_25] : memref<16x2xf32, #tpu.memory_space<vmem>>, vector<16x2xf32>
    tpu.vector_store %arg8[%c0_24, %c0_25], %32 {strides = array<i32>} : memref<16x2xf32, #tpu.memory_space<vmem>>, vector<16x2xf32>,
    return
  }
}

module attributes {stable_mosaic.version = 11 : i64} {
  func.func @_e_rhs_kernel(%arg0: memref<16x32xf32, #tpu.memory_space<vmem>>, %arg1: memref<32x16xf32, #tpu.memory_space<vmem>>, %arg2: memref<32x16xf32, #tpu.memory_space<vmem>>, %arg3: memref<16x2xf32, #tpu.memory_space<vmem>>, %arg4: memref<16x2xf32, #tpu.memory_space<vmem>>, %arg5: memref<16x2xf32, #tpu.memory_space<vmem>>, %arg6: memref<16x2xf32, #tpu.memory_space<vmem>>, %arg7: memref<16x16xf32, #tpu.memory_space<vmem>>, %arg8: memref<16x2xf32, #tpu.memory_space<vmem>>) attributes {dimension_semantics = [], scalar_prefetch = 0 : i64, scratch_operands = 0 : i64, tpu.core_type = #tpu.core_type<tc>} {
    %c0 = arith.constant 0 : index
    %c0_0 = arith.constant 0 : index
    %0 = vector.load %arg0[%c0, %c0_0] : memref<16x32xf32, #tpu.memory_space<vmem>>, vector<16x32xf32>
    %c0_1 = arith.constant 0 : index
    %c0_2 = arith.constant 0 : index
    %1 = vector.load %arg1[%c0_1, %c0_2] : memref<32x16xf32, #tpu.memory_space<vmem>>, vector<32x16xf32>
    %cst = arith.constant dense<0.000000e+00> : vector<16x16xf32>
    %2 = tpu.matmul %0, %1, %cst {dimension_numbers = #tpu.dot_dimension_numbers<[1], [0], [0], [1], [0, 0, 1, 1], [], []>} : vector<16x32xf32>, vector<32x16xf32>, vector<16x16xf32> -> vector<16x16xf32>
    %c0_3 = arith.constant 0 : index
    %c0_4 = arith.constant 0 : index
    %3 = vector.load %arg2[%c0_3, %c0_4] : memref<32x16xf32, #tpu.memory_space<vmem>>, vector<32x16xf32>
    %cst_5 = arith.constant dense<0.000000e+00> : vector<16x16xf32>
    %4 = tpu.matmul %0, %3, %cst_5 {dimension_numbers = #tpu.dot_dimension_numbers<[1], [0], [0], [1], [0, 0, 1, 1], [], []>} : vector<16x32xf32>, vector<32x16xf32>, vector<16x16xf32> -> vector<16x16xf32>
    %c0_6 = arith.constant 0 : index
    %c0_7 = arith.constant 0 : index
    %5 = vector.load %arg7[%c0_6, %c0_7] : memref<16x16xf32, #tpu.memory_space<vmem>>, vector<16x16xf32>
    tpu.vector_store %arg7[%c0_6, %c0_7], %4 {strides = array<i32>} : memref<16x16xf32, #tpu.memory_space<vmem>>, vector<16x16xf32>,
    %6 = tpu.iota {dimensions = array<i32: 0>} : vector<16x16xi32>
    %7 = tpu.iota {dimensions = array<i32: 1>} : vector<16x16xi32>
    %8 = arith.cmpi eq, %6, %7 : vector<16x16xi32>
    %9 = arith.extui %8 : vector<16x16xi1> to vector<16x16xi32>
    %10 = arith.sitofp %9 : vector<16x16xi32> to vector<16x16xf32>
    %c0_8 = arith.constant 0 : index
    %c0_9 = arith.constant 0 : index
    %11 = vector.load %arg4[%c0_8, %c0_9] : memref<16x2xf32, #tpu.memory_space<vmem>>, vector<16x2xf32>
    %c0_10 = arith.constant 0 : index
    %c0_11 = arith.constant 0 : index
    %12 = vector.load %arg3[%c0_10, %c0_11] : memref<16x2xf32, #tpu.memory_space<vmem>>, vector<16x2xf32>
    %cst_12 = arith.constant dense<0.000000e+00> : vector<16x2xf32>
    %13 = tpu.matmul %2, %12, %cst_12 {dimension_numbers = #tpu.dot_dimension_numbers<[1], [0], [0], [1], [0, 0, 1, 1], [], []>} : vector<16x16xf32>, vector<16x2xf32>, vector<16x2xf32> -> vector<16x2xf32>
    %14 = arith.subf %11, %13 : vector<16x2xf32>
    %15 = arith.subf %2, %10 : vector<16x16xf32>
    %c0_13 = arith.constant 0 : index
    %c0_14 = arith.constant 0 : index
    %16 = vector.load %arg5[%c0_13, %c0_14] : memref<16x2xf32, #tpu.memory_space<vmem>>, vector<16x2xf32>
    %cst_15 = arith.constant dense<0.000000e+00> : vector<16x2xf32>
    %17 = tpu.matmul %15, %16, %cst_15 {dimension_numbers = #tpu.dot_dimension_numbers<[1], [0], [0], [1], [0, 0, 1, 1], [], []>} : vector<16x16xf32>, vector<16x2xf32>, vector<16x2xf32> -> vector<16x2xf32>
    %18 = arith.subf %14, %17 : vector<16x2xf32>
    %c0_16 = arith.constant 0 : index
    %c0_17 = arith.constant 0 : index
    %19 = vector.load %arg6[%c0_16, %c0_17] : memref<16x2xf32, #tpu.memory_space<vmem>>, vector<16x2xf32>
    %cst_18 = arith.constant dense<0.000000e+00> : vector<16x2xf32>
    %20 = tpu.matmul %4, %19, %cst_18 {dimension_numbers = #tpu.dot_dimension_numbers<[1], [0], [0], [1], [0, 0, 1, 1], [], []>} : vector<16x16xf32>, vector<16x2xf32>, vector<16x2xf32> -> vector<16x2xf32>
    %21 = arith.subf %18, %20 : vector<16x2xf32>
    %c0_19 = arith.constant 0 : index
    %c0_20 = arith.constant 0 : index
    %22 = vector.load %arg8[%c0_19, %c0_20] : memref<16x2xf32, #tpu.memory_space<vmem>>, vector<16x2xf32>
    tpu.vector_store %arg8[%c0_19, %c0_20], %21 {strides = array<i32>} : memref<16x2xf32, #tpu.memory_space<vmem>>, vector<16x2xf32>,
    return
  }
}

module attributes {stable_mosaic.version = 11 : i64} {
  func.func @_traj_err_kernel(%arg0: memref<16x16xf32, #tpu.memory_space<vmem>>, %arg1: memref<16x16xf32, #tpu.memory_space<vmem>>, %arg2: memref<16x2xf32, #tpu.memory_space<vmem>>, %arg3: memref<16x2xf32, #tpu.memory_space<vmem>>, %arg4: memref<16x2xf32, #tpu.memory_space<vmem>>, %arg5: memref<16x2xf32, #tpu.memory_space<vmem>>, %arg6: memref<16x2xf32, #tpu.memory_space<vmem>>, %arg7: memref<1x1xf32, #tpu.memory_space<vmem>>) attributes {dimension_semantics = [], scalar_prefetch = 0 : i64, scratch_operands = 0 : i64, tpu.core_type = #tpu.core_type<tc>} {
    %c0 = arith.constant 0 : index
    %c0_0 = arith.constant 0 : index
    %0 = vector.load %arg0[%c0, %c0_0] : memref<16x16xf32, #tpu.memory_space<vmem>>, vector<16x16xf32>
    %c0_1 = arith.constant 0 : index
    %c0_2 = arith.constant 0 : index
    %1 = vector.load %arg1[%c0_1, %c0_2] : memref<16x16xf32, #tpu.memory_space<vmem>>, vector<16x16xf32>
    %2 = tpu.iota {dimensions = array<i32: 0>} : vector<16x16xi32>
    %3 = tpu.iota {dimensions = array<i32: 1>} : vector<16x16xi32>
    %4 = arith.cmpi eq, %2, %3 : vector<16x16xi32>
    %5 = arith.extui %4 : vector<16x16xi1> to vector<16x16xi32>
    %6 = arith.sitofp %5 : vector<16x16xi32> to vector<16x16xf32>
    %c0_3 = arith.constant 0 : index
    %c0_4 = arith.constant 0 : index
    %7 = vector.load %arg2[%c0_3, %c0_4] : memref<16x2xf32, #tpu.memory_space<vmem>>, vector<16x2xf32>
    %cst = arith.constant dense<0.000000e+00> : vector<16x2xf32>
    %8 = tpu.matmul %0, %7, %cst {dimension_numbers = #tpu.dot_dimension_numbers<[1], [0], [0], [1], [0, 0, 1, 1], [], []>} : vector<16x16xf32>, vector<16x2xf32>, vector<16x2xf32> -> vector<16x2xf32>
    %c0_5 = arith.constant 0 : index
    %c0_6 = arith.constant 0 : index
    %9 = vector.load %arg3[%c0_5, %c0_6] : memref<16x2xf32, #tpu.memory_space<vmem>>, vector<16x2xf32>
    %cst_7 = arith.constant dense<0.000000e+00> : vector<16x2xf32>
    %10 = tpu.matmul %1, %9, %cst_7 {dimension_numbers = #tpu.dot_dimension_numbers<[1], [0], [0], [1], [0, 0, 1, 1], [], []>} : vector<16x16xf32>, vector<16x2xf32>, vector<16x2xf32> -> vector<16x2xf32>
    %11 = arith.addf %8, %10 : vector<16x2xf32>
    %12 = arith.subf %0, %6 : vector<16x16xf32>
    %c0_8 = arith.constant 0 : index
    %c0_9 = arith.constant 0 : index
    %13 = vector.load %arg4[%c0_8, %c0_9] : memref<16x2xf32, #tpu.memory_space<vmem>>, vector<16x2xf32>
    %cst_10 = arith.constant dense<0.000000e+00> : vector<16x2xf32>
    %14 = tpu.matmul %12, %13, %cst_10 {dimension_numbers = #tpu.dot_dimension_numbers<[1], [0], [0], [1], [0, 0, 1, 1], [], []>} : vector<16x16xf32>, vector<16x2xf32>, vector<16x2xf32> -> vector<16x2xf32>
    %15 = arith.addf %11, %14 : vector<16x2xf32>
    %c0_11 = arith.constant 0 : index
    %c0_12 = arith.constant 0 : index
    %16 = vector.load %arg5[%c0_11, %c0_12] : memref<16x2xf32, #tpu.memory_space<vmem>>, vector<16x2xf32>
    %cst_13 = arith.constant dense<0.000000e+00> : vector<16x2xf32>
    %17 = tpu.matmul %1, %16, %cst_13 {dimension_numbers = #tpu.dot_dimension_numbers<[1], [0], [0], [1], [0, 0, 1, 1], [], []>} : vector<16x16xf32>, vector<16x2xf32>, vector<16x2xf32> -> vector<16x2xf32>
    %18 = arith.addf %15, %17 : vector<16x2xf32>
    %c0_14 = arith.constant 0 : index
    %c0_15 = arith.constant 0 : index
    %19 = vector.load %arg6[%c0_14, %c0_15] : memref<16x2xf32, #tpu.memory_space<vmem>>, vector<16x2xf32>
    %20 = arith.subf %18, %19 : vector<16x2xf32>
    %21 = arith.mulf %20, %20 : vector<16x2xf32>
    %cst_16 = arith.constant dense<0.000000e+00> : vector<2xf32>
    %22 = vector.multi_reduction <add>, %21, %cst_16 [0] : vector<16x2xf32> to vector<2xf32>
    %23 = vector.shape_cast %22 : vector<2xf32> to vector<1x2xf32>
    %24 = math.sqrt %23 : vector<1x2xf32>
    %25 = vector.shape_cast %24 : vector<1x2xf32> to vector<1x1x2xf32>
    %cst_17 = arith.constant dense<0.000000e+00> : vector<1xf32>
    %26 = vector.multi_reduction <add>, %25, %cst_17 [1, 2] : vector<1x1x2xf32> to vector<1xf32>
    %27 = vector.shape_cast %26 : vector<1xf32> to vector<1x1x1xf32>
    %28 = vector.extract %27[0, 0, 0] : f32 from vector<1x1x1xf32>
    %29 = vector.broadcast %28 : f32 to vector<1x1xf32>
    %cst_18 = arith.constant 5.000000e-01 : f32
    %30 = vector.broadcast %cst_18 : f32 to vector<1x1xf32>
    %31 = arith.mulf %30, %29 : vector<1x1xf32>
    %c0_19 = arith.constant 0 : index
    %c0_20 = arith.constant 0 : index
    %32 = vector.load %arg7[%c0_19, %c0_20] : memref<1x1xf32, #tpu.memory_space<vmem>>, vector<1x1xf32>
    tpu.vector_store %arg7[%c0_19, %c0_20], %31 {strides = array<i32>} : memref<1x1xf32, #tpu.memory_space<vmem>>, vector<1x1xf32>,
    return
  }
}

</mosaic_0001>

<llo_original>
// kernel: custom-call.35
$region0: #{custom-call.35}
  %s0 = inlined_call_operand.vmem [shape: f32[32,32], index: 0, kind: input, shape index: {}]
  %s1 = inlined_call_operand.vmem [shape: f32[32,32], index: 1, kind: output, shape index: {0}]
  %s2 = inlined_call_operand.hbm [shape: s32[32], index: 2, kind: output, shape index: {1}]
  %s3 = inlined_call_operand.vmem [shape: s32[32], index: 3, kind: output, shape index: {2}]
  %4 = xla_tuple %s1, %s2, %s3
  $region1: #{custom-call.35} parent=0
    #allocation0 [shape = 'u8[16384]{0}', space=vmem, size = 0x4000, scoped, tag = 'operand span for operand 0']
    #allocation1 [shape = 'u8[16384]{0}', space=vmem, size = 0x4000, scoped, tag = 'operand span for operand 1']
    #allocation2 [shape = 'u8[4096]{0}', space=vmem, size = 0x1000, scoped, tag = 'operand span for operand 2']
    #allocation3 [shape = 'u8[512]{0}', space=vmem, size = 0x400, scoped, tag = 'packed  for operand 2']
    #allocation4 [shape = 's32[1]{0}', space=sflag, size = 0x4, scoped, tag = 'scoped memory for custom-call.35']
    #allocation5 [shape = 'u8[4096]{0}', space=vmem, size = 0x1000, scoped, tag = 'operand span for operand 3']
    #allocation6 [shape = 'u8[512]{0}', space=vmem, size = 0x400, scoped, tag = 'packed  for operand 3']
    #allocation7 [shape = 's32[32,128]{1,0}', space=vmem, size = 0x4000, scoped, tag = 'scratch for permutations']
    %5 = vsyncpa [#allocation4], 0
    %p7 = scmp.gt.s32.totalorder 32, 0
    // Predicated region
    $region2: #{custom-call.35} parent=1 // pred_check
      %p8 = pneg %p7
    $region3: #{custom-call.35} parent=1 // pred_check_branch
      %10 = sbr.rel (%p8) target = $region5
    $region4: #{custom-call.35} parent=1 // pred_region
      %s11 = sshra.s32 32, 3
      %p12 = scmp.gt.s32.totalorder %s11, 0
      // Predicated region
      $region6: #{custom-call.35} parent=4 // pred_check
        %p13 = pneg %p12
      $region7: #{custom-call.35} parent=4 // pred_check_branch
        %15 = sbr.rel (%p13) target = $region9
      $region8: #{custom-call.35} parent=4 // pred_region
        %s16 = ssub.s32 %s11, 1
        %s17 = smul.u32 %s16, 128
        %s18 = sshra.s32 %s17, 4
        %s19 = scalar_lea.vmem %s0, %s18
        %v20 = vld [vmem:[%s0] sm:$0xff]
        // While loop
        $region10: #{custom-call.35} parent=8 // loop_pre_header
          _
        $region11: #{custom-call.35} parent=8 // loop_header
          %s21 = sphi %s0, %s43
          %s22 = sphi [#allocation0], %s44
          %v23 = vphi %v20, %v45
          %s24 = ssub.s32 %s19, 64
          %p25 = scmp.gt.s32.totalorder %s21, %s24
        $region12: #{custom-call.35} parent=8 // loop_header_branch
          %27 = sbr.rel (%p25) target = $region16
        $region13: #{custom-call.35} parent=8 // loop_body
          %28 = vst [vmem:[%s22] sm:$0xff] %v23
          %v29 = vld [vmem:[%s21 + $0x8] sm:$0xff]
          %30 = vst [vmem:[%s22 + $0x8] sm:$0xff] %v29
          %v31 = vld [vmem:[%s21 + $0x10] sm:$0xff]
          %32 = vst [vmem:[%s22 + $0x10] sm:$0xff] %v31
          %v33 = vld [vmem:[%s21 + $0x18] sm:$0xff]
          %34 = vst [vmem:[%s22 + $0x18] sm:$0xff] %v33
          %v35 = vld [vmem:[%s21 + $0x20] sm:$0xff]
          %36 = vst [vmem:[%s22 + $0x20] sm:$0xff] %v35
          %v37 = vld [vmem:[%s21 + $0x28] sm:$0xff]
          %38 = vst [vmem:[%s22 + $0x28] sm:$0xff] %v37
          %v39 = vld [vmem:[%s21 + $0x30] sm:$0xff]
          %40 = vst [vmem:[%s22 + $0x30] sm:$0xff] %v39
          %v41 = vld [vmem:[%s21 + $0x38] sm:$0xff]
          %42 = vst [vmem:[%s22 + $0x38] sm:$0xff] %v41
        $region14: #{custom-call.35} parent=8 // loop_footer
          %s43 = scalar_lea.vmem %s21, 64
          %s44 = scalar_lea.vmem %s22, 64
          %v45 = vld [vmem:[%s21 + $0x40] sm:$0xff]
        $region15: #{custom-call.35} parent=8 // loop_footer_branch
          %46 = sbr.rel target = $region11
        $region16: #{custom-call.35} parent=8 // loop_exit
          _
        // While loop
        $region17: #{custom-call.35} parent=8 // loop_pre_header
          _
        $region18: #{custom-call.35} parent=8 // loop_header
          %s47 = sphi %s21, %s55
          %s48 = sphi %s22, %s56
          %v49 = vphi %v23, %v49
          %p50 = scmp.gt.s32.totalorder %s47, %s19
        $region19: #{custom-call.35} parent=8 // loop_header_branch
          %52 = sbr.rel (%p50) target = $region23
        $region20: #{custom-call.35} parent=8 // loop_body
          %v53 = vld [vmem:[%s47] sm:$0xff]
          %54 = vst [vmem:[%s48] sm:$0xff] %v53
        $region21: #{custom-call.35} parent=8 // loop_footer
          %s55 = scalar_lea.vmem %s47, 8
          %s56 = scalar_lea.vmem %s48, 8
        $region22: #{custom-call.35} parent=8 // loop_footer_branch
          %57 = sbr.rel target = $region18
        $region23: #{custom-call.35} parent=8 // loop_exit
          _
      $region9: #{custom-call.35} parent=4 // pred_fallthru
        _
      %s58 = sand.u32 32, 7
      %s59 = sshllo.u32 0, %s58
      %s60 = smul.u32 %s11, 128
      %s61 = sshra.s32 %s60, 4
      %s62 = scalar_lea.vmem [#allocation0], %s61
      %s63 = smul.u32 %s11, 128
      %s64 = sshra.s32 %s63, 4
      %s65 = scalar_lea.vmem %s0, %s64
      %v66 = vld [vmem:[%s65] sm:%s59]
      %67 = vst [vmem:[%s62] sm:%s59] %v66
    $region5: #{custom-call.35} parent=1 // pred_fallthru
      _
    %v68 = vld [vmem:[#allocation0] sm:$0xff]
    %69 = vst [vmem:[#allocation1] sm:$0xff] %v68
    %s70 = scalar_lea.vmem [#allocation1], 8
    %s71 = scalar_lea.vmem [#allocation0], 8
    %v72 = vld [vmem:[%s71] sm:$0xff]
    %73 = vst [vmem:[%s70] sm:$0xff] %v72
    %s74 = scalar_lea.vmem [#allocation1], 16
    %s75 = scalar_lea.vmem [#allocation0], 16
    %v76 = vld [vmem:[%s75] sm:$0xff]
    %77 = vst [vmem:[%s74] sm:$0xff] %v76
    %s78 = scalar_lea.vmem [#allocation1], 24
    %s79 = scalar_lea.vmem [#allocation0], 24
    %v80 = vld [vmem:[%s79] sm:$0xff]
    %81 = vst [vmem:[%s78] sm:$0xff] %v80
    %82 = vst [vmem:[#allocation2] sm:$0x1] 0
    %v83 = vlaneseq
    %v84 = vshrl.u32 %v83, 7
    %v85 = vmov %v84
    loop: start=0, step=1, limit=4
    $region24: #{custom-call.35} parent=1 // loop_pre_header
      _
    $region25: #{custom-call.35} parent=1 // loop_header
      %s87 = sphi 0, %s91
      %p88 = scmp.ge.s32.totalorder %s87, 4
    $region26: #{custom-call.35} parent=1 // loop_header_branch
      %90 = sbr.rel (%p88) target = $region30
    $region27: #{custom-call.35} parent=1 // loop_body
      %s92 = smul.addr %s87, 8
      %s93 = scalar_lea.vmem [#allocation7], %s92
      %s94 = smul.u32 %s87, 8
      %v95 = vstv %s94
      %v96 = vadd.s32 %v85, %v95
      %97 = vst [vmem:[%s93] sm:$0xff] %v96
    $region28: #{custom-call.35} parent=1 // loop_footer
      %s91 = sadd.s32 1, %s87
    $region29: #{custom-call.35} parent=1 // loop_footer_branch
      %86 = sbr.rel target = $region25
    $region30: #{custom-call.35} parent=1 // loop_exit
      _
    loop: start=0, step=1, limit=32
    $region31: #{custom-call.35} parent=1 // loop_pre_header
      _
    $region32: #{custom-call.35} parent=1 // loop_header
      %s99 = sphi 0, %s103
      %p100 = scmp.ge.s32.totalorder %s99, 32
    $region33: #{custom-call.35} parent=1 // loop_header_branch
      %102 = sbr.rel (%p100) target = $region37
    $region34: #{custom-call.35} parent=1 // loop_body
      %v104 = vstv %s99
      %v105 = vlaneseq
      %v106 = vshrl.u32 %v105, 7
      %v107 = vmov %v106
      %v108 = vld [vmem:[#allocation1] sm:$0xff]
      %v109 = vand.u32 2147483647, %v108
      %v111 = vstv %s99
      %vm112 = vcmp.ge.s32.totalorder %v107, %v111
      %vm113 = vcmp.lt.s32.totalorder %v107, 32
      %vm114 = vmand %vm112, %vm113
      %vm115 = vcmp.lt.f32.partialorder -inf, %v109
      %vm116 = vmand %vm114, %vm115
      %v117 = vsel %vm116, %v107, %v104
      %v118 = vsel %vm116, %v109, -inf
      %s119 = scalar_lea.vmem [#allocation1], 8
      %v120 = vld [vmem:[%s119] sm:$0xff]
      %v121 = vand.u32 2147483647, %v120
      %v122 = vadd.s32 %v107, 8
      %v123 = vstv %s99
      %vm124 = vcmp.ge.s32.totalorder %v122, %v123
      %vm125 = vcmp.lt.s32.totalorder %v122, 32
      %vm126 = vmand %vm124, %vm125
      %vm127 = vcmp.lt.f32.partialorder %v118, %v121
      %vm128 = vmand %vm126, %vm127
      %v129 = vsel %vm128, %v122, %v117
      %v130 = vsel %vm128, %v121, %v118
      %s131 = scalar_lea.vmem [#allocation1], 16
      %v132 = vld [vmem:[%s131] sm:$0xff]
      %v133 = vand.u32 2147483647, %v132
      %v134 = vadd.s32 %v107, 16
      %v135 = vstv %s99
      %vm136 = vcmp.ge.s32.totalorder %v134, %v135
      %vm137 = vcmp.lt.s32.totalorder %v134, 32
      %vm138 = vmand %vm136, %vm137
      %vm139 = vcmp.lt.f32.partialorder %v130, %v133
      %vm140 = vmand %vm138, %vm139
      %v141 = vsel %vm140, %v134, %v129
      %v142 = vsel %vm140, %v133, %v130
      %s143 = scalar_lea.vmem [#allocation1], 24
      %v144 = vld [vmem:[%s143] sm:$0xff]
      %v145 = vand.u32 2147483647, %v144
      %v146 = vadd.s32 %v107, 24
      %v147 = vstv %s99
      %vm148 = vcmp.ge.s32.totalorder %v146, %v147
      %vm149 = vcmp.lt.s32.totalorder %v146, 32
      %vm150 = vmand %vm148, %vm149
      %vm151 = vcmp.lt.f32.partialorder %v142, %v145
      %vm152 = vmand %vm150, %vm151
      %v153 = vsel %vm152, %v146, %v141
      %v154 = vsel %vm152, %v145, %v142
      %v155 = vrot.slane %v154, 1
      %v156 = vrot.slane %v153, 1
      %vm157 = vcmp.ge.f32.partialorder %v155, %v154
      %v158 = vsel %vm157, %v155, %v154
      %v159 = vsel %vm157, %v156, %v153
      %v160 = vrot.slane %v155, 1
      %v161 = vrot.slane %v156, 1
      %vm162 = vcmp.ge.f32.partialorder %v160, %v158
      %v163 = vsel %vm162, %v160, %v158
      %v164 = vsel %vm162, %v161, %v159
      %v165 = vrot.slane %v160, 1
      %v166 = vrot.slane %v161, 1
      %vm167 = vcmp.ge.f32.partialorder %v165, %v163
      %v168 = vsel %vm167, %v165, %v163
      %v169 = vsel %vm167, %v166, %v164
      %v170 = vrot.slane %v165, 1
      %v171 = vrot.slane %v166, 1
      %vm172 = vcmp.ge.f32.partialorder %v170, %v168
      %v173 = vsel %vm172, %v170, %v168
      %v174 = vsel %vm172, %v171, %v169
      %v175 = vrot.slane %v170, 1
      %v176 = vrot.slane %v171, 1
      %vm177 = vcmp.ge.f32.partialorder %v175, %v173
      %v178 = vsel %vm177, %v175, %v173
      %v179 = vsel %vm177, %v176, %v174
      %v180 = vrot.slane %v175, 1
      %v181 = vrot.slane %v176, 1
      %vm182 = vcmp.ge.f32.partialorder %v180, %v178
      %v183 = vsel %vm182, %v180, %v178
      %v184 = vsel %vm182, %v181, %v179
      %v185 = vrot.slane %v180, 1
      %v186 = vrot.slane %v181, 1
      %vm187 = vcmp.ge.f32.partialorder %v185, %v183
      %v188 = vsel %vm187, %v185, %v183
      %v189 = vsel %vm187, %v186, %v184
      %s190 = ssub.s32 128, %s99
      %191 = vrot.lane.b32.xlu0 %v189, %s190
      %v192 = vpop.permute.xlu0 %191
      %s193 = vtos %v192
      %v194 = vstv %s99
      %v195 = vlaneseq
      %v196 = vand.u32 %v195, 127
      %vm197 = vcmp.eq.s32.totalorder %v196, %v194
      %v198 = vstv %s193
      %v199 = vld [vmem:[#allocation2] ss:$0 sm:$0xff]
      %v200 = vsel %vm197, %v198, %v199
      %201 = vst [vmem:[#allocation2] sm:$0x1] %v200
      %s202 = scalar_lea.vmem [#allocation1], %s99
      %s203 = scalar_lea.vmem [#allocation1], %s193
      %v204 = vld [vmem:[%s202] ss:$0 sm:$0xff]
      %v205 = vld [vmem:[%s203] ss:$0 sm:$0xff]
      %206 = vst [vmem:[%s203] sm:$0x1] %v204
      %207 = vst [vmem:[%s202] sm:$0x1] %v205
      %s208 = scalar_lea.vmem [#allocation7], %s99
      %s209 = scalar_lea.vmem [#allocation7], %s193
      %v210 = vld [vmem:[%s208] ss:$0 sm:$0xff]
      %v211 = vld [vmem:[%s209] ss:$0 sm:$0xff]
      %212 = vst [vmem:[%s209] sm:$0x1] %v210
      %213 = vst [vmem:[%s208] sm:$0x1] %v211
      %vm214 = vcmp.ne.f32.partialorder %v205, 0.0
      %vm215 = vmand %vm197, %vm214
      %v216 = vsel %vm215, %v205, 1.0
      %v217 = vlaneseq
      %v218 = vand.u32 %v217, 127
      %v219 = vstv %s99
      %vm220 = vcmp.gt.s32.totalorder %v218, %v219
      %v221 = vsel %vm220, %v205, 0.0
      %v222 = vlaneseq
      %v223 = vshrl.u32 %v222, 7
      %v224 = vmov %v223
      %v225 = vld [vmem:[#allocation1] sm:$0xff]
      %v227 = vstv %s99
      %vm228 = vcmp.gt.s32.totalorder %v224, %v227
      %v229 = vsel %vm228, %v216, 1.0
      %v230 = vrcp.pop %v229
      %v231 = vmul.f32 %v225, %v230
      %vm232 = vmand %vm228, %vm197
      %v233 = vsel %vm232, %v231, 0.0
      %234 = vadd.xlane.f32.xlu0 %v233
      %v235 = vpop.xlane.xlu0 %234
      %v236 = vmul.f32 %v235, %v221
      %v237 = vsub.f32 %v231, %v236
      %238 = vst [vmem:[#allocation1] sm:$0xff] %v237
      %s239 = scalar_lea.vmem [#allocation1], 8
      %v240 = vld [vmem:[%s239] sm:$0xff]
      %v241 = vadd.s32 %v224, 8
      %v242 = vstv %s99
      %vm243 = vcmp.gt.s32.totalorder %v241, %v242
      %v244 = vsel %vm243, %v216, 1.0
      %v245 = vrcp.pop %v244
      %v246 = vmul.f32 %v240, %v245
      %vm247 = vmand %vm243, %vm197
      %v248 = vsel %vm247, %v246, 0.0
      %249 = vadd.xlane.f32.xlu0 %v248
      %v250 = vpop.xlane.xlu0 %249
      %v251 = vmul.f32 %v250, %v221
      %v252 = vsub.f32 %v246, %v251
      %253 = vst [vmem:[%s239] sm:$0xff] %v252
      %s254 = scalar_lea.vmem [#allocation1], 16
      %v255 = vld [vmem:[%s254] sm:$0xff]
      %v256 = vadd.s32 %v224, 16
      %v257 = vstv %s99
      %vm258 = vcmp.gt.s32.totalorder %v256, %v257
      %v259 = vsel %vm258, %v216, 1.0
      %v260 = vrcp.pop %v259
      %v261 = vmul.f32 %v255, %v260
      %vm262 = vmand %vm258, %vm197
      %v263 = vsel %vm262, %v261, 0.0
      %264 = vadd.xlane.f32.xlu0 %v263
      %v265 = vpop.xlane.xlu0 %264
      %v266 = vmul.f32 %v265, %v221
      %v267 = vsub.f32 %v261, %v266
      %268 = vst [vmem:[%s254] sm:$0xff] %v267
      %s269 = scalar_lea.vmem [#allocation1], 24
      %v270 = vld [vmem:[%s269] sm:$0xff]
      %v271 = vadd.s32 %v224, 24
      %v272 = vstv %s99
      %vm273 = vcmp.gt.s32.totalorder %v271, %v272
      %v274 = vsel %vm273, %v216, 1.0
      %v275 = vrcp.pop %v274
      %v276 = vmul.f32 %v270, %v275
      %vm277 = vmand %vm273, %vm197
      %v278 = vsel %vm277, %v276, 0.0
      %279 = vadd.xlane.f32.xlu0 %v278
      %v280 = vpop.xlane.xlu0 %279
      %v281 = vmul.f32 %v280, %v221
      %v282 = vsub.f32 %v276, %v281
      %283 = vst [vmem:[%s269] sm:$0xff] %v282
    $region35: #{custom-call.35} parent=1 // loop_footer
      %s103 = sadd.s32 1, %s99
    $region36: #{custom-call.35} parent=1 // loop_footer_branch
      %98 = sbr.rel target = $region32
    $region37: #{custom-call.35} parent=1 // loop_exit
      _
    %v284 = vld [vmem:[#allocation7] sm:$0xff]
    %s285 = scalar_lea.vmem [#allocation7], 8
    %v286 = vld [vmem:[%s285] sm:$0xff]
    %s287 = scalar_lea.vmem [#allocation7], 16
    %v288 = vld [vmem:[%s287] sm:$0xff]
    %s289 = scalar_lea.vmem [#allocation7], 24
    %v290 = vld [vmem:[%s289] sm:$0xff]
    %s291 = scalar_lea.vmem [#allocation7], 32
    %s292 = scalar_lea.vmem [#allocation7], 40
    %s293 = scalar_lea.vmem [#allocation7], 48
    %s294 = scalar_lea.vmem [#allocation7], 56
    %s295 = scalar_lea.vmem [#allocation7], 64
    %s296 = scalar_lea.vmem [#allocation7], 72
    %s297 = scalar_lea.vmem [#allocation7], 80
    %s298 = scalar_lea.vmem [#allocation7], 88
    %s299 = scalar_lea.vmem [#allocation7], 96
    %s300 = scalar_lea.vmem [#allocation7], 104
    %s301 = scalar_lea.vmem [#allocation7], 112
    %s302 = scalar_lea.vmem [#allocation7], 120
    %303 = vxpose.xlu0.b32.start [1/16] %v284, 128
    %304 = vxpose.xlu0.b32.cont [2/16] %v286, 128
    %305 = vxpose.xlu0.b32.cont [3/16] %v288, 128
    %306 = vxpose.xlu0.b32.cont [4/16] %v290, 128
    %307 = vxpose.xlu0.b32.cont [5/16] 0, 128
    %308 = vxpose.xlu0.b32.cont [6/16] 0, 128
    %309 = vxpose.xlu0.b32.cont [7/16] 0, 128
    %310 = vxpose.xlu0.b32.cont [8/16] 0, 128
    %311 = vxpose.xlu0.b32.cont [9/16] 0, 128
    %312 = vxpose.xlu0.b32.cont [10/16] 0, 128
    %313 = vxpose.xlu0.b32.cont [11/16] 0, 128
    %314 = vxpose.xlu0.b32.cont [12/16] 0, 128
    %315 = vxpose.xlu0.b32.cont [13/16] 0, 128
    %316 = vxpose.xlu0.b32.cont [14/16] 0, 128
    %317 = vxpose.xlu0.b32.cont [15/16] 0, 128
    %318 = vxpose.xlu0.b32.end [16/16] 0, 128
    %v319 = vpop.trf.xlu0
    %v320 = vpop.trf.xlu0
    %v321 = vpop.trf.xlu0
    %v322 = vpop.trf.xlu0
    %v323 = vpop.trf.xlu0
    %v324 = vpop.trf.xlu0
    %v325 = vpop.trf.xlu0
    %v326 = vpop.trf.xlu0
    %v327 = vpop.trf.xlu0
    %v328 = vpop.trf.xlu0
    %v329 = vpop.trf.xlu0
    %v330 = vpop.trf.xlu0
    %v331 = vpop.trf.xlu0
    %v332 = vpop.trf.xlu0
    %v333 = vpop.trf.xlu0
    %v334 = vpop.trf.xlu0
    %335 = vst [vmem:[#allocation5] sm:$0x1] %v319
    %s337 = sshllo.u32 0, 1
    %v339 = vld [vmem:[#allocation2] sm:%s337]
    %s340 = sshllo.u32 0, 1
    %341 = vst [vmem:[#allocation3] sm:%s340] %v339
    %s343 = sshllo.u32 0, 1
    %v345 = vld [vmem:[#allocation5] sm:%s343]
    %s346 = sshllo.u32 0, 1
    %347 = vst [vmem:[#allocation6] sm:%s346] %v345
    %p349 = scmp.gt.s32.totalorder 32, 0
    // Predicated region
    $region38: #{custom-call.35} parent=1 // pred_check
      %p350 = pneg %p349
    $region39: #{custom-call.35} parent=1 // pred_check_branch
      %352 = sbr.rel (%p350) target = $region41
    $region40: #{custom-call.35} parent=1 // pred_region
      %s353 = sshra.s32 32, 3
      %p354 = scmp.gt.s32.totalorder %s353, 0
      // Predicated region
      $region42: #{custom-call.35} parent=40 // pred_check
        %p355 = pneg %p354
      $region43: #{custom-call.35} parent=40 // pred_check_branch
        %357 = sbr.rel (%p355) target = $region45
      $region44: #{custom-call.35} parent=40 // pred_region
        %s358 = ssub.s32 %s353, 1
        %s359 = smul.u32 %s358, 128
        %s360 = sshra.s32 %s359, 4
        %s361 = scalar_lea.vmem [#allocation1], %s360
        %v362 = vld [vmem:[#allocation1] sm:$0xff]
        // While loop
        $region46: #{custom-call.35} parent=44 // loop_pre_header
          _
        $region47: #{custom-call.35} parent=44 // loop_header
          %s363 = sphi [#allocation1], %s385
          %s364 = sphi %s1, %s386
          %v365 = vphi %v362, %v387
          %s366 = ssub.s32 %s361, 64
          %p367 = scmp.gt.s32.totalorder %s363, %s366
        $region48: #{custom-call.35} parent=44 // loop_header_branch
          %369 = sbr.rel (%p367) target = $region52
        $region49: #{custom-call.35} parent=44 // loop_body
          %370 = vst [vmem:[%s364] sm:$0xff] %v365
          %v371 = vld [vmem:[%s363 + $0x8] sm:$0xff]
          %372 = vst [vmem:[%s364 + $0x8] sm:$0xff] %v371
          %v373 = vld [vmem:[%s363 + $0x10] sm:$0xff]
          %374 = vst [vmem:[%s364 + $0x10] sm:$0xff] %v373
          %v375 = vld [vmem:[%s363 + $0x18] sm:$0xff]
          %376 = vst [vmem:[%s364 + $0x18] sm:$0xff] %v375
          %v377 = vld [vmem:[%s363 + $0x20] sm:$0xff]
          %378 = vst [vmem:[%s364 + $0x20] sm:$0xff] %v377
          %v379 = vld [vmem:[%s363 + $0x28] sm:$0xff]
          %380 = vst [vmem:[%s364 + $0x28] sm:$0xff] %v379
          %v381 = vld [vmem:[%s363 + $0x30] sm:$0xff]
          %382 = vst [vmem:[%s364 + $0x30] sm:$0xff] %v381
          %v383 = vld [vmem:[%s363 + $0x38] sm:$0xff]
          %384 = vst [vmem:[%s364 + $0x38] sm:$0xff] %v383
        $region50: #{custom-call.35} parent=44 // loop_footer
          %s385 = scalar_lea.vmem %s363, 64
          %s386 = scalar_lea.vmem %s364, 64
          %v387 = vld [vmem:[%s363 + $0x40] sm:$0xff]
        $region51: #{custom-call.35} parent=44 // loop_footer_branch
          %388 = sbr.rel target = $region47
        $region52: #{custom-call.35} parent=44 // loop_exit
          _
        // While loop
        $region53: #{custom-call.35} parent=44 // loop_pre_header
          _
        $region54: #{custom-call.35} parent=44 // loop_header
          %s389 = sphi %s363, %s397
          %s390 = sphi %s364, %s398
          %v391 = vphi %v365, %v391
          %p392 = scmp.gt.s32.totalorder %s389, %s361
        $region55: #{custom-call.35} parent=44 // loop_header_branch
          %394 = sbr.rel (%p392) target = $region59
        $region56: #{custom-call.35} parent=44 // loop_body
          %v395 = vld [vmem:[%s389] sm:$0xff]
          %396 = vst [vmem:[%s390] sm:$0xff] %v395
        $region57: #{custom-call.35} parent=44 // loop_footer
          %s397 = scalar_lea.vmem %s389, 8
          %s398 = scalar_lea.vmem %s390, 8
        $region58: #{custom-call.35} parent=44 // loop_footer_branch
          %399 = sbr.rel target = $region54
        $region59: #{custom-call.35} parent=44 // loop_exit
          _
      $region45: #{custom-call.35} parent=40 // pred_fallthru
        _
      %s400 = sand.u32 32, 7
      %s401 = sshllo.u32 0, %s400
      %s402 = smul.u32 %s353, 128
      %s403 = sshra.s32 %s402, 4
      %s404 = scalar_lea.vmem %s1, %s403
      %s405 = smul.u32 %s353, 128
      %s406 = sshra.s32 %s405, 4
      %s407 = scalar_lea.vmem [#allocation1], %s406
      %v408 = vld [vmem:[%s407] sm:%s401]
      %409 = vst [vmem:[%s404] sm:%s401] %v408
    $region41: #{custom-call.35} parent=1 // pred_fallthru
      _
    // Predicated region
    $region60: #{custom-call.35} parent=1 // pred_check
      _
    $region61: #{custom-call.35} parent=1 // pred_check_branch
      %411 = sbr.rel (0) target = $region63
    $region62: #{custom-call.35} parent=1 // pred_region
      %s413 = ssub.s32 16, 16
      %414 = vsyncadd [#allocation4], %s413
      %s415 = sshll.u32 [#allocation3], 4
      %s416 = int_to_ptr.vmem [resolvable:$true] %s415
      %418 = dma.vmem_to_hbm [thread:$0]  %s416, 16, %s2, [#allocation4]
    $region63: #{custom-call.35} parent=1 // pred_fallthru
      _
    // Predicated region
    $region64: #{custom-call.35} parent=1 // pred_check
      _
    $region65: #{custom-call.35} parent=1 // pred_check_branch
      %420 = sbr.rel (0) target = $region67
    $region66: #{custom-call.35} parent=1 // pred_region
      %p422 = scmp.gt.s32.totalorder 1, 0
      // Predicated region
      $region68: #{custom-call.35} parent=66 // pred_check
        %p423 = pneg %p422
      $region69: #{custom-call.35} parent=66 // pred_check_branch
        %425 = sbr.rel (%p423) target = $region71
      $region70: #{custom-call.35} parent=66 // pred_region
        %s426 = sshra.s32 1, 3
        %p427 = scmp.gt.s32.totalorder %s426, 0
        // Predicated region
        $region72: #{custom-call.35} parent=70 // pred_check
          %p428 = pneg %p427
        $region73: #{custom-call.35} parent=70 // pred_check_branch
          %430 = sbr.rel (%p428) target = $region75
        $region74: #{custom-call.35} parent=70 // pred_region
          %s431 = ssub.s32 %s426, 1
          %s432 = smul.u32 %s431, 128
          %s433 = sshra.s32 %s432, 4
          %s434 = scalar_lea.vmem [#allocation6], %s433
          %v435 = vld [vmem:[#allocation6] sm:$0xff]
          // While loop
          $region76: #{custom-call.35} parent=74 // loop_pre_header
            _
          $region77: #{custom-call.35} parent=74 // loop_header
            %s436 = sphi [#allocation6], %s458
            %s437 = sphi %s3, %s459
            %v438 = vphi %v435, %v460
            %s439 = ssub.s32 %s434, 64
            %p440 = scmp.gt.s32.totalorder %s436, %s439
          $region78: #{custom-call.35} parent=74 // loop_header_branch
            %442 = sbr.rel (%p440) target = $region82
          $region79: #{custom-call.35} parent=74 // loop_body
            %443 = vst [vmem:[%s437] sm:$0xff] %v438
            %v444 = vld [vmem:[%s436 + $0x8] sm:$0xff]
            %445 = vst [vmem:[%s437 + $0x8] sm:$0xff] %v444
            %v446 = vld [vmem:[%s436 + $0x10] sm:$0xff]
            %447 = vst [vmem:[%s437 + $0x10] sm:$0xff] %v446
            %v448 = vld [vmem:[%s436 + $0x18] sm:$0xff]
            %449 = vst [vmem:[%s437 + $0x18] sm:$0xff] %v448
            %v450 = vld [vmem:[%s436 + $0x20] sm:$0xff]
            %451 = vst [vmem:[%s437 + $0x20] sm:$0xff] %v450
            %v452 = vld [vmem:[%s436 + $0x28] sm:$0xff]
            %453 = vst [vmem:[%s437 + $0x28] sm:$0xff] %v452
            %v454 = vld [vmem:[%s436 + $0x30] sm:$0xff]
            %455 = vst [vmem:[%s437 + $0x30] sm:$0xff] %v454
            %v456 = vld [vmem:[%s436 + $0x38] sm:$0xff]
            %457 = vst [vmem:[%s437 + $0x38] sm:$0xff] %v456
          $region80: #{custom-call.35} parent=74 // loop_footer
            %s458 = scalar_lea.vmem %s436, 64
            %s459 = scalar_lea.vmem %s437, 64
            %v460 = vld [vmem:[%s436 + $0x40] sm:$0xff]
          $region81: #{custom-call.35} parent=74 // loop_footer_branch
            %461 = sbr.rel target = $region77
          $region82: #{custom-call.35} parent=74 // loop_exit
            _
          // While loop
          $region83: #{custom-call.35} parent=74 // loop_pre_header
            _
          $region84: #{custom-call.35} parent=74 // loop_header
            %s462 = sphi %s436, %s470
            %s463 = sphi %s437, %s471
            %v464 = vphi %v438, %v464
            %p465 = scmp.gt.s32.totalorder %s462, %s434
          $region85: #{custom-call.35} parent=74 // loop_header_branch
            %467 = sbr.rel (%p465) target = $region89
          $region86: #{custom-call.35} parent=74 // loop_body
            %v468 = vld [vmem:[%s462] sm:$0xff]
            %469 = vst [vmem:[%s463] sm:$0xff] %v468
          $region87: #{custom-call.35} parent=74 // loop_footer
            %s470 = scalar_lea.vmem %s462, 8
            %s471 = scalar_lea.vmem %s463, 8
          $region88: #{custom-call.35} parent=74 // loop_footer_branch
            %472 = sbr.rel target = $region84
          $region89: #{custom-call.35} parent=74 // loop_exit
            _
        $region75: #{custom-call.35} parent=70 // pred_fallthru
          _
        %s473 = sand.u32 1, 7
        %s474 = sshllo.u32 0, %s473
        %s475 = smul.u32 %s426, 128
        %s476 = sshra.s32 %s475, 4
        %s477 = scalar_lea.vmem %s3, %s476
        %s478 = smul.u32 %s426, 128
        %s479 = sshra.s32 %s478, 4
        %s480 = scalar_lea.vmem [#allocation6], %s479
        %v481 = vld [vmem:[%s480] sm:%s474]
        %482 = vst [vmem:[%s477] sm:%s474] %v481
      $region71: #{custom-call.35} parent=66 // pred_fallthru
        _
    $region67: #{custom-call.35} parent=1 // pred_fallthru
      _
    // Predicated region
    $region90: #{custom-call.35} parent=1 // pred_check
      _
    $region91: #{custom-call.35} parent=1 // pred_check_branch
      %484 = sbr.rel (0) target = $region93
    $region92: #{custom-call.35} parent=1 // pred_region
      %485 = dma.done [#allocation4], 16
    $region93: #{custom-call.35} parent=1 // pred_fallthru
      _
    // Predicated region
    $region94: #{custom-call.35} parent=1 // pred_check
      _
    $region95: #{custom-call.35} parent=1 // pred_check_branch
      %487 = sbr.rel (0) target = $region97
    $region96: #{custom-call.35} parent=1 // pred_region
      _
    $region97: #{custom-call.35} parent=1 // pred_fallthru
      _
    %488 = vsyncpa [#allocation4], 1

// kernel: custom-call.33
$region0: #{custom-call.33}
  %s0 = inlined_call_operand.vmem [shape: f32[1,32,32], index: 0, kind: input, shape index: {}]
  %s1 = inlined_call_operand.vmem [shape: f32[1,32,32], index: 1, kind: output, shape index: {}]
  $region1: #{custom-call.33} parent=0
    #allocation0 [shape = 'u8[16384]{0}', space=vmem, size = 0x4000, scoped, tag = 'operand span for operand 0']
    #allocation1 [shape = 'u8[16384]{0}', space=vmem, size = 0x4000, scoped, tag = 'operand span for operand 1']
    #allocation2 [shape = 'f32[32,32]{1,0}', space=vmem, size = 0x4000, scoped, tag = 'rescaled input a']
    // Predicated region
    $region2: #{custom-call.33} parent=1 // pred_check
      _
    $region3: #{custom-call.33} parent=1 // pred_check_branch
      %3 = sbr.rel (0) target = $region5
    $region4: #{custom-call.33} parent=1 // pred_region
      // Predicated region
      $region6: #{custom-call.33} parent=4 // pred_check
        _
      $region7: #{custom-call.33} parent=4 // pred_check_branch
        %5 = sbr.rel (0) target = $region9
      $region8: #{custom-call.33} parent=4 // pred_region
        // Predicated region
        $region21: #{custom-call.33} parent=8 // pred_check
          _
        $region22: #{custom-call.33} parent=8 // pred_check_branch
          %26 = sbr.rel (0) target = $region24
        $region23: #{custom-call.33} parent=8 // pred_region
          loop: start=0, step=1, limit=1
          $region25: #{custom-call.33} parent=23 // loop_pre_header
            _
          $region26: #{custom-call.33} parent=23 // loop_header
            %s28 = sphi 0, %s32
            %p29 = scmp.ge.s32.totalorder %s28, 1
            %s33 = sphi %s0, %s0
            %s34 = sphi [#allocation0], [#allocation0]
          $region27: #{custom-call.33} parent=23 // loop_header_branch
            %31 = sbr.rel (%p29) target = $region31
          $region28: #{custom-call.33} parent=23 // loop_body
            %v35 = vld [vmem:[%s33] sm:$0xff]
            %36 = vst [vmem:[%s34] sm:$0xff] %v35
            %v37 = vld [vmem:[%s33 + $0x8] sm:$0xff]
            %38 = vst [vmem:[%s34 + $0x8] sm:$0xff] %v37
            %v39 = vld [vmem:[%s33 + $0x10] sm:$0xff]
            %40 = vst [vmem:[%s34 + $0x10] sm:$0xff] %v39
            %v41 = vld [vmem:[%s33 + $0x18] sm:$0xff]
            %42 = vst [vmem:[%s34 + $0x18] sm:$0xff] %v41
          $region29: #{custom-call.33} parent=23 // loop_footer
            %s32 = sadd.s32 1, %s28
          $region30: #{custom-call.33} parent=23 // loop_footer_branch
            %27 = sbr.rel target = $region26
          $region31: #{custom-call.33} parent=23 // loop_exit
            _
        $region24: #{custom-call.33} parent=8 // pred_fallthru
          _
        // Predicated region
        $region32: #{custom-call.33} parent=8 // pred_check
          _
        $region33: #{custom-call.33} parent=8 // pred_check_branch
          %44 = sbr.rel target = $region35
        $region34: #{custom-call.33} parent=8 // pred_region
          _
        $region35: #{custom-call.33} parent=8 // pred_fallthru
          _
      $region9: #{custom-call.33} parent=4 // pred_fallthru
        _
      // Predicated region
      $region10: #{custom-call.33} parent=4 // pred_check
        _
      $region11: #{custom-call.33} parent=4 // pred_check_branch
        %7 = sbr.rel target = $region13
      $region12: #{custom-call.33} parent=4 // pred_region
        loop: start=0, step=1, limit=1
        $region14: #{custom-call.33} parent=12 // loop_pre_header
          _
        $region15: #{custom-call.33} parent=12 // loop_header
          %s10 = sphi 0, %s14
          %p11 = scmp.ge.s32.totalorder %s10, 1
          %s15 = sphi %s0, %s0
          %s16 = sphi [#allocation0], [#allocation0]
        $region16: #{custom-call.33} parent=12 // loop_header_branch
          %13 = sbr.rel (%p11) target = $region20
        $region17: #{custom-call.33} parent=12 // loop_body
          %v17 = vld [vmem:[%s15] sm:$0xff]
          %18 = vst [vmem:[%s16] sm:$0xff] %v17
          %v19 = vld [vmem:[%s15 + $0x8] sm:$0xff]
          %20 = vst [vmem:[%s16 + $0x8] sm:$0xff] %v19
          %v21 = vld [vmem:[%s15 + $0x10] sm:$0xff]
          %22 = vst [vmem:[%s16 + $0x10] sm:$0xff] %v21
          %v23 = vld [vmem:[%s15 + $0x18] sm:$0xff]
          %24 = vst [vmem:[%s16 + $0x18] sm:$0xff] %v23
        $region18: #{custom-call.33} parent=12 // loop_footer
          %s14 = sadd.s32 1, %s10
        $region19: #{custom-call.33} parent=12 // loop_footer_branch
          %9 = sbr.rel target = $region15
        $region20: #{custom-call.33} parent=12 // loop_exit
          _
      $region13: #{custom-call.33} parent=4 // pred_fallthru
        _
    $region5: #{custom-call.33} parent=1 // pred_fallthru
      _
    %45 = vnop
    %v46 = vlaneseq
    %v47 = vand.u32 %v46, 127
    %vm48 = vcmp.lt.s32.totalorder %v47, 32
    %v49 = vlaneseq
    %v50 = vshrl.u32 %v49, 7
    %vm52 = vcmp.eq.s32.totalorder %v50, %v47
    %v53 = vld [vmem:[#allocation0] sm:$0xff]
    %v54 = vsel %vm52, %v53, 0.0
    %55 = vadd.xlane.f32.xlu0 %v54
    %v56 = vpop.xlane.xlu0 %55
    %vm57 = vcmp.ge.s32.totalorder %v50, %v47
    %vm58 = vmand %vm57, %vm48
    %v59 = vsel %vm58, %v53, 0.0
    %v60 = vrcp.pop %v56
    %v61 = vmul.f32 %v59, %v60
    %62 = vst [vmem:[#allocation2] sm:$0xff] %v61
    %s63 = scalar_lea.vmem [#allocation0], 8
    %s64 = scalar_lea.vmem [#allocation2], 8
    %v65 = vlaneseq
    %v66 = vshrl.u32 %v65, 7
    %v67 = vadd.s32 %v66, 8
    %vm68 = vcmp.eq.s32.totalorder %v67, %v47
    %v69 = vld [vmem:[%s63] sm:$0xff]
    %v70 = vsel %vm68, %v69, 0.0
    %71 = vadd.xlane.f32.xlu0 %v70
    %v72 = vpop.xlane.xlu0 %71
    %vm73 = vcmp.ge.s32.totalorder %v67, %v47
    %vm74 = vmand %vm73, %vm48
    %v75 = vsel %vm74, %v69, 0.0
    %v76 = vrcp.pop %v72
    %v77 = vmul.f32 %v75, %v76
    %78 = vst [vmem:[%s64] sm:$0xff] %v77
    %s79 = scalar_lea.vmem [#allocation0], 16
    %s80 = scalar_lea.vmem [#allocation2], 16
    %v81 = vlaneseq
    %v82 = vshrl.u32 %v81, 7
    %v83 = vadd.s32 %v82, 16
    %vm84 = vcmp.eq.s32.totalorder %v83, %v47
    %v85 = vld [vmem:[%s79] sm:$0xff]
    %v86 = vsel %vm84, %v85, 0.0
    %87 = vadd.xlane.f32.xlu0 %v86
    %v88 = vpop.xlane.xlu0 %87
    %vm89 = vcmp.ge.s32.totalorder %v83, %v47
    %vm90 = vmand %vm89, %vm48
    %v91 = vsel %vm90, %v85, 0.0
    %v92 = vrcp.pop %v88
    %v93 = vmul.f32 %v91, %v92
    %94 = vst [vmem:[%s80] sm:$0xff] %v93
    %s95 = scalar_lea.vmem [#allocation0], 24
    %s96 = scalar_lea.vmem [#allocation2], 24
    %v97 = vlaneseq
    %v98 = vshrl.u32 %v97, 7
    %v99 = vadd.s32 %v98, 24
    %vm100 = vcmp.eq.s32.totalorder %v99, %v47
    %v101 = vld [vmem:[%s95] sm:$0xff]
    %v102 = vsel %vm100, %v101, 0.0
    %103 = vadd.xlane.f32.xlu0 %v102
    %v104 = vpop.xlane.xlu0 %103
    %vm105 = vcmp.ge.s32.totalorder %v99, %v47
    %vm106 = vmand %vm105, %vm48
    %v107 = vsel %vm106, %v101, 0.0
    %v108 = vrcp.pop %v104
    %v109 = vmul.f32 %v107, %v108
    %110 = vst [vmem:[%s96] sm:$0xff] %v109
    %v111 = vlaneseq
    %v112 = vand.u32 %v111, 127
    %v113 = vlaneseq
    %v114 = vshrl.u32 %v113, 7
    %vm116 = vcmp.eq.s32.totalorder %v112, %v114
    %v117 = vlaneseq
    %v118 = vand.u32 %v117, 127
    %vm119 = vcmp.eq.s32.totalorder %v118, 0
    %v120 = vsel %vm119, 1.0, -1.0
    %v121 = vsel %vm116, %v120, 0.0
    %v122 = vlaneseq
    %v123 = vand.u32 %v122, 127
    %v124 = vlaneseq
    %v125 = vshrl.u32 %v124, 7
    %v126 = vadd.s32 %v125, 8
    %vm127 = vcmp.eq.s32.totalorder %v123, %v126
    %v128 = vsel %vm127, -1.0, 0.0
    %v129 = vlaneseq
    %v130 = vand.u32 %v129, 127
    %v131 = vlaneseq
    %v132 = vshrl.u32 %v131, 7
    %v133 = vadd.s32 %v132, 16
    %vm134 = vcmp.eq.s32.totalorder %v130, %v133
    %v135 = vsel %vm134, -1.0, 0.0
    %v136 = vlaneseq
    %v137 = vand.u32 %v136, 127
    %v138 = vlaneseq
    %v139 = vshrl.u32 %v138, 7
    %v140 = vadd.s32 %v139, 24
    %vm141 = vcmp.eq.s32.totalorder %v137, %v140
    %v142 = vsel %vm141, -1.0, 0.0
    %s143 = scalar_lea.vmem [#allocation2], 1
    %v144 = vld [vmem:[%s143] ss:$0 sm:$0xff]
    %v145 = vxor.u32 %v144, 2147483648
    %v146 = vlaneseq
    %v147 = vand.u32 %v146, 127
    %vm148 = vcmp.eq.s32.totalorder %v147, 1
    %v149 = vmul.f32 %v145, %v121
    %150 = vadd.xlane.f32.xlu0 %v149
    %v151 = vpop.xlane.xlu0 %150
    %v152 = vsel %vm148, %v151, %v121
    %s153 = scalar_lea.vmem [#allocation2], 2
    %v154 = vld [vmem:[%s153] ss:$0 sm:$0xff]
    %v155 = vxor.u32 %v154, 2147483648
    %v156 = vlaneseq
    %v157 = vand.u32 %v156, 127
    %vm158 = vcmp.eq.s32.totalorder %v157, 2
    %v159 = vmul.f32 %v155, %v152
    %160 = vadd.xlane.f32.xlu0 %v159
    %v161 = vpop.xlane.xlu0 %160
    %v162 = vsel %vm158, %v161, %v152
    %s163 = scalar_lea.vmem [#allocation2], 3
    %v164 = vld [vmem:[%s163] ss:$0 sm:$0xff]
    %v165 = vxor.u32 %v164, 2147483648
    %v166 = vlaneseq
    %v167 = vand.u32 %v166, 127
    %vm168 = vcmp.eq.s32.totalorder %v167, 3
    %v169 = vmul.f32 %v165, %v162
    %170 = vadd.xlane.f32.xlu0 %v169
    %v171 = vpop.xlane.xlu0 %170
    %v172 = vsel %vm168, %v171, %v162
    %s173 = scalar_lea.vmem [#allocation2], 4
    %v174 = vld [vmem:[%s173] ss:$0 sm:$0xff]
    %v175 = vxor.u32 %v174, 2147483648
    %v176 = vlaneseq
    %v177 = vand.u32 %v176, 127
    %vm178 = vcmp.eq.s32.totalorder %v177, 4
    %v179 = vmul.f32 %v175, %v172
    %180 = vadd.xlane.f32.xlu0 %v179
    %v181 = vpop.xlane.xlu0 %180
    %v182 = vsel %vm178, %v181, %v172
    %s183 = scalar_lea.vmem [#allocation2], 5
    %v184 = vld [vmem:[%s183] ss:$0 sm:$0xff]
    %v185 = vxor.u32 %v184, 2147483648
    %v186 = vlaneseq
    %v187 = vand.u32 %v186, 127
    %vm188 = vcmp.eq.s32.totalorder %v187, 5
    %v189 = vmul.f32 %v185, %v182
    %190 = vadd.xlane.f32.xlu0 %v189
    %v191 = vpop.xlane.xlu0 %190
    %v192 = vsel %vm188, %v191, %v182
    %s193 = scalar_lea.vmem [#allocation2], 6
    %v194 = vld [vmem:[%s193] ss:$0 sm:$0xff]
    %v195 = vxor.u32 %v194, 2147483648
    %v196 = vlaneseq
    %v197 = vand.u32 %v196, 127
    %vm198 = vcmp.eq.s32.totalorder %v197, 6
    %v199 = vmul.f32 %v195, %v192
    %200 = vadd.xlane.f32.xlu0 %v199
    %v201 = vpop.xlane.xlu0 %200
    %v202 = vsel %vm198, %v201, %v192
    %s203 = scalar_lea.vmem [#allocation2], 7
    %v204 = vld [vmem:[%s203] ss:$0 sm:$0xff]
    %v205 = vxor.u32 %v204, 2147483648
    %v206 = vlaneseq
    %v207 = vand.u32 %v206, 127
    %vm208 = vcmp.eq.s32.totalorder %v207, 7
    %v209 = vmul.f32 %v205, %v202
    %210 = vadd.xlane.f32.xlu0 %v209
    %v211 = vpop.xlane.xlu0 %210
    %v212 = vsel %vm208, %v211, %v202
    %s213 = scalar_lea.vmem [#allocation2], 8
    %v214 = vld [vmem:[%s213] ss:$0 sm:$0xff]
    %v215 = vxor.u32 %v214, 2147483648
    %v216 = vlaneseq
    %v217 = vand.u32 %v216, 127
    %vm218 = vcmp.eq.s32.totalorder %v217, 8
    %v219 = vmul.f32 %v215, %v212
    %220 = vadd.xlane.f32.xlu0 %v219
    %v221 = vpop.xlane.xlu0 %220
    %v222 = vsel %vm218, %v221, %v212
    %v223 = vmul.f32 %v215, %v128
    %224 = vadd.xlane.f32.xlu0 %v223
    %v225 = vpop.xlane.xlu0 %224
    %v226 = vsel %vm218, %v225, %v128
    %s227 = scalar_lea.vmem [#allocation2], 9
    %v228 = vld [vmem:[%s227] ss:$0 sm:$0xff]
    %v229 = vxor.u32 %v228, 2147483648
    %v230 = vlaneseq
    %v231 = vand.u32 %v230, 127
    %vm232 = vcmp.eq.s32.totalorder %v231, 9
    %v233 = vmul.f32 %v229, %v222
    %234 = vadd.xlane.f32.xlu0 %v233
    %v235 = vpop.xlane.xlu0 %234
    %v236 = vsel %vm232, %v235, %v222
    %v237 = vmul.f32 %v229, %v226
    %238 = vadd.xlane.f32.xlu0 %v237
    %v239 = vpop.xlane.xlu0 %238
    %v240 = vsel %vm232, %v239, %v226
    %s241 = scalar_lea.vmem [#allocation2], 10
    %v242 = vld [vmem:[%s241] ss:$0 sm:$0xff]
    %v243 = vxor.u32 %v242, 2147483648
    %v244 = vlaneseq
    %v245 = vand.u32 %v244, 127
    %vm246 = vcmp.eq.s32.totalorder %v245, 10
    %v247 = vmul.f32 %v243, %v236
    %248 = vadd.xlane.f32.xlu0 %v247
    %v249 = vpop.xlane.xlu0 %248
    %v250 = vsel %vm246, %v249, %v236
    %v251 = vmul.f32 %v243, %v240
    %252 = vadd.xlane.f32.xlu0 %v251
    %v253 = vpop.xlane.xlu0 %252
    %v254 = vsel %vm246, %v253, %v240
    %s255 = scalar_lea.vmem [#allocation2], 11
    %v256 = vld [vmem:[%s255] ss:$0 sm:$0xff]
    %v257 = vxor.u32 %v256, 2147483648
    %v258 = vlaneseq
    %v259 = vand.u32 %v258, 127
    %vm260 = vcmp.eq.s32.totalorder %v259, 11
    %v261 = vmul.f32 %v257, %v250
    %262 = vadd.xlane.f32.xlu0 %v261
    %v263 = vpop.xlane.xlu0 %262
    %v264 = vsel %vm260, %v263, %v250
    %v265 = vmul.f32 %v257, %v254
    %266 = vadd.xlane.f32.xlu0 %v265
    %v267 = vpop.xlane.xlu0 %266
    %v268 = vsel %vm260, %v267, %v254
    %s269 = scalar_lea.vmem [#allocation2], 12
    %v270 = vld [vmem:[%s269] ss:$0 sm:$0xff]
    %v271 = vxor.u32 %v270, 2147483648
    %v272 = vlaneseq
    %v273 = vand.u32 %v272, 127
    %vm274 = vcmp.eq.s32.totalorder %v273, 12
    %v275 = vmul.f32 %v271, %v264
    %276 = vadd.xlane.f32.xlu0 %v275
    %v277 = vpop.xlane.xlu0 %276
    %v278 = vsel %vm274, %v277, %v264
    %v279 = vmul.f32 %v271, %v268
    %280 = vadd.xlane.f32.xlu0 %v279
    %v281 = vpop.xlane.xlu0 %280
    %v282 = vsel %vm274, %v281, %v268
    %s283 = scalar_lea.vmem [#allocation2], 13
    %v284 = vld [vmem:[%s283] ss:$0 sm:$0xff]
    %v285 = vxor.u32 %v284, 2147483648
    %v286 = vlaneseq
    %v287 = vand.u32 %v286, 127
    %vm288 = vcmp.eq.s32.totalorder %v287, 13
    %v289 = vmul.f32 %v285, %v278
    %290 = vadd.xlane.f32.xlu0 %v289
    %v291 = vpop.xlane.xlu0 %290
    %v292 = vsel %vm288, %v291, %v278
    %v293 = vmul.f32 %v285, %v282
    %294 = vadd.xlane.f32.xlu0 %v293
    %v295 = vpop.xlane.xlu0 %294
    %v296 = vsel %vm288, %v295, %v282
    %s297 = scalar_lea.vmem [#allocation2], 14
    %v298 = vld [vmem:[%s297] ss:$0 sm:$0xff]
    %v299 = vxor.u32 %v298, 2147483648
    %v300 = vlaneseq
    %v301 = vand.u32 %v300, 127
    %vm302 = vcmp.eq.s32.totalorder %v301, 14
    %v303 = vmul.f32 %v299, %v292
    %304 = vadd.xlane.f32.xlu0 %v303
    %v305 = vpop.xlane.xlu0 %304
    %v306 = vsel %vm302, %v305, %v292
    %v307 = vmul.f32 %v299, %v296
    %308 = vadd.xlane.f32.xlu0 %v307
    %v309 = vpop.xlane.xlu0 %308
    %v310 = vsel %vm302, %v309, %v296
    %s311 = scalar_lea.vmem [#allocation2], 15
    %v312 = vld [vmem:[%s311] ss:$0 sm:$0xff]
    %v313 = vxor.u32 %v312, 2147483648
    %v314 = vlaneseq
    %v315 = vand.u32 %v314, 127
    %vm316 = vcmp.eq.s32.totalorder %v315, 15
    %v317 = vmul.f32 %v313, %v306
    %318 = vadd.xlane.f32.xlu0 %v317
    %v319 = vpop.xlane.xlu0 %318
    %v320 = vsel %vm316, %v319, %v306
    %v321 = vmul.f32 %v313, %v310
    %322 = vadd.xlane.f32.xlu0 %v321
    %v323 = vpop.xlane.xlu0 %322
    %v324 = vsel %vm316, %v323, %v310
    %s325 = scalar_lea.vmem [#allocation2], 16
    %v326 = vld [vmem:[%s325] ss:$0 sm:$0xff]
    %v327 = vxor.u32 %v326, 2147483648
    %v328 = vlaneseq
    %v329 = vand.u32 %v328, 127
    %vm330 = vcmp.eq.s32.totalorder %v329, 16
    %v331 = vmul.f32 %v327, %v320
    %332 = vadd.xlane.f32.xlu0 %v331
    %v333 = vpop.xlane.xlu0 %332
    %v334 = vsel %vm330, %v333, %v320
    %v335 = vmul.f32 %v327, %v324
    %336 = vadd.xlane.f32.xlu0 %v335
    %v337 = vpop.xlane.xlu0 %336
    %v338 = vsel %vm330, %v337, %v324
    %v339 = vmul.f32 %v327, %v135
    %340 = vadd.xlane.f32.xlu0 %v339
    %v341 = vpop.xlane.xlu0 %340
    %v342 = vsel %vm330, %v341, %v135
    %s343 = scalar_lea.vmem [#allocation2], 17
    %v344 = vld [vmem:[%s343] ss:$0 sm:$0xff]
    %v345 = vxor.u32 %v344, 2147483648
    %v346 = vlaneseq
    %v347 = vand.u32 %v346, 127
    %vm348 = vcmp.eq.s32.totalorder %v347, 17
    %v349 = vmul.f32 %v345, %v334
    %350 = vadd.xlane.f32.xlu0 %v349
    %v351 = vpop.xlane.xlu0 %350
    %v352 = vsel %vm348, %v351, %v334
    %v353 = vmul.f32 %v345, %v338
    %354 = vadd.xlane.f32.xlu0 %v353
    %v355 = vpop.xlane.xlu0 %354
    %v356 = vsel %vm348, %v355, %v338
    %v357 = vmul.f32 %v345, %v342
    %358 = vadd.xlane.f32.xlu0 %v357
    %v359 = vpop.xlane.xlu0 %358
    %v360 = vsel %vm348, %v359, %v342
    %s361 = scalar_lea.vmem [#allocation2], 18
    %v362 = vld [vmem:[%s361] ss:$0 sm:$0xff]
    %v363 = vxor.u32 %v362, 2147483648
    %v364 = vlaneseq
    %v365 = vand.u32 %v364, 127
    %vm366 = vcmp.eq.s32.totalorder %v365, 18
    %v367 = vmul.f32 %v363, %v352
    %368 = vadd.xlane.f32.xlu0 %v367
    %v369 = vpop.xlane.xlu0 %368
    %v370 = vsel %vm366, %v369, %v352
    %v371 = vmul.f32 %v363, %v356
    %372 = vadd.xlane.f32.xlu0 %v371
    %v373 = vpop.xlane.xlu0 %372
    %v374 = vsel %vm366, %v373, %v356
    %v375 = vmul.f32 %v363, %v360
    %376 = vadd.xlane.f32.xlu0 %v375
    %v377 = vpop.xlane.xlu0 %376
    %v378 = vsel %vm366, %v377, %v360
    %s379 = scalar_lea.vmem [#allocation2], 19
    %v380 = vld [vmem:[%s379] ss:$0 sm:$0xff]
    %v381 = vxor.u32 %v380, 2147483648
    %v382 = vlaneseq
    %v383 = vand.u32 %v382, 127
    %vm384 = vcmp.eq.s32.totalorder %v383, 19
    %v385 = vmul.f32 %v381, %v370
    %386 = vadd.xlane.f32.xlu0 %v385
    %v387 = vpop.xlane.xlu0 %386
    %v388 = vsel %vm384, %v387, %v370
    %v389 = vmul.f32 %v381, %v374
    %390 = vadd.xlane.f32.xlu0 %v389
    %v391 = vpop.xlane.xlu0 %390
    %v392 = vsel %vm384, %v391, %v374
    %v393 = vmul.f32 %v381, %v378
    %394 = vadd.xlane.f32.xlu0 %v393
    %v395 = vpop.xlane.xlu0 %394
    %v396 = vsel %vm384, %v395, %v378
    %s397 = scalar_lea.vmem [#allocation2], 20
    %v398 = vld [vmem:[%s397] ss:$0 sm:$0xff]
    %v399 = vxor.u32 %v398, 2147483648
    %v400 = vlaneseq
    %v401 = vand.u32 %v400, 127
    %vm402 = vcmp.eq.s32.totalorder %v401, 20
    %v403 = vmul.f32 %v399, %v388
    %404 = vadd.xlane.f32.xlu0 %v403
    %v405 = vpop.xlane.xlu0 %404
    %v406 = vsel %vm402, %v405, %v388
    %v407 = vmul.f32 %v399, %v392
    %408 = vadd.xlane.f32.xlu0 %v407
    %v409 = vpop.xlane.xlu0 %408
    %v410 = vsel %vm402, %v409, %v392
    %v411 = vmul.f32 %v399, %v396
    %412 = vadd.xlane.f32.xlu0 %v411
    %v413 = vpop.xlane.xlu0 %412
    %v414 = vsel %vm402, %v413, %v396
    %s415 = scalar_lea.vmem [#allocation2], 21
    %v416 = vld [vmem:[%s415] ss:$0 sm:$0xff]
    %v417 = vxor.u32 %v416, 2147483648
    %v418 = vlaneseq
    %v419 = vand.u32 %v418, 127
    %vm420 = vcmp.eq.s32.totalorder %v419, 21
    %v421 = vmul.f32 %v417, %v406
    %422 = vadd.xlane.f32.xlu0 %v421
    %v423 = vpop.xlane.xlu0 %422
    %v424 = vsel %vm420, %v423, %v406
    %v425 = vmul.f32 %v417, %v410
    %426 = vadd.xlane.f32.xlu0 %v425
    %v427 = vpop.xlane.xlu0 %426
    %v428 = vsel %vm420, %v427, %v410
    %v429 = vmul.f32 %v417, %v414
    %430 = vadd.xlane.f32.xlu0 %v429
    %v431 = vpop.xlane.xlu0 %430
    %v432 = vsel %vm420, %v431, %v414
    %s433 = scalar_lea.vmem [#allocation2], 22
    %v434 = vld [vmem:[%s433] ss:$0 sm:$0xff]
    %v435 = vxor.u32 %v434, 2147483648
    %v436 = vlaneseq
    %v437 = vand.u32 %v436, 127
    %vm438 = vcmp.eq.s32.totalorder %v437, 22
    %v439 = vmul.f32 %v435, %v424
    %440 = vadd.xlane.f32.xlu0 %v439
    %v441 = vpop.xlane.xlu0 %440
    %v442 = vsel %vm438, %v441, %v424
    %v443 = vmul.f32 %v435, %v428
    %444 = vadd.xlane.f32.xlu0 %v443
    %v445 = vpop.xlane.xlu0 %444
    %v446 = vsel %vm438, %v445, %v428
    %v447 = vmul.f32 %v435, %v432
    %448 = vadd.xlane.f32.xlu0 %v447
    %v449 = vpop.xlane.xlu0 %448
    %v450 = vsel %vm438, %v449, %v432
    %s451 = scalar_lea.vmem [#allocation2], 23
    %v452 = vld [vmem:[%s451] ss:$0 sm:$0xff]
    %v453 = vxor.u32 %v452, 2147483648
    %v454 = vlaneseq
    %v455 = vand.u32 %v454, 127
    %vm456 = vcmp.eq.s32.totalorder %v455, 23
    %v457 = vmul.f32 %v453, %v442
    %458 = vadd.xlane.f32.xlu0 %v457
    %v459 = vpop.xlane.xlu0 %458
    %v460 = vsel %vm456, %v459, %v442
    %v461 = vmul.f32 %v453, %v446
    %462 = vadd.xlane.f32.xlu0 %v461
    %v463 = vpop.xlane.xlu0 %462
    %v464 = vsel %vm456, %v463, %v446
    %v465 = vmul.f32 %v453, %v450
    %466 = vadd.xlane.f32.xlu0 %v465
    %v467 = vpop.xlane.xlu0 %466
    %v468 = vsel %vm456, %v467, %v450
    %s469 = scalar_lea.vmem [#allocation2], 24
    %v470 = vld [vmem:[%s469] ss:$0 sm:$0xff]
    %v471 = vxor.u32 %v470, 2147483648
    %v472 = vlaneseq
    %v473 = vand.u32 %v472, 127
    %vm474 = vcmp.eq.s32.totalorder %v473, 24
    %v475 = vmul.f32 %v471, %v460
    %476 = vadd.xlane.f32.xlu0 %v475
    %v477 = vpop.xlane.xlu0 %476
    %v478 = vsel %vm474, %v477, %v460
    %v479 = vmul.f32 %v471, %v464
    %480 = vadd.xlane.f32.xlu0 %v479
    %v481 = vpop.xlane.xlu0 %480
    %v482 = vsel %vm474, %v481, %v464
    %v483 = vmul.f32 %v471, %v468
    %484 = vadd.xlane.f32.xlu0 %v483
    %v485 = vpop.xlane.xlu0 %484
    %v486 = vsel %vm474, %v485, %v468
    %v487 = vmul.f32 %v471, %v142
    %488 = vadd.xlane.f32.xlu0 %v487
    %v489 = vpop.xlane.xlu0 %488
    %v490 = vsel %vm474, %v489, %v142
    %s491 = scalar_lea.vmem [#allocation2], 25
    %v492 = vld [vmem:[%s491] ss:$0 sm:$0xff]
    %v493 = vxor.u32 %v492, 2147483648
    %v494 = vlaneseq
    %v495 = vand.u32 %v494, 127
    %vm496 = vcmp.eq.s32.totalorder %v495, 25
    %v497 = vmul.f32 %v493, %v478
    %498 = vadd.xlane.f32.xlu0 %v497
    %v499 = vpop.xlane.xlu0 %498
    %v500 = vsel %vm496, %v499, %v478
    %v501 = vmul.f32 %v493, %v482
    %502 = vadd.xlane.f32.xlu0 %v501
    %v503 = vpop.xlane.xlu0 %502
    %v504 = vsel %vm496, %v503, %v482
    %v505 = vmul.f32 %v493, %v486
    %506 = vadd.xlane.f32.xlu0 %v505
    %v507 = vpop.xlane.xlu0 %506
    %v508 = vsel %vm496, %v507, %v486
    %v509 = vmul.f32 %v493, %v490
    %510 = vadd.xlane.f32.xlu0 %v509
    %v511 = vpop.xlane.xlu0 %510
    %v512 = vsel %vm496, %v511, %v490
    %s513 = scalar_lea.vmem [#allocation2], 26
    %v514 = vld [vmem:[%s513] ss:$0 sm:$0xff]
    %v515 = vxor.u32 %v514, 2147483648
    %v516 = vlaneseq
    %v517 = vand.u32 %v516, 127
    %vm518 = vcmp.eq.s32.totalorder %v517, 26
    %v519 = vmul.f32 %v515, %v500
    %520 = vadd.xlane.f32.xlu0 %v519
    %v521 = vpop.xlane.xlu0 %520
    %v522 = vsel %vm518, %v521, %v500
    %v523 = vmul.f32 %v515, %v504
    %524 = vadd.xlane.f32.xlu0 %v523
    %v525 = vpop.xlane.xlu0 %524
    %v526 = vsel %vm518, %v525, %v504
    %v527 = vmul.f32 %v515, %v508
    %528 = vadd.xlane.f32.xlu0 %v527
    %v529 = vpop.xlane.xlu0 %528
    %v530 = vsel %vm518, %v529, %v508
    %v531 = vmul.f32 %v515, %v512
    %532 = vadd.xlane.f32.xlu0 %v531
    %v533 = vpop.xlane.xlu0 %532
    %v534 = vsel %vm518, %v533, %v512
    %s535 = scalar_lea.vmem [#allocation2], 27
    %v536 = vld [vmem:[%s535] ss:$0 sm:$0xff]
    %v537 = vxor.u32 %v536, 2147483648
    %v538 = vlaneseq
    %v539 = vand.u32 %v538, 127
    %vm540 = vcmp.eq.s32.totalorder %v539, 27
    %v541 = vmul.f32 %v537, %v522
    %542 = vadd.xlane.f32.xlu0 %v541
    %v543 = vpop.xlane.xlu0 %542
    %v544 = vsel %vm540, %v543, %v522
    %v545 = vmul.f32 %v537, %v526
    %546 = vadd.xlane.f32.xlu0 %v545
    %v547 = vpop.xlane.xlu0 %546
    %v548 = vsel %vm540, %v547, %v526
    %v549 = vmul.f32 %v537, %v530
    %550 = vadd.xlane.f32.xlu0 %v549
    %v551 = vpop.xlane.xlu0 %550
    %v552 = vsel %vm540, %v551, %v530
    %v553 = vmul.f32 %v537, %v534
    %554 = vadd.xlane.f32.xlu0 %v553
    %v555 = vpop.xlane.xlu0 %554
    %v556 = vsel %vm540, %v555, %v534
    %s557 = scalar_lea.vmem [#allocation2], 28
    %v558 = vld [vmem:[%s557] ss:$0 sm:$0xff]
    %v559 = vxor.u32 %v558, 2147483648
    %v560 = vlaneseq
    %v561 = vand.u32 %v560, 127
    %vm562 = vcmp.eq.s32.totalorder %v561, 28
    %v563 = vmul.f32 %v559, %v544
    %564 = vadd.xlane.f32.xlu0 %v563
    %v565 = vpop.xlane.xlu0 %564
    %v566 = vsel %vm562, %v565, %v544
    %v567 = vmul.f32 %v559, %v548
    %568 = vadd.xlane.f32.xlu0 %v567
    %v569 = vpop.xlane.xlu0 %568
    %v570 = vsel %vm562, %v569, %v548
    %v571 = vmul.f32 %v559, %v552
    %572 = vadd.xlane.f32.xlu0 %v571
    %v573 = vpop.xlane.xlu0 %572
    %v574 = vsel %vm562, %v573, %v552
    %v575 = vmul.f32 %v559, %v556
    %576 = vadd.xlane.f32.xlu0 %v575
    %v577 = vpop.xlane.xlu0 %576
    %v578 = vsel %vm562, %v577, %v556
    %s579 = scalar_lea.vmem [#allocation2], 29
    %v580 = vld [vmem:[%s579] ss:$0 sm:$0xff]
    %v581 = vxor.u32 %v580, 2147483648
    %v582 = vlaneseq
    %v583 = vand.u32 %v582, 127
    %vm584 = vcmp.eq.s32.totalorder %v583, 29
    %v585 = vmul.f32 %v581, %v566
    %586 = vadd.xlane.f32.xlu0 %v585
    %v587 = vpop.xlane.xlu0 %586
    %v588 = vsel %vm584, %v587, %v566
    %v589 = vmul.f32 %v581, %v570
    %590 = vadd.xlane.f32.xlu0 %v589
    %v591 = vpop.xlane.xlu0 %590
    %v592 = vsel %vm584, %v591, %v570
    %v593 = vmul.f32 %v581, %v574
    %594 = vadd.xlane.f32.xlu0 %v593
    %v595 = vpop.xlane.xlu0 %594
    %v596 = vsel %vm584, %v595, %v574
    %v597 = vmul.f32 %v581, %v578
    %598 = vadd.xlane.f32.xlu0 %v597
    %v599 = vpop.xlane.xlu0 %598
    %v600 = vsel %vm584, %v599, %v578
    %s601 = scalar_lea.vmem [#allocation2], 30
    %v602 = vld [vmem:[%s601] ss:$0 sm:$0xff]
    %v603 = vxor.u32 %v602, 2147483648
    %v604 = vlaneseq
    %v605 = vand.u32 %v604, 127
    %vm606 = vcmp.eq.s32.totalorder %v605, 30
    %v607 = vmul.f32 %v603, %v588
    %608 = vadd.xlane.f32.xlu0 %v607
    %v609 = vpop.xlane.xlu0 %608
    %v610 = vsel %vm606, %v609, %v588
    %v611 = vmul.f32 %v603, %v592
    %612 = vadd.xlane.f32.xlu0 %v611
    %v613 = vpop.xlane.xlu0 %612
    %v614 = vsel %vm606, %v613, %v592
    %v615 = vmul.f32 %v603, %v596
    %616 = vadd.xlane.f32.xlu0 %v615
    %v617 = vpop.xlane.xlu0 %616
    %v618 = vsel %vm606, %v617, %v596
    %v619 = vmul.f32 %v603, %v600
    %620 = vadd.xlane.f32.xlu0 %v619
    %v621 = vpop.xlane.xlu0 %620
    %v622 = vsel %vm606, %v621, %v600
    %s623 = scalar_lea.vmem [#allocation2], 31
    %v624 = vld [vmem:[%s623] ss:$0 sm:$0xff]
    %v625 = vxor.u32 %v624, 2147483648
    %v626 = vlaneseq
    %v627 = vand.u32 %v626, 127
    %vm628 = vcmp.eq.s32.totalorder %v627, 31
    %v629 = vmul.f32 %v625, %v610
    %630 = vadd.xlane.f32.xlu0 %v629
    %v631 = vpop.xlane.xlu0 %630
    %v632 = vsel %vm628, %v631, %v610
    %v633 = vmul.f32 %v625, %v614
    %634 = vadd.xlane.f32.xlu0 %v633
    %v635 = vpop.xlane.xlu0 %634
    %v636 = vsel %vm628, %v635, %v614
    %v637 = vmul.f32 %v625, %v618
    %638 = vadd.xlane.f32.xlu0 %v637
    %v639 = vpop.xlane.xlu0 %638
    %v640 = vsel %vm628, %v639, %v618
    %v641 = vmul.f32 %v625, %v622
    %642 = vadd.xlane.f32.xlu0 %v641
    %v643 = vpop.xlane.xlu0 %642
    %v644 = vsel %vm628, %v643, %v622
    %v645 = vrcp.pop %v56
    %v646 = vmul.f32 %v632, %v645
    %vm647 = vweird.f32 %v56
    %v648 = vsel %vm647, %v632, %v646
    %649 = vst [vmem:[#allocation1] sm:$0xff] %v648
    %v650 = vrcp.pop %v72
    %v651 = vmul.f32 %v636, %v650
    %vm652 = vweird.f32 %v72
    %v653 = vsel %vm652, %v636, %v651
    %s654 = scalar_lea.vmem [#allocation1], 8
    %655 = vst [vmem:[%s654] sm:$0xff] %v653
    %v656 = vrcp.pop %v88
    %v657 = vmul.f32 %v640, %v656
    %vm658 = vweird.f32 %v88
    %v659 = vsel %vm658, %v640, %v657
    %s660 = scalar_lea.vmem [#allocation1], 16
    %661 = vst [vmem:[%s660] sm:$0xff] %v659
    %v662 = vrcp.pop %v104
    %v663 = vmul.f32 %v644, %v662
    %vm664 = vweird.f32 %v104
    %v665 = vsel %vm664, %v644, %v663
    %s666 = scalar_lea.vmem [#allocation1], 24
    %667 = vst [vmem:[%s666] sm:$0xff] %v665
    // Predicated region
    $region36: #{custom-call.33} parent=1 // pred_check
      _
    $region37: #{custom-call.33} parent=1 // pred_check_branch
      %669 = sbr.rel (0) target = $region39
    $region38: #{custom-call.33} parent=1 // pred_region
      // Predicated region
      $region40: #{custom-call.33} parent=38 // pred_check
        _
      $region41: #{custom-call.33} parent=38 // pred_check_branch
        %671 = sbr.rel (0) target = $region43
      $region42: #{custom-call.33} parent=38 // pred_region
        // Predicated region
        $region55: #{custom-call.33} parent=42 // pred_check
          _
        $region56: #{custom-call.33} parent=42 // pred_check_branch
          %692 = sbr.rel (0) target = $region58
        $region57: #{custom-call.33} parent=42 // pred_region
          loop: start=0, step=1, limit=1
          $region59: #{custom-call.33} parent=57 // loop_pre_header
            _
          $region60: #{custom-call.33} parent=57 // loop_header
            %s694 = sphi 0, %s698
            %p695 = scmp.ge.s32.totalorder %s694, 1
            %s699 = sphi [#allocation1], [#allocation1]
            %s700 = sphi %s1, %s1
          $region61: #{custom-call.33} parent=57 // loop_header_branch
            %697 = sbr.rel (%p695) target = $region65
          $region62: #{custom-call.33} parent=57 // loop_body
            %v701 = vld [vmem:[%s699] sm:$0xff]
            %702 = vst [vmem:[%s700] sm:$0xff] %v701
            %v703 = vld [vmem:[%s699 + $0x8] sm:$0xff]
            %704 = vst [vmem:[%s700 + $0x8] sm:$0xff] %v703
            %v705 = vld [vmem:[%s699 + $0x10] sm:$0xff]
            %706 = vst [vmem:[%s700 + $0x10] sm:$0xff] %v705
            %v707 = vld [vmem:[%s699 + $0x18] sm:$0xff]
            %708 = vst [vmem:[%s700 + $0x18] sm:$0xff] %v707
          $region63: #{custom-call.33} parent=57 // loop_footer
            %s698 = sadd.s32 1, %s694
          $region64: #{custom-call.33} parent=57 // loop_footer_branch
            %693 = sbr.rel target = $region60
          $region65: #{custom-call.33} parent=57 // loop_exit
            _
        $region58: #{custom-call.33} parent=42 // pred_fallthru
          _
        // Predicated region
        $region66: #{custom-call.33} parent=42 // pred_check
          _
        $region67: #{custom-call.33} parent=42 // pred_check_branch
          %710 = sbr.rel target = $region69
        $region68: #{custom-call.33} parent=42 // pred_region
          _
        $region69: #{custom-call.33} parent=42 // pred_fallthru
          _
      $region43: #{custom-call.33} parent=38 // pred_fallthru
        _
      // Predicated region
      $region44: #{custom-call.33} parent=38 // pred_check
        _
      $region45: #{custom-call.33} parent=38 // pred_check_branch
        %673 = sbr.rel target = $region47
      $region46: #{custom-call.33} parent=38 // pred_region
        loop: start=0, step=1, limit=1
        $region48: #{custom-call.33} parent=46 // loop_pre_header
          _
        $region49: #{custom-call.33} parent=46 // loop_header
          %s676 = sphi 0, %s680
          %p677 = scmp.ge.s32.totalorder %s676, 1
          %s681 = sphi [#allocation1], [#allocation1]
          %s682 = sphi %s1, %s1
        $region50: #{custom-call.33} parent=46 // loop_header_branch
          %679 = sbr.rel (%p677) target = $region54
        $region51: #{custom-call.33} parent=46 // loop_body
          %v683 = vld [vmem:[%s681] sm:$0xff]
          %684 = vst [vmem:[%s682] sm:$0xff] %v683
          %v685 = vld [vmem:[%s681 + $0x8] sm:$0xff]
          %686 = vst [vmem:[%s682 + $0x8] sm:$0xff] %v685
          %v687 = vld [vmem:[%s681 + $0x10] sm:$0xff]
          %688 = vst [vmem:[%s682 + $0x10] sm:$0xff] %v687
          %v689 = vld [vmem:[%s681 + $0x18] sm:$0xff]
          %690 = vst [vmem:[%s682 + $0x18] sm:$0xff] %v689
        $region52: #{custom-call.33} parent=46 // loop_footer
          %s680 = sadd.s32 1, %s676
        $region53: #{custom-call.33} parent=46 // loop_footer_branch
          %675 = sbr.rel target = $region49
        $region54: #{custom-call.33} parent=46 // loop_exit
          _
      $region47: #{custom-call.33} parent=38 // pred_fallthru
        _
    $region39: #{custom-call.33} parent=1 // pred_fallthru
      _
    %711 = vnop

// kernel: nct_forward.3
$region0: #{nct_forward.3}
  #allocation0 [shape = 'u32[]', space=smem, size = 0x4, offset = 0x4, fixed_abs, tag = 'smem constant byte address 0x4 - core index']
  #allocation1 [shape = 'u32[144,128]{1,0:T(1,128)}', space=vmem, size = 0x12000, scoped, tag = 'internal scratch']
  %s0 = inlined_call_operand.vmem [shape: f32[16,16], index: 0, kind: input, shape index: {}]
  %s1 = inlined_call_operand.vmem [shape: f32[16,1], index: 1, kind: input, shape index: {}]
  %s2 = inlined_call_operand.vmem [shape: f32[16,16], index: 2, kind: input, shape index: {}]
  %s3 = inlined_call_operand.vmem [shape: f32[16,16], index: 3, kind: input, shape index: {}]
  %s4 = inlined_call_operand.vmem [shape: f32[16,16], index: 4, kind: input, shape index: {}]
  %s5 = inlined_call_operand.vmem [shape: f32[16,2], index: 5, kind: input, shape index: {}]
  %s6 = inlined_call_operand.vmem [shape: f32[16,16], index: 6, kind: output, shape index: {0}]
  %s7 = inlined_call_operand.vmem [shape: f32[16,16], index: 7, kind: output, shape index: {1}]
  %s8 = inlined_call_operand.vmem [shape: f32[16,2], index: 8, kind: output, shape index: {2}]
  %s9 = inlined_call_operand.hbm [shape: f32[1,1], index: 9, kind: output, shape index: {3}]
  %10 = xla_tuple %s6, %s7, %s8, %s9
  %s11 = sld [smem:[#allocation0]]
  $region58: #{nct_forward.3} parent=0
    _
  %s13 = ssub.s32 1, %s11
  %s14 = scalar_select 0, %s13, %s11
  $region1: #{nct_forward.3} parent=0
    #allocation2 [shape = 'u8[512]{0}', space=vmem, size = 0x400, scoped, tag = 'output window, operand 3, single buffered']
    #allocation3 [shape = 's32[1]{0}', space=sflag, size = 0x4, scoped, tag = 'scoped memory for nct_forward.3']
    %15 = vsyncpa [#allocation3], 0
    // Predicated region
    $region2: #{nct_forward.3} parent=1 // pred_check
      _
    $region3: #{nct_forward.3} parent=1 // pred_check_branch
      %17 = sbr.rel (0) target = $region5
    $region4: #{nct_forward.3} parent=1 // pred_region
      _
    $region5: #{nct_forward.3} parent=1 // pred_fallthru
      _
    // Predicated region
    $region6: #{nct_forward.3} parent=1 // pred_check
      _
    $region7: #{nct_forward.3} parent=1 // pred_check_branch
      %19 = sbr.rel (0) target = $region9
    $region8: #{nct_forward.3} parent=1 // pred_region
      _
    $region9: #{nct_forward.3} parent=1 // pred_fallthru
      _
    // Predicated region
    $region10: #{nct_forward.3} parent=1 // pred_check
      _
    $region11: #{nct_forward.3} parent=1 // pred_check_branch
      %21 = sbr.rel (0) target = $region13
    $region12: #{nct_forward.3} parent=1 // pred_region
      _
    $region13: #{nct_forward.3} parent=1 // pred_fallthru
      _
    // Predicated region
    $region14: #{nct_forward.3} parent=1 // pred_check
      _
    $region15: #{nct_forward.3} parent=1 // pred_check_branch
      %23 = sbr.rel (0) target = $region17
    $region16: #{nct_forward.3} parent=1 // pred_region
      _
    $region17: #{nct_forward.3} parent=1 // pred_fallthru
      _
    // Predicated region
    $region18: #{nct_forward.3} parent=1 // pred_check
      _
    $region19: #{nct_forward.3} parent=1 // pred_check_branch
      %25 = sbr.rel (0) target = $region21
    $region20: #{nct_forward.3} parent=1 // pred_region
      _
    $region21: #{nct_forward.3} parent=1 // pred_fallthru
      _
    // Predicated region
    $region22: #{nct_forward.3} parent=1 // pred_check
      _
    $region23: #{nct_forward.3} parent=1 // pred_check_branch
      %27 = sbr.rel (0) target = $region25
    $region24: #{nct_forward.3} parent=1 // pred_region
      _
    $region25: #{nct_forward.3} parent=1 // pred_fallthru
      _
    %v28 = vlaneseq
    %v29 = vshrl.u32 %v28, 7
    %v30 = vadd.s32 %v29, 8
    %v31 = vlaneseq
    %v32 = vand.u32 %v31, 127
    %vm33 = vcmp.eq.s32.totalorder %v29, %v32
    %vm34 = vcmp.eq.s32.totalorder %v30, %v32
    %v35 = vld [vmem:[%s0] sm:$0xff]
    %v36 = vld [vmem:[%s0 + $0x8] sm:$0xff]
    %v37 = vld [vmem:[%s1] sm:$0xff]
    %v38 = vld [vmem:[%s1 + $0x8] sm:$0xff]
    %40 = vset.pattern.permute.xlu0 0
    %41 = vperm.xlu0 %40, %v37
    %v42 = vpop.permute.xlu0 %41
    %45 = vset.pattern.permute.xlu0 0
    %46 = vperm.xlu0 %45, %v38
    %v47 = vpop.permute.xlu0 %46
    %v49 = vsel %vm33, %v42, 0.0
    %v50 = vsel %vm34, %v47, 0.0
    %v51 = vsub.f32 %v35, %v49
    %v52 = vsub.f32 %v36, %v50
    %vm53 = vcmask 130048
    %54 = vst.msk [vmem:[%s6] sm:$0xff] %vm53, %v51
    %55 = vst.msk [vmem:[%s6 + $0x8] sm:$0xff] %vm53, %v52
    %v56 = vsel %vm33, %v51, 0.0
    %v57 = vsel %vm34, %v52, 0.0
    %v58 = vmul.f32 %v56, %v56
    %v59 = vmul.f32 %v57, %v57
    %v60 = vsel %vm53, %v58, 0.0
    %v61 = vsel %vm53, %v59, 0.0
    %v62 = vadd.f32 %v60, %v61
    %63 = vadd.xlane.f32.xlu0 %v62
    %v64 = vpop.xlane.xlu0 %63
    %v65 = vrot.slane %v64, 4
    %v66 = vadd.f32 %v64, %v65
    %v67 = vrot.slane %v66, 2
    %v68 = vadd.f32 %v66, %v67
    %v69 = vrot.slane %v68, 1
    %v70 = vadd.f32 %v68, %v69
    %s71 = vtos %v70
    %v72 = vstv %s71
    %v73 = vmul.f32 %v72, 0.0001
    %vm74 = vcmask 0
    %75 = vst.msk [vmem:[#allocation2] sm:$0x1] %vm74, %v73
    %v76 = vld [vmem:[%s2] sm:$0xff]
    %v77 = vld [vmem:[%s2 + $0x8] sm:$0xff]
    %v78 = vld [vmem:[%s3] sm:$0xff]
    %v79 = vld [vmem:[%s3 + $0x8] sm:$0xff]
    %v81 = vsel %vm53, %v76, 0
    %v84 = vsel %vm53, %v77, 0
    %86 = vmatprep.subr.mxu0 0.0
    %87 = vmatpush1.msra.mxu0 %v78
    %88 = vmatprep.subr.mxu0 0.0
    %89 = vmatpush1.msra.mxu0 %v79
    %90 = vmatprep.subr.mxu0 0.0
    %91 = vmatpush1.msra.mxu0 0.0
    %92 = vmatprep.subr.mxu0 0.0
    %93 = vmatpush1.msra.mxu0 0.0
    %94 = vmatprep.subr.mxu0 0.0
    %95 = vmatpush1.msra.mxu0 0.0
    %96 = vmatprep.subr.mxu0 0.0
    %97 = vmatpush1.msra.mxu0 0.0
    %98 = vmatprep.subr.mxu0 0.0
    %99 = vmatpush1.msra.mxu0 0.0
    %100 = vmatprep.subr.mxu0 0.0
    %101 = vmatpush1.msra.mxu0 0.0
    %102 = vmatprep.subr.mxu0 0.0
    %103 = vmatpush1.msra.mxu0 0.0
    %104 = vmatprep.subr.mxu0 0.0
    %105 = vmatpush1.msra.mxu0 0.0
    %106 = vmatprep.subr.mxu0 0.0
    %107 = vmatpush1.msra.mxu0 0.0
    %108 = vmatprep.subr.mxu0 0.0
    %109 = vmatpush1.msra.mxu0 0.0
    %110 = vmatprep.subr.mxu0 0.0
    %111 = vmatpush1.msra.mxu0 0.0
    %112 = vmatprep.subr.mxu0 0.0
    %113 = vmatpush1.msra.mxu0 0.0
    %114 = vmatprep.subr.mxu0 0.0
    %115 = vmatpush1.msra.mxu0 0.0
    %116 = vmatprep.subr.mxu0 0.0
    %117 = vmatpush1.msra.mxu0 0.0
    %118 = vmatprep.subr.mxu0 0.0
    %119 = vmatpush1.msra.mxu0 0.0
    %120 = vmatprep.subr.mxu0 0.0
    %121 = vmatpush1.msra.mxu0 0.0
    %122 = vmatprep.subr.mxu0 0.0
    %123 = vmatpush1.msra.mxu0 0.0
    %124 = vmatprep.subr.mxu0 0.0
    %125 = vmatpush1.msra.mxu0 0.0
    %126 = vmatprep.subr.mxu0 0.0
    %127 = vmatpush1.msra.mxu0 0.0
    %128 = vmatprep.subr.mxu0 0.0
    %129 = vmatpush1.msra.mxu0 0.0
    %130 = vmatprep.subr.mxu0 0.0
    %131 = vmatpush1.msra.mxu0 0.0
    %132 = vmatprep.subr.mxu0 0.0
    %133 = vmatpush1.msra.mxu0 0.0
    %134 = vmatprep.subr.mxu0 0.0
    %135 = vmatpush1.msra.mxu0 0.0
    %136 = vmatprep.subr.mxu0 0.0
    %137 = vmatpush1.msra.mxu0 0.0
    %138 = vmatprep.subr.mxu0 0.0
    %139 = vmatpush1.msra.mxu0 0.0
    %140 = vmatprep.subr.mxu0 0.0
    %141 = vmatpush1.msra.mxu0 0.0
    %142 = vmatprep.subr.mxu0 0.0
    %143 = vmatpush1.msra.mxu0 0.0
    %144 = vmatprep.subr.mxu0 0.0
    %145 = vmatpush1.msra.mxu0 0.0
    %146 = vmatprep.subr.mxu0 0.0
    %147 = vmatpush1.msra.mxu0 0.0
    %148 = vmatprep.subr.mxu0 0.0
    %149 = vmatpush1.msra.mxu0 0.0
    %150 = vmatprep.mubr.f32.mxu0 0.0
    %151 = vmatmul.mubr.f32.gmra.mrb[0].mxu0 %v81
    %v152 = vpop.f32.mrb[0].mxu0
    %v153 = vadd.f32 0.0, %v152
    %v154 = vpop.f32.mrb[0].mxu0
    %155 = vmatprep.mubr.f32.mxu0 0.0
    %156 = vmatmul.mubr.f32.gmra.mrb[0].mxu0 %v84
    %v157 = vpop.f32.mrb[0].mxu0
    %v158 = vadd.f32 0.0, %v157
    %v159 = vpop.f32.mrb[0].mxu0
    %160 = vdwg.mxu0
    %v161 = vmul.f32 %v153, -0.5
    %v162 = vmul.f32 %v158, -0.5
    %163 = vst.msk [vmem:[%s7] sm:$0xff] %vm53, %v161
    %164 = vst.msk [vmem:[%s7 + $0x8] sm:$0xff] %vm53, %v162
    %v165 = vld [vmem:[%s4] sm:$0xff]
    %v166 = vld [vmem:[%s4 + $0x8] sm:$0xff]
    %v167 = vld [vmem:[%s5] sm:$0xff]
    %v168 = vld [vmem:[%s5 + $0x8] sm:$0xff]
    %v170 = vsel %vm53, %v165, 0
    %v173 = vsel %vm53, %v166, 0
    %175 = vmatprep.subr.mxu0 0.0
    %176 = vmatpush1.msra.mxu0 %v167
    %177 = vmatprep.subr.mxu0 0.0
    %178 = vmatpush1.msra.mxu0 %v168
    %179 = vmatprep.subr.mxu0 0.0
    %180 = vmatpush1.msra.mxu0 0.0
    %181 = vmatprep.subr.mxu0 0.0
    %182 = vmatpush1.msra.mxu0 0.0
    %183 = vmatprep.subr.mxu0 0.0
    %184 = vmatpush1.msra.mxu0 0.0
    %185 = vmatprep.subr.mxu0 0.0
    %186 = vmatpush1.msra.mxu0 0.0
    %187 = vmatprep.subr.mxu0 0.0
    %188 = vmatpush1.msra.mxu0 0.0
    %189 = vmatprep.subr.mxu0 0.0
    %190 = vmatpush1.msra.mxu0 0.0
    %191 = vmatprep.subr.mxu0 0.0
    %192 = vmatpush1.msra.mxu0 0.0
    %193 = vmatprep.subr.mxu0 0.0
    %194 = vmatpush1.msra.mxu0 0.0
    %195 = vmatprep.subr.mxu0 0.0
    %196 = vmatpush1.msra.mxu0 0.0
    %197 = vmatprep.subr.mxu0 0.0
    %198 = vmatpush1.msra.mxu0 0.0
    %199 = vmatprep.subr.mxu0 0.0
    %200 = vmatpush1.msra.mxu0 0.0
    %201 = vmatprep.subr.mxu0 0.0
    %202 = vmatpush1.msra.mxu0 0.0
    %203 = vmatprep.subr.mxu0 0.0
    %204 = vmatpush1.msra.mxu0 0.0
    %205 = vmatprep.subr.mxu0 0.0
    %206 = vmatpush1.msra.mxu0 0.0
    %207 = vmatprep.subr.mxu0 0.0
    %208 = vmatpush1.msra.mxu0 0.0
    %209 = vmatprep.subr.mxu0 0.0
    %210 = vmatpush1.msra.mxu0 0.0
    %211 = vmatprep.subr.mxu0 0.0
    %212 = vmatpush1.msra.mxu0 0.0
    %213 = vmatprep.subr.mxu0 0.0
    %214 = vmatpush1.msra.mxu0 0.0
    %215 = vmatprep.subr.mxu0 0.0
    %216 = vmatpush1.msra.mxu0 0.0
    %217 = vmatprep.subr.mxu0 0.0
    %218 = vmatpush1.msra.mxu0 0.0
    %219 = vmatprep.subr.mxu0 0.0
    %220 = vmatpush1.msra.mxu0 0.0
    %221 = vmatprep.subr.mxu0 0.0
    %222 = vmatpush1.msra.mxu0 0.0
    %223 = vmatprep.subr.mxu0 0.0
    %224 = vmatpush1.msra.mxu0 0.0
    %225 = vmatprep.subr.mxu0 0.0
    %226 = vmatpush1.msra.mxu0 0.0
    %227 = vmatprep.subr.mxu0 0.0
    %228 = vmatpush1.msra.mxu0 0.0
    %229 = vmatprep.subr.mxu0 0.0
    %230 = vmatpush1.msra.mxu0 0.0
    %231 = vmatprep.subr.mxu0 0.0
    %232 = vmatpush1.msra.mxu0 0.0
    %233 = vmatprep.subr.mxu0 0.0
    %234 = vmatpush1.msra.mxu0 0.0
    %235 = vmatprep.subr.mxu0 0.0
    %236 = vmatpush1.msra.mxu0 0.0
    %237 = vmatprep.subr.mxu0 0.0
    %238 = vmatpush1.msra.mxu0 0.0
    %239 = vmatprep.mubr.f32.mxu0 0.0
    %240 = vmatmul.mubr.f32.gmra.mrb[0].mxu0 %v170
    %v241 = vpop.f32.mrb[0].mxu0
    %v242 = vadd.f32 0.0, %v241
    %v243 = vpop.f32.mrb[0].mxu0
    %244 = vmatprep.mubr.f32.mxu0 0.0
    %245 = vmatmul.mubr.f32.gmra.mrb[0].mxu0 %v173
    %v246 = vpop.f32.mrb[0].mxu0
    %v247 = vadd.f32 0.0, %v246
    %v248 = vpop.f32.mrb[0].mxu0
    %249 = vdwg.mxu0
    %v250 = vmul.f32 %v242, 2.0
    %v251 = vmul.f32 %v247, 2.0
    %vm252 = vcmask 15360
    %253 = vst.msk [vmem:[%s8] sm:$0xff] %vm252, %v250
    %254 = vst.msk [vmem:[%s8 + $0x8] sm:$0xff] %vm252, %v251
    // Predicated region
    $region26: #{nct_forward.3} parent=1 // pred_check
      _
    $region27: #{nct_forward.3} parent=1 // pred_check_branch
      %256 = sbr.rel (0) target = $region29
    $region28: #{nct_forward.3} parent=1 // pred_region
      _
    $region29: #{nct_forward.3} parent=1 // pred_fallthru
      _
    // Predicated region
    $region30: #{nct_forward.3} parent=1 // pred_check
      _
    $region31: #{nct_forward.3} parent=1 // pred_check_branch
      %258 = sbr.rel (0) target = $region33
    $region32: #{nct_forward.3} parent=1 // pred_region
      _
    $region33: #{nct_forward.3} parent=1 // pred_fallthru
      _
    // Predicated region
    $region34: #{nct_forward.3} parent=1 // pred_check
      _
    $region35: #{nct_forward.3} parent=1 // pred_check_branch
      %260 = sbr.rel (0) target = $region37
    $region36: #{nct_forward.3} parent=1 // pred_region
      _
    $region37: #{nct_forward.3} parent=1 // pred_fallthru
      _
    // Predicated region
    $region38: #{nct_forward.3} parent=1 // pred_check
      _
    $region39: #{nct_forward.3} parent=1 // pred_check_branch
      %262 = sbr.rel (0) target = $region41
    $region40: #{nct_forward.3} parent=1 // pred_region
      %s264 = ssub.s32 16, 16
      %265 = vsyncadd [#allocation3], %s264
      %s267 = sshll.u32 [#allocation2], 4
      %s268 = int_to_ptr.vmem [resolvable:$true] %s267
      %270 = dma.vmem_to_hbm [thread:$0]  %s268, 16, %s9, [#allocation3]
    $region41: #{nct_forward.3} parent=1 // pred_fallthru
      _
    // Predicated region
    $region42: #{nct_forward.3} parent=1 // pred_check
      _
    $region43: #{nct_forward.3} parent=1 // pred_check_branch
      %272 = sbr.rel (0) target = $region45
    $region44: #{nct_forward.3} parent=1 // pred_region
      _
    $region45: #{nct_forward.3} parent=1 // pred_fallthru
      _
    // Predicated region
    $region46: #{nct_forward.3} parent=1 // pred_check
      _
    $region47: #{nct_forward.3} parent=1 // pred_check_branch
      %274 = sbr.rel (0) target = $region49
    $region48: #{nct_forward.3} parent=1 // pred_region
      _
    $region49: #{nct_forward.3} parent=1 // pred_fallthru
      _
    // Predicated region
    $region50: #{nct_forward.3} parent=1 // pred_check
      _
    $region51: #{nct_forward.3} parent=1 // pred_check_branch
      %276 = sbr.rel (0) target = $region53
    $region52: #{nct_forward.3} parent=1 // pred_region
      _
    $region53: #{nct_forward.3} parent=1 // pred_fallthru
      _
    // Predicated region
    $region54: #{nct_forward.3} parent=1 // pred_check
      _
    $region55: #{nct_forward.3} parent=1 // pred_check_branch
      %278 = sbr.rel (0) target = $region57
    $region56: #{nct_forward.3} parent=1 // pred_region
      %279 = dma.done [#allocation3], 16
    $region57: #{nct_forward.3} parent=1 // pred_fallthru
      _
    %280 = vsyncpa [#allocation3], 1

// kernel: custom-call.32
$region0: #{custom-call.32}
  %s0 = inlined_call_operand.vmem [shape: f32[1,32,32], index: 0, kind: input, shape index: {}]
  %s1 = inlined_call_operand.vmem [shape: f32[1,32,32], index: 1, kind: output, shape index: {}]
  $region1: #{custom-call.32} parent=0
    #allocation0 [shape = 'u8[16384]{0}', space=vmem, size = 0x4000, scoped, tag = 'operand span for operand 0']
    #allocation1 [shape = 'u8[16384]{0}', space=vmem, size = 0x4000, scoped, tag = 'operand span for operand 1']
    #allocation2 [shape = 'f32[32,32]{1,0}', space=vmem, size = 0x4000, scoped, tag = 'rescaled input a']
    // Predicated region
    $region2: #{custom-call.32} parent=1 // pred_check
      _
    $region3: #{custom-call.32} parent=1 // pred_check_branch
      %3 = sbr.rel (0) target = $region5
    $region4: #{custom-call.32} parent=1 // pred_region
      // Predicated region
      $region6: #{custom-call.32} parent=4 // pred_check
        _
      $region7: #{custom-call.32} parent=4 // pred_check_branch
        %5 = sbr.rel (0) target = $region9
      $region8: #{custom-call.32} parent=4 // pred_region
        // Predicated region
        $region21: #{custom-call.32} parent=8 // pred_check
          _
        $region22: #{custom-call.32} parent=8 // pred_check_branch
          %26 = sbr.rel (0) target = $region24
        $region23: #{custom-call.32} parent=8 // pred_region
          loop: start=0, step=1, limit=1
          $region25: #{custom-call.32} parent=23 // loop_pre_header
            _
          $region26: #{custom-call.32} parent=23 // loop_header
            %s28 = sphi 0, %s32
            %p29 = scmp.ge.s32.totalorder %s28, 1
            %s33 = sphi %s0, %s0
            %s34 = sphi [#allocation0], [#allocation0]
          $region27: #{custom-call.32} parent=23 // loop_header_branch
            %31 = sbr.rel (%p29) target = $region31
          $region28: #{custom-call.32} parent=23 // loop_body
            %v35 = vld [vmem:[%s33] sm:$0xff]
            %36 = vst [vmem:[%s34] sm:$0xff] %v35
            %v37 = vld [vmem:[%s33 + $0x8] sm:$0xff]
            %38 = vst [vmem:[%s34 + $0x8] sm:$0xff] %v37
            %v39 = vld [vmem:[%s33 + $0x10] sm:$0xff]
            %40 = vst [vmem:[%s34 + $0x10] sm:$0xff] %v39
            %v41 = vld [vmem:[%s33 + $0x18] sm:$0xff]
            %42 = vst [vmem:[%s34 + $0x18] sm:$0xff] %v41
          $region29: #{custom-call.32} parent=23 // loop_footer
            %s32 = sadd.s32 1, %s28
          $region30: #{custom-call.32} parent=23 // loop_footer_branch
            %27 = sbr.rel target = $region26
          $region31: #{custom-call.32} parent=23 // loop_exit
            _
        $region24: #{custom-call.32} parent=8 // pred_fallthru
          _
        // Predicated region
        $region32: #{custom-call.32} parent=8 // pred_check
          _
        $region33: #{custom-call.32} parent=8 // pred_check_branch
          %44 = sbr.rel target = $region35
        $region34: #{custom-call.32} parent=8 // pred_region
          _
        $region35: #{custom-call.32} parent=8 // pred_fallthru
          _
      $region9: #{custom-call.32} parent=4 // pred_fallthru
        _
      // Predicated region
      $region10: #{custom-call.32} parent=4 // pred_check
        _
      $region11: #{custom-call.32} parent=4 // pred_check_branch
        %7 = sbr.rel target = $region13
      $region12: #{custom-call.32} parent=4 // pred_region
        loop: start=0, step=1, limit=1
        $region14: #{custom-call.32} parent=12 // loop_pre_header
          _
        $region15: #{custom-call.32} parent=12 // loop_header
          %s10 = sphi 0, %s14
          %p11 = scmp.ge.s32.totalorder %s10, 1
          %s15 = sphi %s0, %s0
          %s16 = sphi [#allocation0], [#allocation0]
        $region16: #{custom-call.32} parent=12 // loop_header_branch
          %13 = sbr.rel (%p11) target = $region20
        $region17: #{custom-call.32} parent=12 // loop_body
          %v17 = vld [vmem:[%s15] sm:$0xff]
          %18 = vst [vmem:[%s16] sm:$0xff] %v17
          %v19 = vld [vmem:[%s15 + $0x8] sm:$0xff]
          %20 = vst [vmem:[%s16 + $0x8] sm:$0xff] %v19
          %v21 = vld [vmem:[%s15 + $0x10] sm:$0xff]
          %22 = vst [vmem:[%s16 + $0x10] sm:$0xff] %v21
          %v23 = vld [vmem:[%s15 + $0x18] sm:$0xff]
          %24 = vst [vmem:[%s16 + $0x18] sm:$0xff] %v23
        $region18: #{custom-call.32} parent=12 // loop_footer
          %s14 = sadd.s32 1, %s10
        $region19: #{custom-call.32} parent=12 // loop_footer_branch
          %9 = sbr.rel target = $region15
        $region20: #{custom-call.32} parent=12 // loop_exit
          _
      $region13: #{custom-call.32} parent=4 // pred_fallthru
        _
    $region5: #{custom-call.32} parent=1 // pred_fallthru
      _
    %45 = vnop
    %v46 = vlaneseq
    %v47 = vand.u32 %v46, 127
    %vm48 = vcmp.lt.s32.totalorder %v47, 32
    %v49 = vlaneseq
    %v50 = vshrl.u32 %v49, 7
    %vm52 = vcmp.eq.s32.totalorder %v50, %v47
    %v53 = vld [vmem:[#allocation0] sm:$0xff]
    %v54 = vsel %vm52, %v53, 0.0
    %55 = vadd.xlane.f32.xlu0 %v54
    %v56 = vpop.xlane.xlu0 %55
    %vm57 = vcmp.le.s32.totalorder %v50, %v47
    %vm58 = vmand %vm57, %vm48
    %v59 = vsel %vm58, %v53, 0.0
    %v60 = vrcp.pop %v56
    %v61 = vmul.f32 %v59, %v60
    %62 = vst [vmem:[#allocation2] sm:$0xff] %v61
    %s63 = scalar_lea.vmem [#allocation0], 8
    %s64 = scalar_lea.vmem [#allocation2], 8
    %v65 = vlaneseq
    %v66 = vshrl.u32 %v65, 7
    %v67 = vadd.s32 %v66, 8
    %vm68 = vcmp.eq.s32.totalorder %v67, %v47
    %v69 = vld [vmem:[%s63] sm:$0xff]
    %v70 = vsel %vm68, %v69, 0.0
    %71 = vadd.xlane.f32.xlu0 %v70
    %v72 = vpop.xlane.xlu0 %71
    %vm73 = vcmp.le.s32.totalorder %v67, %v47
    %vm74 = vmand %vm73, %vm48
    %v75 = vsel %vm74, %v69, 0.0
    %v76 = vrcp.pop %v72
    %v77 = vmul.f32 %v75, %v76
    %78 = vst [vmem:[%s64] sm:$0xff] %v77
    %s79 = scalar_lea.vmem [#allocation0], 16
    %s80 = scalar_lea.vmem [#allocation2], 16
    %v81 = vlaneseq
    %v82 = vshrl.u32 %v81, 7
    %v83 = vadd.s32 %v82, 16
    %vm84 = vcmp.eq.s32.totalorder %v83, %v47
    %v85 = vld [vmem:[%s79] sm:$0xff]
    %v86 = vsel %vm84, %v85, 0.0
    %87 = vadd.xlane.f32.xlu0 %v86
    %v88 = vpop.xlane.xlu0 %87
    %vm89 = vcmp.le.s32.totalorder %v83, %v47
    %vm90 = vmand %vm89, %vm48
    %v91 = vsel %vm90, %v85, 0.0
    %v92 = vrcp.pop %v88
    %v93 = vmul.f32 %v91, %v92
    %94 = vst [vmem:[%s80] sm:$0xff] %v93
    %s95 = scalar_lea.vmem [#allocation0], 24
    %s96 = scalar_lea.vmem [#allocation2], 24
    %v97 = vlaneseq
    %v98 = vshrl.u32 %v97, 7
    %v99 = vadd.s32 %v98, 24
    %vm100 = vcmp.eq.s32.totalorder %v99, %v47
    %v101 = vld [vmem:[%s95] sm:$0xff]
    %v102 = vsel %vm100, %v101, 0.0
    %103 = vadd.xlane.f32.xlu0 %v102
    %v104 = vpop.xlane.xlu0 %103
    %vm105 = vcmp.le.s32.totalorder %v99, %v47
    %vm106 = vmand %vm105, %vm48
    %v107 = vsel %vm106, %v101, 0.0
    %v108 = vrcp.pop %v104
    %v109 = vmul.f32 %v107, %v108
    %110 = vst [vmem:[%s96] sm:$0xff] %v109
    %v111 = vlaneseq
    %v112 = vand.u32 %v111, 127
    %v113 = vlaneseq
    %v114 = vshrl.u32 %v113, 7
    %vm116 = vcmp.eq.s32.totalorder %v112, %v114
    %v117 = vsel %vm116, -1.0, 0.0
    %v118 = vlaneseq
    %v119 = vand.u32 %v118, 127
    %v120 = vlaneseq
    %v121 = vshrl.u32 %v120, 7
    %v122 = vadd.s32 %v121, 8
    %vm123 = vcmp.eq.s32.totalorder %v119, %v122
    %v124 = vsel %vm123, -1.0, 0.0
    %v125 = vlaneseq
    %v126 = vand.u32 %v125, 127
    %v127 = vlaneseq
    %v128 = vshrl.u32 %v127, 7
    %v129 = vadd.s32 %v128, 16
    %vm130 = vcmp.eq.s32.totalorder %v126, %v129
    %v131 = vsel %vm130, -1.0, 0.0
    %v132 = vlaneseq
    %v133 = vand.u32 %v132, 127
    %v134 = vlaneseq
    %v135 = vshrl.u32 %v134, 7
    %v136 = vadd.s32 %v135, 24
    %vm137 = vcmp.eq.s32.totalorder %v133, %v136
    %v138 = vlaneseq
    %v139 = vand.u32 %v138, 127
    %vm140 = vcmp.eq.s32.totalorder %v139, 31
    %v141 = vsel %vm140, 1.0, -1.0
    %v142 = vsel %vm137, %v141, 0.0
    %s143 = scalar_lea.vmem [#allocation2], 30
    %v144 = vld [vmem:[%s143] ss:$0 sm:$0xff]
    %v145 = vxor.u32 %v144, 2147483648
    %v146 = vlaneseq
    %v147 = vand.u32 %v146, 127
    %vm148 = vcmp.eq.s32.totalorder %v147, 30
    %v149 = vmul.f32 %v145, %v142
    %150 = vadd.xlane.f32.xlu0 %v149
    %v151 = vpop.xlane.xlu0 %150
    %v152 = vsel %vm148, %v151, %v142
    %s153 = scalar_lea.vmem [#allocation2], 29
    %v154 = vld [vmem:[%s153] ss:$0 sm:$0xff]
    %v155 = vxor.u32 %v154, 2147483648
    %v156 = vlaneseq
    %v157 = vand.u32 %v156, 127
    %vm158 = vcmp.eq.s32.totalorder %v157, 29
    %v159 = vmul.f32 %v155, %v152
    %160 = vadd.xlane.f32.xlu0 %v159
    %v161 = vpop.xlane.xlu0 %160
    %v162 = vsel %vm158, %v161, %v152
    %s163 = scalar_lea.vmem [#allocation2], 28
    %v164 = vld [vmem:[%s163] ss:$0 sm:$0xff]
    %v165 = vxor.u32 %v164, 2147483648
    %v166 = vlaneseq
    %v167 = vand.u32 %v166, 127
    %vm168 = vcmp.eq.s32.totalorder %v167, 28
    %v169 = vmul.f32 %v165, %v162
    %170 = vadd.xlane.f32.xlu0 %v169
    %v171 = vpop.xlane.xlu0 %170
    %v172 = vsel %vm168, %v171, %v162
    %s173 = scalar_lea.vmem [#allocation2], 27
    %v174 = vld [vmem:[%s173] ss:$0 sm:$0xff]
    %v175 = vxor.u32 %v174, 2147483648
    %v176 = vlaneseq
    %v177 = vand.u32 %v176, 127
    %vm178 = vcmp.eq.s32.totalorder %v177, 27
    %v179 = vmul.f32 %v175, %v172
    %180 = vadd.xlane.f32.xlu0 %v179
    %v181 = vpop.xlane.xlu0 %180
    %v182 = vsel %vm178, %v181, %v172
    %s183 = scalar_lea.vmem [#allocation2], 26
    %v184 = vld [vmem:[%s183] ss:$0 sm:$0xff]
    %v185 = vxor.u32 %v184, 2147483648
    %v186 = vlaneseq
    %v187 = vand.u32 %v186, 127
    %vm188 = vcmp.eq.s32.totalorder %v187, 26
    %v189 = vmul.f32 %v185, %v182
    %190 = vadd.xlane.f32.xlu0 %v189
    %v191 = vpop.xlane.xlu0 %190
    %v192 = vsel %vm188, %v191, %v182
    %s193 = scalar_lea.vmem [#allocation2], 25
    %v194 = vld [vmem:[%s193] ss:$0 sm:$0xff]
    %v195 = vxor.u32 %v194, 2147483648
    %v196 = vlaneseq
    %v197 = vand.u32 %v196, 127
    %vm198 = vcmp.eq.s32.totalorder %v197, 25
    %v199 = vmul.f32 %v195, %v192
    %200 = vadd.xlane.f32.xlu0 %v199
    %v201 = vpop.xlane.xlu0 %200
    %v202 = vsel %vm198, %v201, %v192
    %s203 = scalar_lea.vmem [#allocation2], 24
    %v204 = vld [vmem:[%s203] ss:$0 sm:$0xff]
    %v205 = vxor.u32 %v204, 2147483648
    %v206 = vlaneseq
    %v207 = vand.u32 %v206, 127
    %vm208 = vcmp.eq.s32.totalorder %v207, 24
    %v209 = vmul.f32 %v205, %v202
    %210 = vadd.xlane.f32.xlu0 %v209
    %v211 = vpop.xlane.xlu0 %210
    %v212 = vsel %vm208, %v211, %v202
    %s213 = scalar_lea.vmem [#allocation2], 23
    %v214 = vld [vmem:[%s213] ss:$0 sm:$0xff]
    %v215 = vxor.u32 %v214, 2147483648
    %v216 = vlaneseq
    %v217 = vand.u32 %v216, 127
    %vm218 = vcmp.eq.s32.totalorder %v217, 23
    %v219 = vmul.f32 %v215, %v131
    %220 = vadd.xlane.f32.xlu0 %v219
    %v221 = vpop.xlane.xlu0 %220
    %v222 = vsel %vm218, %v221, %v131
    %v223 = vmul.f32 %v215, %v212
    %224 = vadd.xlane.f32.xlu0 %v223
    %v225 = vpop.xlane.xlu0 %224
    %v226 = vsel %vm218, %v225, %v212
    %s227 = scalar_lea.vmem [#allocation2], 22
    %v228 = vld [vmem:[%s227] ss:$0 sm:$0xff]
    %v229 = vxor.u32 %v228, 2147483648
    %v230 = vlaneseq
    %v231 = vand.u32 %v230, 127
    %vm232 = vcmp.eq.s32.totalorder %v231, 22
    %v233 = vmul.f32 %v229, %v222
    %234 = vadd.xlane.f32.xlu0 %v233
    %v235 = vpop.xlane.xlu0 %234
    %v236 = vsel %vm232, %v235, %v222
    %v237 = vmul.f32 %v229, %v226
    %238 = vadd.xlane.f32.xlu0 %v237
    %v239 = vpop.xlane.xlu0 %238
    %v240 = vsel %vm232, %v239, %v226
    %s241 = scalar_lea.vmem [#allocation2], 21
    %v242 = vld [vmem:[%s241] ss:$0 sm:$0xff]
    %v243 = vxor.u32 %v242, 2147483648
    %v244 = vlaneseq
    %v245 = vand.u32 %v244, 127
    %vm246 = vcmp.eq.s32.totalorder %v245, 21
    %v247 = vmul.f32 %v243, %v236
    %248 = vadd.xlane.f32.xlu0 %v247
    %v249 = vpop.xlane.xlu0 %248
    %v250 = vsel %vm246, %v249, %v236
    %v251 = vmul.f32 %v243, %v240
    %252 = vadd.xlane.f32.xlu0 %v251
    %v253 = vpop.xlane.xlu0 %252
    %v254 = vsel %vm246, %v253, %v240
    %s255 = scalar_lea.vmem [#allocation2], 20
    %v256 = vld [vmem:[%s255] ss:$0 sm:$0xff]
    %v257 = vxor.u32 %v256, 2147483648
    %v258 = vlaneseq
    %v259 = vand.u32 %v258, 127
    %vm260 = vcmp.eq.s32.totalorder %v259, 20
    %v261 = vmul.f32 %v257, %v250
    %262 = vadd.xlane.f32.xlu0 %v261
    %v263 = vpop.xlane.xlu0 %262
    %v264 = vsel %vm260, %v263, %v250
    %v265 = vmul.f32 %v257, %v254
    %266 = vadd.xlane.f32.xlu0 %v265
    %v267 = vpop.xlane.xlu0 %266
    %v268 = vsel %vm260, %v267, %v254
    %s269 = scalar_lea.vmem [#allocation2], 19
    %v270 = vld [vmem:[%s269] ss:$0 sm:$0xff]
    %v271 = vxor.u32 %v270, 2147483648
    %v272 = vlaneseq
    %v273 = vand.u32 %v272, 127
    %vm274 = vcmp.eq.s32.totalorder %v273, 19
    %v275 = vmul.f32 %v271, %v264
    %276 = vadd.xlane.f32.xlu0 %v275
    %v277 = vpop.xlane.xlu0 %276
    %v278 = vsel %vm274, %v277, %v264
    %v279 = vmul.f32 %v271, %v268
    %280 = vadd.xlane.f32.xlu0 %v279
    %v281 = vpop.xlane.xlu0 %280
    %v282 = vsel %vm274, %v281, %v268
    %s283 = scalar_lea.vmem [#allocation2], 18
    %v284 = vld [vmem:[%s283] ss:$0 sm:$0xff]
    %v285 = vxor.u32 %v284, 2147483648
    %v286 = vlaneseq
    %v287 = vand.u32 %v286, 127
    %vm288 = vcmp.eq.s32.totalorder %v287, 18
    %v289 = vmul.f32 %v285, %v278
    %290 = vadd.xlane.f32.xlu0 %v289
    %v291 = vpop.xlane.xlu0 %290
    %v292 = vsel %vm288, %v291, %v278
    %v293 = vmul.f32 %v285, %v282
    %294 = vadd.xlane.f32.xlu0 %v293
    %v295 = vpop.xlane.xlu0 %294
    %v296 = vsel %vm288, %v295, %v282
    %s297 = scalar_lea.vmem [#allocation2], 17
    %v298 = vld [vmem:[%s297] ss:$0 sm:$0xff]
    %v299 = vxor.u32 %v298, 2147483648
    %v300 = vlaneseq
    %v301 = vand.u32 %v300, 127
    %vm302 = vcmp.eq.s32.totalorder %v301, 17
    %v303 = vmul.f32 %v299, %v292
    %304 = vadd.xlane.f32.xlu0 %v303
    %v305 = vpop.xlane.xlu0 %304
    %v306 = vsel %vm302, %v305, %v292
    %v307 = vmul.f32 %v299, %v296
    %308 = vadd.xlane.f32.xlu0 %v307
    %v309 = vpop.xlane.xlu0 %308
    %v310 = vsel %vm302, %v309, %v296
    %s311 = scalar_lea.vmem [#allocation2], 16
    %v312 = vld [vmem:[%s311] ss:$0 sm:$0xff]
    %v313 = vxor.u32 %v312, 2147483648
    %v314 = vlaneseq
    %v315 = vand.u32 %v314, 127
    %vm316 = vcmp.eq.s32.totalorder %v315, 16
    %v317 = vmul.f32 %v313, %v306
    %318 = vadd.xlane.f32.xlu0 %v317
    %v319 = vpop.xlane.xlu0 %318
    %v320 = vsel %vm316, %v319, %v306
    %v321 = vmul.f32 %v313, %v310
    %322 = vadd.xlane.f32.xlu0 %v321
    %v323 = vpop.xlane.xlu0 %322
    %v324 = vsel %vm316, %v323, %v310
    %s325 = scalar_lea.vmem [#allocation2], 15
    %v326 = vld [vmem:[%s325] ss:$0 sm:$0xff]
    %v327 = vxor.u32 %v326, 2147483648
    %v328 = vlaneseq
    %v329 = vand.u32 %v328, 127
    %vm330 = vcmp.eq.s32.totalorder %v329, 15
    %v331 = vmul.f32 %v327, %v124
    %332 = vadd.xlane.f32.xlu0 %v331
    %v333 = vpop.xlane.xlu0 %332
    %v334 = vsel %vm330, %v333, %v124
    %v335 = vmul.f32 %v327, %v320
    %336 = vadd.xlane.f32.xlu0 %v335
    %v337 = vpop.xlane.xlu0 %336
    %v338 = vsel %vm330, %v337, %v320
    %v339 = vmul.f32 %v327, %v324
    %340 = vadd.xlane.f32.xlu0 %v339
    %v341 = vpop.xlane.xlu0 %340
    %v342 = vsel %vm330, %v341, %v324
    %s343 = scalar_lea.vmem [#allocation2], 14
    %v344 = vld [vmem:[%s343] ss:$0 sm:$0xff]
    %v345 = vxor.u32 %v344, 2147483648
    %v346 = vlaneseq
    %v347 = vand.u32 %v346, 127
    %vm348 = vcmp.eq.s32.totalorder %v347, 14
    %v349 = vmul.f32 %v345, %v334
    %350 = vadd.xlane.f32.xlu0 %v349
    %v351 = vpop.xlane.xlu0 %350
    %v352 = vsel %vm348, %v351, %v334
    %v353 = vmul.f32 %v345, %v338
    %354 = vadd.xlane.f32.xlu0 %v353
    %v355 = vpop.xlane.xlu0 %354
    %v356 = vsel %vm348, %v355, %v338
    %v357 = vmul.f32 %v345, %v342
    %358 = vadd.xlane.f32.xlu0 %v357
    %v359 = vpop.xlane.xlu0 %358
    %v360 = vsel %vm348, %v359, %v342
    %s361 = scalar_lea.vmem [#allocation2], 13
    %v362 = vld [vmem:[%s361] ss:$0 sm:$0xff]
    %v363 = vxor.u32 %v362, 2147483648
    %v364 = vlaneseq
    %v365 = vand.u32 %v364, 127
    %vm366 = vcmp.eq.s32.totalorder %v365, 13
    %v367 = vmul.f32 %v363, %v352
    %368 = vadd.xlane.f32.xlu0 %v367
    %v369 = vpop.xlane.xlu0 %368
    %v370 = vsel %vm366, %v369, %v352
    %v371 = vmul.f32 %v363, %v356
    %372 = vadd.xlane.f32.xlu0 %v371
    %v373 = vpop.xlane.xlu0 %372
    %v374 = vsel %vm366, %v373, %v356
    %v375 = vmul.f32 %v363, %v360
    %376 = vadd.xlane.f32.xlu0 %v375
    %v377 = vpop.xlane.xlu0 %376
    %v378 = vsel %vm366, %v377, %v360
    %s379 = scalar_lea.vmem [#allocation2], 12
    %v380 = vld [vmem:[%s379] ss:$0 sm:$0xff]
    %v381 = vxor.u32 %v380, 2147483648
    %v382 = vlaneseq
    %v383 = vand.u32 %v382, 127
    %vm384 = vcmp.eq.s32.totalorder %v383, 12
    %v385 = vmul.f32 %v381, %v370
    %386 = vadd.xlane.f32.xlu0 %v385
    %v387 = vpop.xlane.xlu0 %386
    %v388 = vsel %vm384, %v387, %v370
    %v389 = vmul.f32 %v381, %v374
    %390 = vadd.xlane.f32.xlu0 %v389
    %v391 = vpop.xlane.xlu0 %390
    %v392 = vsel %vm384, %v391, %v374
    %v393 = vmul.f32 %v381, %v378
    %394 = vadd.xlane.f32.xlu0 %v393
    %v395 = vpop.xlane.xlu0 %394
    %v396 = vsel %vm384, %v395, %v378
    %s397 = scalar_lea.vmem [#allocation2], 11
    %v398 = vld [vmem:[%s397] ss:$0 sm:$0xff]
    %v399 = vxor.u32 %v398, 2147483648
    %v400 = vlaneseq
    %v401 = vand.u32 %v400, 127
    %vm402 = vcmp.eq.s32.totalorder %v401, 11
    %v403 = vmul.f32 %v399, %v388
    %404 = vadd.xlane.f32.xlu0 %v403
    %v405 = vpop.xlane.xlu0 %404
    %v406 = vsel %vm402, %v405, %v388
    %v407 = vmul.f32 %v399, %v392
    %408 = vadd.xlane.f32.xlu0 %v407
    %v409 = vpop.xlane.xlu0 %408
    %v410 = vsel %vm402, %v409, %v392
    %v411 = vmul.f32 %v399, %v396
    %412 = vadd.xlane.f32.xlu0 %v411
    %v413 = vpop.xlane.xlu0 %412
    %v414 = vsel %vm402, %v413, %v396
    %s415 = scalar_lea.vmem [#allocation2], 10
    %v416 = vld [vmem:[%s415] ss:$0 sm:$0xff]
    %v417 = vxor.u32 %v416, 2147483648
    %v418 = vlaneseq
    %v419 = vand.u32 %v418, 127
    %vm420 = vcmp.eq.s32.totalorder %v419, 10
    %v421 = vmul.f32 %v417, %v406
    %422 = vadd.xlane.f32.xlu0 %v421
    %v423 = vpop.xlane.xlu0 %422
    %v424 = vsel %vm420, %v423, %v406
    %v425 = vmul.f32 %v417, %v410
    %426 = vadd.xlane.f32.xlu0 %v425
    %v427 = vpop.xlane.xlu0 %426
    %v428 = vsel %vm420, %v427, %v410
    %v429 = vmul.f32 %v417, %v414
    %430 = vadd.xlane.f32.xlu0 %v429
    %v431 = vpop.xlane.xlu0 %430
    %v432 = vsel %vm420, %v431, %v414
    %s433 = scalar_lea.vmem [#allocation2], 9
    %v434 = vld [vmem:[%s433] ss:$0 sm:$0xff]
    %v435 = vxor.u32 %v434, 2147483648
    %v436 = vlaneseq
    %v437 = vand.u32 %v436, 127
    %vm438 = vcmp.eq.s32.totalorder %v437, 9
    %v439 = vmul.f32 %v435, %v424
    %440 = vadd.xlane.f32.xlu0 %v439
    %v441 = vpop.xlane.xlu0 %440
    %v442 = vsel %vm438, %v441, %v424
    %v443 = vmul.f32 %v435, %v428
    %444 = vadd.xlane.f32.xlu0 %v443
    %v445 = vpop.xlane.xlu0 %444
    %v446 = vsel %vm438, %v445, %v428
    %v447 = vmul.f32 %v435, %v432
    %448 = vadd.xlane.f32.xlu0 %v447
    %v449 = vpop.xlane.xlu0 %448
    %v450 = vsel %vm438, %v449, %v432
    %s451 = scalar_lea.vmem [#allocation2], 8
    %v452 = vld [vmem:[%s451] ss:$0 sm:$0xff]
    %v453 = vxor.u32 %v452, 2147483648
    %v454 = vlaneseq
    %v455 = vand.u32 %v454, 127
    %vm456 = vcmp.eq.s32.totalorder %v455, 8
    %v457 = vmul.f32 %v453, %v442
    %458 = vadd.xlane.f32.xlu0 %v457
    %v459 = vpop.xlane.xlu0 %458
    %v460 = vsel %vm456, %v459, %v442
    %v461 = vmul.f32 %v453, %v446
    %462 = vadd.xlane.f32.xlu0 %v461
    %v463 = vpop.xlane.xlu0 %462
    %v464 = vsel %vm456, %v463, %v446
    %v465 = vmul.f32 %v453, %v450
    %466 = vadd.xlane.f32.xlu0 %v465
    %v467 = vpop.xlane.xlu0 %466
    %v468 = vsel %vm456, %v467, %v450
    %s469 = scalar_lea.vmem [#allocation2], 7
    %v470 = vld [vmem:[%s469] ss:$0 sm:$0xff]
    %v471 = vxor.u32 %v470, 2147483648
    %v472 = vlaneseq
    %v473 = vand.u32 %v472, 127
    %vm474 = vcmp.eq.s32.totalorder %v473, 7
    %v475 = vmul.f32 %v471, %v117
    %476 = vadd.xlane.f32.xlu0 %v475
    %v477 = vpop.xlane.xlu0 %476
    %v478 = vsel %vm474, %v477, %v117
    %v479 = vmul.f32 %v471, %v460
    %480 = vadd.xlane.f32.xlu0 %v479
    %v481 = vpop.xlane.xlu0 %480
    %v482 = vsel %vm474, %v481, %v460
    %v483 = vmul.f32 %v471, %v464
    %484 = vadd.xlane.f32.xlu0 %v483
    %v485 = vpop.xlane.xlu0 %484
    %v486 = vsel %vm474, %v485, %v464
    %v487 = vmul.f32 %v471, %v468
    %488 = vadd.xlane.f32.xlu0 %v487
    %v489 = vpop.xlane.xlu0 %488
    %v490 = vsel %vm474, %v489, %v468
    %s491 = scalar_lea.vmem [#allocation2], 6
    %v492 = vld [vmem:[%s491] ss:$0 sm:$0xff]
    %v493 = vxor.u32 %v492, 2147483648
    %v494 = vlaneseq
    %v495 = vand.u32 %v494, 127
    %vm496 = vcmp.eq.s32.totalorder %v495, 6
    %v497 = vmul.f32 %v493, %v478
    %498 = vadd.xlane.f32.xlu0 %v497
    %v499 = vpop.xlane.xlu0 %498
    %v500 = vsel %vm496, %v499, %v478
    %v501 = vmul.f32 %v493, %v482
    %502 = vadd.xlane.f32.xlu0 %v501
    %v503 = vpop.xlane.xlu0 %502
    %v504 = vsel %vm496, %v503, %v482
    %v505 = vmul.f32 %v493, %v486
    %506 = vadd.xlane.f32.xlu0 %v505
    %v507 = vpop.xlane.xlu0 %506
    %v508 = vsel %vm496, %v507, %v486
    %v509 = vmul.f32 %v493, %v490
    %510 = vadd.xlane.f32.xlu0 %v509
    %v511 = vpop.xlane.xlu0 %510
    %v512 = vsel %vm496, %v511, %v490
    %s513 = scalar_lea.vmem [#allocation2], 5
    %v514 = vld [vmem:[%s513] ss:$0 sm:$0xff]
    %v515 = vxor.u32 %v514, 2147483648
    %v516 = vlaneseq
    %v517 = vand.u32 %v516, 127
    %vm518 = vcmp.eq.s32.totalorder %v517, 5
    %v519 = vmul.f32 %v515, %v500
    %520 = vadd.xlane.f32.xlu0 %v519
    %v521 = vpop.xlane.xlu0 %520
    %v522 = vsel %vm518, %v521, %v500
    %v523 = vmul.f32 %v515, %v504
    %524 = vadd.xlane.f32.xlu0 %v523
    %v525 = vpop.xlane.xlu0 %524
    %v526 = vsel %vm518, %v525, %v504
    %v527 = vmul.f32 %v515, %v508
    %528 = vadd.xlane.f32.xlu0 %v527
    %v529 = vpop.xlane.xlu0 %528
    %v530 = vsel %vm518, %v529, %v508
    %v531 = vmul.f32 %v515, %v512
    %532 = vadd.xlane.f32.xlu0 %v531
    %v533 = vpop.xlane.xlu0 %532
    %v534 = vsel %vm518, %v533, %v512
    %s535 = scalar_lea.vmem [#allocation2], 4
    %v536 = vld [vmem:[%s535] ss:$0 sm:$0xff]
    %v537 = vxor.u32 %v536, 2147483648
    %v538 = vlaneseq
    %v539 = vand.u32 %v538, 127
    %vm540 = vcmp.eq.s32.totalorder %v539, 4
    %v541 = vmul.f32 %v537, %v522
    %542 = vadd.xlane.f32.xlu0 %v541
    %v543 = vpop.xlane.xlu0 %542
    %v544 = vsel %vm540, %v543, %v522
    %v545 = vmul.f32 %v537, %v526
    %546 = vadd.xlane.f32.xlu0 %v545
    %v547 = vpop.xlane.xlu0 %546
    %v548 = vsel %vm540, %v547, %v526
    %v549 = vmul.f32 %v537, %v530
    %550 = vadd.xlane.f32.xlu0 %v549
    %v551 = vpop.xlane.xlu0 %550
    %v552 = vsel %vm540, %v551, %v530
    %v553 = vmul.f32 %v537, %v534
    %554 = vadd.xlane.f32.xlu0 %v553
    %v555 = vpop.xlane.xlu0 %554
    %v556 = vsel %vm540, %v555, %v534
    %s557 = scalar_lea.vmem [#allocation2], 3
    %v558 = vld [vmem:[%s557] ss:$0 sm:$0xff]
    %v559 = vxor.u32 %v558, 2147483648
    %v560 = vlaneseq
    %v561 = vand.u32 %v560, 127
    %vm562 = vcmp.eq.s32.totalorder %v561, 3
    %v563 = vmul.f32 %v559, %v544
    %564 = vadd.xlane.f32.xlu0 %v563
    %v565 = vpop.xlane.xlu0 %564
    %v566 = vsel %vm562, %v565, %v544
    %v567 = vmul.f32 %v559, %v548
    %568 = vadd.xlane.f32.xlu0 %v567
    %v569 = vpop.xlane.xlu0 %568
    %v570 = vsel %vm562, %v569, %v548
    %v571 = vmul.f32 %v559, %v552
    %572 = vadd.xlane.f32.xlu0 %v571
    %v573 = vpop.xlane.xlu0 %572
    %v574 = vsel %vm562, %v573, %v552
    %v575 = vmul.f32 %v559, %v556
    %576 = vadd.xlane.f32.xlu0 %v575
    %v577 = vpop.xlane.xlu0 %576
    %v578 = vsel %vm562, %v577, %v556
    %s579 = scalar_lea.vmem [#allocation2], 2
    %v580 = vld [vmem:[%s579] ss:$0 sm:$0xff]
    %v581 = vxor.u32 %v580, 2147483648
    %v582 = vlaneseq
    %v583 = vand.u32 %v582, 127
    %vm584 = vcmp.eq.s32.totalorder %v583, 2
    %v585 = vmul.f32 %v581, %v566
    %586 = vadd.xlane.f32.xlu0 %v585
    %v587 = vpop.xlane.xlu0 %586
    %v588 = vsel %vm584, %v587, %v566
    %v589 = vmul.f32 %v581, %v570
    %590 = vadd.xlane.f32.xlu0 %v589
    %v591 = vpop.xlane.xlu0 %590
    %v592 = vsel %vm584, %v591, %v570
    %v593 = vmul.f32 %v581, %v574
    %594 = vadd.xlane.f32.xlu0 %v593
    %v595 = vpop.xlane.xlu0 %594
    %v596 = vsel %vm584, %v595, %v574
    %v597 = vmul.f32 %v581, %v578
    %598 = vadd.xlane.f32.xlu0 %v597
    %v599 = vpop.xlane.xlu0 %598
    %v600 = vsel %vm584, %v599, %v578
    %s601 = scalar_lea.vmem [#allocation2], 1
    %v602 = vld [vmem:[%s601] ss:$0 sm:$0xff]
    %v603 = vxor.u32 %v602, 2147483648
    %v604 = vlaneseq
    %v605 = vand.u32 %v604, 127
    %vm606 = vcmp.eq.s32.totalorder %v605, 1
    %v607 = vmul.f32 %v603, %v588
    %608 = vadd.xlane.f32.xlu0 %v607
    %v609 = vpop.xlane.xlu0 %608
    %v610 = vsel %vm606, %v609, %v588
    %v611 = vmul.f32 %v603, %v592
    %612 = vadd.xlane.f32.xlu0 %v611
    %v613 = vpop.xlane.xlu0 %612
    %v614 = vsel %vm606, %v613, %v592
    %v615 = vmul.f32 %v603, %v596
    %616 = vadd.xlane.f32.xlu0 %v615
    %v617 = vpop.xlane.xlu0 %616
    %v618 = vsel %vm606, %v617, %v596
    %v619 = vmul.f32 %v603, %v600
    %620 = vadd.xlane.f32.xlu0 %v619
    %v621 = vpop.xlane.xlu0 %620
    %v622 = vsel %vm606, %v621, %v600
    %v623 = vld [vmem:[#allocation2] ss:$0 sm:$0xff]
    %v624 = vxor.u32 %v623, 2147483648
    %v625 = vlaneseq
    %v626 = vand.u32 %v625, 127
    %vm627 = vcmp.eq.s32.totalorder %v626, 0
    %v628 = vmul.f32 %v624, %v610
    %629 = vadd.xlane.f32.xlu0 %v628
    %v630 = vpop.xlane.xlu0 %629
    %v631 = vsel %vm627, %v630, %v610
    %v632 = vmul.f32 %v624, %v614
    %633 = vadd.xlane.f32.xlu0 %v632
    %v634 = vpop.xlane.xlu0 %633
    %v635 = vsel %vm627, %v634, %v614
    %v636 = vmul.f32 %v624, %v618
    %637 = vadd.xlane.f32.xlu0 %v636
    %v638 = vpop.xlane.xlu0 %637
    %v639 = vsel %vm627, %v638, %v618
    %v640 = vmul.f32 %v624, %v622
    %641 = vadd.xlane.f32.xlu0 %v640
    %v642 = vpop.xlane.xlu0 %641
    %v643 = vsel %vm627, %v642, %v622
    %v644 = vrcp.pop %v56
    %v645 = vmul.f32 %v631, %v644
    %vm646 = vweird.f32 %v56
    %v647 = vsel %vm646, %v631, %v645
    %648 = vst [vmem:[#allocation1] sm:$0xff] %v647
    %v649 = vrcp.pop %v72
    %v650 = vmul.f32 %v635, %v649
    %vm651 = vweird.f32 %v72
    %v652 = vsel %vm651, %v635, %v650
    %s653 = scalar_lea.vmem [#allocation1], 8
    %654 = vst [vmem:[%s653] sm:$0xff] %v652
    %v655 = vrcp.pop %v88
    %v656 = vmul.f32 %v639, %v655
    %vm657 = vweird.f32 %v88
    %v658 = vsel %vm657, %v639, %v656
    %s659 = scalar_lea.vmem [#allocation1], 16
    %660 = vst [vmem:[%s659] sm:$0xff] %v658
    %v661 = vrcp.pop %v104
    %v662 = vmul.f32 %v643, %v661
    %vm663 = vweird.f32 %v104
    %v664 = vsel %vm663, %v643, %v662
    %s665 = scalar_lea.vmem [#allocation1], 24
    %666 = vst [vmem:[%s665] sm:$0xff] %v664
    // Predicated region
    $region36: #{custom-call.32} parent=1 // pred_check
      _
    $region37: #{custom-call.32} parent=1 // pred_check_branch
      %668 = sbr.rel (0) target = $region39
    $region38: #{custom-call.32} parent=1 // pred_region
      // Predicated region
      $region40: #{custom-call.32} parent=38 // pred_check
        _
      $region41: #{custom-call.32} parent=38 // pred_check_branch
        %670 = sbr.rel (0) target = $region43
      $region42: #{custom-call.32} parent=38 // pred_region
        // Predicated region
        $region55: #{custom-call.32} parent=42 // pred_check
          _
        $region56: #{custom-call.32} parent=42 // pred_check_branch
          %691 = sbr.rel (0) target = $region58
        $region57: #{custom-call.32} parent=42 // pred_region
          loop: start=0, step=1, limit=1
          $region59: #{custom-call.32} parent=57 // loop_pre_header
            _
          $region60: #{custom-call.32} parent=57 // loop_header
            %s693 = sphi 0, %s697
            %p694 = scmp.ge.s32.totalorder %s693, 1
            %s698 = sphi [#allocation1], [#allocation1]
            %s699 = sphi %s1, %s1
          $region61: #{custom-call.32} parent=57 // loop_header_branch
            %696 = sbr.rel (%p694) target = $region65
          $region62: #{custom-call.32} parent=57 // loop_body
            %v700 = vld [vmem:[%s698] sm:$0xff]
            %701 = vst [vmem:[%s699] sm:$0xff] %v700
            %v702 = vld [vmem:[%s698 + $0x8] sm:$0xff]
            %703 = vst [vmem:[%s699 + $0x8] sm:$0xff] %v702
            %v704 = vld [vmem:[%s698 + $0x10] sm:$0xff]
            %705 = vst [vmem:[%s699 + $0x10] sm:$0xff] %v704
            %v706 = vld [vmem:[%s698 + $0x18] sm:$0xff]
            %707 = vst [vmem:[%s699 + $0x18] sm:$0xff] %v706
          $region63: #{custom-call.32} parent=57 // loop_footer
            %s697 = sadd.s32 1, %s693
          $region64: #{custom-call.32} parent=57 // loop_footer_branch
            %692 = sbr.rel target = $region60
          $region65: #{custom-call.32} parent=57 // loop_exit
            _
        $region58: #{custom-call.32} parent=42 // pred_fallthru
          _
        // Predicated region
        $region66: #{custom-call.32} parent=42 // pred_check
          _
        $region67: #{custom-call.32} parent=42 // pred_check_branch
          %709 = sbr.rel target = $region69
        $region68: #{custom-call.32} parent=42 // pred_region
          _
        $region69: #{custom-call.32} parent=42 // pred_fallthru
          _
      $region43: #{custom-call.32} parent=38 // pred_fallthru
        _
      // Predicated region
      $region44: #{custom-call.32} parent=38 // pred_check
        _
      $region45: #{custom-call.32} parent=38 // pred_check_branch
        %672 = sbr.rel target = $region47
      $region46: #{custom-call.32} parent=38 // pred_region
        loop: start=0, step=1, limit=1
        $region48: #{custom-call.32} parent=46 // loop_pre_header
          _
        $region49: #{custom-call.32} parent=46 // loop_header
          %s675 = sphi 0, %s679
          %p676 = scmp.ge.s32.totalorder %s675, 1
          %s680 = sphi [#allocation1], [#allocation1]
          %s681 = sphi %s1, %s1
        $region50: #{custom-call.32} parent=46 // loop_header_branch
          %678 = sbr.rel (%p676) target = $region54
        $region51: #{custom-call.32} parent=46 // loop_body
          %v682 = vld [vmem:[%s680] sm:$0xff]
          %683 = vst [vmem:[%s681] sm:$0xff] %v682
          %v684 = vld [vmem:[%s680 + $0x8] sm:$0xff]
          %685 = vst [vmem:[%s681 + $0x8] sm:$0xff] %v684
          %v686 = vld [vmem:[%s680 + $0x10] sm:$0xff]
          %687 = vst [vmem:[%s681 + $0x10] sm:$0xff] %v686
          %v688 = vld [vmem:[%s680 + $0x18] sm:$0xff]
          %689 = vst [vmem:[%s681 + $0x18] sm:$0xff] %v688
        $region52: #{custom-call.32} parent=46 // loop_footer
          %s679 = sadd.s32 1, %s675
        $region53: #{custom-call.32} parent=46 // loop_footer_branch
          %674 = sbr.rel target = $region49
        $region54: #{custom-call.32} parent=46 // loop_exit
          _
      $region47: #{custom-call.32} parent=38 // pred_fallthru
        _
    $region39: #{custom-call.32} parent=1 // pred_fallthru
      _
    %710 = vnop

// kernel: custom-call.29
$region0: #{custom-call.29}
  %s0 = inlined_call_operand.vmem [shape: f32[16,16], index: 0, kind: input, shape index: {}]
  %s1 = inlined_call_operand.vmem [shape: f32[16,16], index: 1, kind: output, shape index: {0}]
  %s2 = inlined_call_operand.hbm [shape: s32[16], index: 2, kind: output, shape index: {1}]
  %s3 = inlined_call_operand.vmem [shape: s32[16], index: 3, kind: output, shape index: {2}]
  %4 = xla_tuple %s1, %s2, %s3
  $region1: #{custom-call.29} parent=0
    #allocation0 [shape = 'u8[8192]{0}', space=vmem, size = 0x2000, scoped, tag = 'operand span for operand 0']
    #allocation1 [shape = 'u8[8192]{0}', space=vmem, size = 0x2000, scoped, tag = 'operand span for operand 1']
    #allocation2 [shape = 'u8[4096]{0}', space=vmem, size = 0x1000, scoped, tag = 'operand span for operand 2']
    #allocation3 [shape = 'u8[512]{0}', space=vmem, size = 0x400, scoped, tag = 'packed  for operand 2']
    #allocation4 [shape = 's32[1]{0}', space=sflag, size = 0x4, scoped, tag = 'scoped memory for custom-call.29']
    #allocation5 [shape = 'u8[4096]{0}', space=vmem, size = 0x1000, scoped, tag = 'operand span for operand 3']
    #allocation6 [shape = 'u8[512]{0}', space=vmem, size = 0x400, scoped, tag = 'packed  for operand 3']
    #allocation7 [shape = 's32[16,128]{1,0}', space=vmem, size = 0x2000, scoped, tag = 'scratch for permutations']
    %5 = vsyncpa [#allocation4], 0
    %p7 = scmp.gt.s32.totalorder 16, 0
    // Predicated region
    $region2: #{custom-call.29} parent=1 // pred_check
      %p8 = pneg %p7
    $region3: #{custom-call.29} parent=1 // pred_check_branch
      %10 = sbr.rel (%p8) target = $region5
    $region4: #{custom-call.29} parent=1 // pred_region
      %s11 = sshra.s32 16, 3
      %p12 = scmp.gt.s32.totalorder %s11, 0
      // Predicated region
      $region6: #{custom-call.29} parent=4 // pred_check
        %p13 = pneg %p12
      $region7: #{custom-call.29} parent=4 // pred_check_branch
        %15 = sbr.rel (%p13) target = $region9
      $region8: #{custom-call.29} parent=4 // pred_region
        %s16 = ssub.s32 %s11, 1
        %s17 = smul.u32 %s16, 128
        %s18 = sshra.s32 %s17, 4
        %s19 = scalar_lea.vmem %s0, %s18
        %v20 = vld [vmem:[%s0] sm:$0xff]
        // While loop
        $region10: #{custom-call.29} parent=8 // loop_pre_header
          _
        $region11: #{custom-call.29} parent=8 // loop_header
          %s21 = sphi %s0, %s43
          %s22 = sphi [#allocation0], %s44
          %v23 = vphi %v20, %v45
          %s24 = ssub.s32 %s19, 64
          %p25 = scmp.gt.s32.totalorder %s21, %s24
        $region12: #{custom-call.29} parent=8 // loop_header_branch
          %27 = sbr.rel (%p25) target = $region16
        $region13: #{custom-call.29} parent=8 // loop_body
          %28 = vst [vmem:[%s22] sm:$0xff] %v23
          %v29 = vld [vmem:[%s21 + $0x8] sm:$0xff]
          %30 = vst [vmem:[%s22 + $0x8] sm:$0xff] %v29
          %v31 = vld [vmem:[%s21 + $0x10] sm:$0xff]
          %32 = vst [vmem:[%s22 + $0x10] sm:$0xff] %v31
          %v33 = vld [vmem:[%s21 + $0x18] sm:$0xff]
          %34 = vst [vmem:[%s22 + $0x18] sm:$0xff] %v33
          %v35 = vld [vmem:[%s21 + $0x20] sm:$0xff]
          %36 = vst [vmem:[%s22 + $0x20] sm:$0xff] %v35
          %v37 = vld [vmem:[%s21 + $0x28] sm:$0xff]
          %38 = vst [vmem:[%s22 + $0x28] sm:$0xff] %v37
          %v39 = vld [vmem:[%s21 + $0x30] sm:$0xff]
          %40 = vst [vmem:[%s22 + $0x30] sm:$0xff] %v39
          %v41 = vld [vmem:[%s21 + $0x38] sm:$0xff]
          %42 = vst [vmem:[%s22 + $0x38] sm:$0xff] %v41
        $region14: #{custom-call.29} parent=8 // loop_footer
          %s43 = scalar_lea.vmem %s21, 64
          %s44 = scalar_lea.vmem %s22, 64
          %v45 = vld [vmem:[%s21 + $0x40] sm:$0xff]
        $region15: #{custom-call.29} parent=8 // loop_footer_branch
          %46 = sbr.rel target = $region11
        $region16: #{custom-call.29} parent=8 // loop_exit
          _
        // While loop
        $region17: #{custom-call.29} parent=8 // loop_pre_header
          _
        $region18: #{custom-call.29} parent=8 // loop_header
          %s47 = sphi %s21, %s55
          %s48 = sphi %s22, %s56
          %v49 = vphi %v23, %v49
          %p50 = scmp.gt.s32.totalorder %s47, %s19
        $region19: #{custom-call.29} parent=8 // loop_header_branch
          %52 = sbr.rel (%p50) target = $region23
        $region20: #{custom-call.29} parent=8 // loop_body
          %v53 = vld [vmem:[%s47] sm:$0xff]
          %54 = vst [vmem:[%s48] sm:$0xff] %v53
        $region21: #{custom-call.29} parent=8 // loop_footer
          %s55 = scalar_lea.vmem %s47, 8
          %s56 = scalar_lea.vmem %s48, 8
        $region22: #{custom-call.29} parent=8 // loop_footer_branch
          %57 = sbr.rel target = $region18
        $region23: #{custom-call.29} parent=8 // loop_exit
          _
      $region9: #{custom-call.29} parent=4 // pred_fallthru
        _
      %s58 = sand.u32 16, 7
      %s59 = sshllo.u32 0, %s58
      %s60 = smul.u32 %s11, 128
      %s61 = sshra.s32 %s60, 4
      %s62 = scalar_lea.vmem [#allocation0], %s61
      %s63 = smul.u32 %s11, 128
      %s64 = sshra.s32 %s63, 4
      %s65 = scalar_lea.vmem %s0, %s64
      %v66 = vld [vmem:[%s65] sm:%s59]
      %67 = vst [vmem:[%s62] sm:%s59] %v66
    $region5: #{custom-call.29} parent=1 // pred_fallthru
      _
    %v68 = vld [vmem:[#allocation0] sm:$0xff]
    %69 = vst [vmem:[#allocation1] sm:$0xff] %v68
    %s70 = scalar_lea.vmem [#allocation1], 8
    %s71 = scalar_lea.vmem [#allocation0], 8
    %v72 = vld [vmem:[%s71] sm:$0xff]
    %73 = vst [vmem:[%s70] sm:$0xff] %v72
    %74 = vst [vmem:[#allocation2] sm:$0x1] 0
    %v75 = vlaneseq
    %v76 = vshrl.u32 %v75, 7
    %v77 = vmov %v76
    loop: start=0, step=1, limit=2
    $region24: #{custom-call.29} parent=1 // loop_pre_header
      _
    $region25: #{custom-call.29} parent=1 // loop_header
      %s79 = sphi 0, %s83
      %p80 = scmp.ge.s32.totalorder %s79, 2
    $region26: #{custom-call.29} parent=1 // loop_header_branch
      %82 = sbr.rel (%p80) target = $region30
    $region27: #{custom-call.29} parent=1 // loop_body
      %s84 = smul.addr %s79, 8
      %s85 = scalar_lea.vmem [#allocation7], %s84
      %s86 = smul.u32 %s79, 8
      %v87 = vstv %s86
      %v88 = vadd.s32 %v77, %v87
      %89 = vst [vmem:[%s85] sm:$0xff] %v88
    $region28: #{custom-call.29} parent=1 // loop_footer
      %s83 = sadd.s32 1, %s79
    $region29: #{custom-call.29} parent=1 // loop_footer_branch
      %78 = sbr.rel target = $region25
    $region30: #{custom-call.29} parent=1 // loop_exit
      _
    loop: start=0, step=1, limit=16
    $region31: #{custom-call.29} parent=1 // loop_pre_header
      _
    $region32: #{custom-call.29} parent=1 // loop_header
      %s91 = sphi 0, %s95
      %p92 = scmp.ge.s32.totalorder %s91, 16
    $region33: #{custom-call.29} parent=1 // loop_header_branch
      %94 = sbr.rel (%p92) target = $region37
    $region34: #{custom-call.29} parent=1 // loop_body
      %v96 = vstv %s91
      %v97 = vlaneseq
      %v98 = vshrl.u32 %v97, 7
      %v99 = vmov %v98
      %v100 = vld [vmem:[#allocation1] sm:$0xff]
      %v101 = vand.u32 2147483647, %v100
      %v103 = vstv %s91
      %vm104 = vcmp.ge.s32.totalorder %v99, %v103
      %vm105 = vcmp.lt.s32.totalorder %v99, 16
      %vm106 = vmand %vm104, %vm105
      %vm107 = vcmp.lt.f32.partialorder -inf, %v101
      %vm108 = vmand %vm106, %vm107
      %v109 = vsel %vm108, %v99, %v96
      %v110 = vsel %vm108, %v101, -inf
      %s111 = scalar_lea.vmem [#allocation1], 8
      %v112 = vld [vmem:[%s111] sm:$0xff]
      %v113 = vand.u32 2147483647, %v112
      %v114 = vadd.s32 %v99, 8
      %v115 = vstv %s91
      %vm116 = vcmp.ge.s32.totalorder %v114, %v115
      %vm117 = vcmp.lt.s32.totalorder %v114, 16
      %vm118 = vmand %vm116, %vm117
      %vm119 = vcmp.lt.f32.partialorder %v110, %v113
      %vm120 = vmand %vm118, %vm119
      %v121 = vsel %vm120, %v114, %v109
      %v122 = vsel %vm120, %v113, %v110
      %v123 = vrot.slane %v122, 1
      %v124 = vrot.slane %v121, 1
      %vm125 = vcmp.ge.f32.partialorder %v123, %v122
      %v126 = vsel %vm125, %v123, %v122
      %v127 = vsel %vm125, %v124, %v121
      %v128 = vrot.slane %v123, 1
      %v129 = vrot.slane %v124, 1
      %vm130 = vcmp.ge.f32.partialorder %v128, %v126
      %v131 = vsel %vm130, %v128, %v126
      %v132 = vsel %vm130, %v129, %v127
      %v133 = vrot.slane %v128, 1
      %v134 = vrot.slane %v129, 1
      %vm135 = vcmp.ge.f32.partialorder %v133, %v131
      %v136 = vsel %vm135, %v133, %v131
      %v137 = vsel %vm135, %v134, %v132
      %v138 = vrot.slane %v133, 1
      %v139 = vrot.slane %v134, 1
      %vm140 = vcmp.ge.f32.partialorder %v138, %v136
      %v141 = vsel %vm140, %v138, %v136
      %v142 = vsel %vm140, %v139, %v137
      %v143 = vrot.slane %v138, 1
      %v144 = vrot.slane %v139, 1
      %vm145 = vcmp.ge.f32.partialorder %v143, %v141
      %v146 = vsel %vm145, %v143, %v141
      %v147 = vsel %vm145, %v144, %v142
      %v148 = vrot.slane %v143, 1
      %v149 = vrot.slane %v144, 1
      %vm150 = vcmp.ge.f32.partialorder %v148, %v146
      %v151 = vsel %vm150, %v148, %v146
      %v152 = vsel %vm150, %v149, %v147
      %v153 = vrot.slane %v148, 1
      %v154 = vrot.slane %v149, 1
      %vm155 = vcmp.ge.f32.partialorder %v153, %v151
      %v156 = vsel %vm155, %v153, %v151
      %v157 = vsel %vm155, %v154, %v152
      %s158 = ssub.s32 128, %s91
      %159 = vrot.lane.b32.xlu0 %v157, %s158
      %v160 = vpop.permute.xlu0 %159
      %s161 = vtos %v160
      %v162 = vstv %s91
      %v163 = vlaneseq
      %v164 = vand.u32 %v163, 127
      %vm165 = vcmp.eq.s32.totalorder %v164, %v162
      %v166 = vstv %s161
      %v167 = vld [vmem:[#allocation2] ss:$0 sm:$0xff]
      %v168 = vsel %vm165, %v166, %v167
      %169 = vst [vmem:[#allocation2] sm:$0x1] %v168
      %s170 = scalar_lea.vmem [#allocation1], %s91
      %s171 = scalar_lea.vmem [#allocation1], %s161
      %v172 = vld [vmem:[%s170] ss:$0 sm:$0xff]
      %v173 = vld [vmem:[%s171] ss:$0 sm:$0xff]
      %174 = vst [vmem:[%s171] sm:$0x1] %v172
      %175 = vst [vmem:[%s170] sm:$0x1] %v173
      %s176 = scalar_lea.vmem [#allocation7], %s91
      %s177 = scalar_lea.vmem [#allocation7], %s161
      %v178 = vld [vmem:[%s176] ss:$0 sm:$0xff]
      %v179 = vld [vmem:[%s177] ss:$0 sm:$0xff]
      %180 = vst [vmem:[%s177] sm:$0x1] %v178
      %181 = vst [vmem:[%s176] sm:$0x1] %v179
      %vm182 = vcmp.ne.f32.partialorder %v173, 0.0
      %vm183 = vmand %vm165, %vm182
      %v184 = vsel %vm183, %v173, 1.0
      %v185 = vlaneseq
      %v186 = vand.u32 %v185, 127
      %v187 = vstv %s91
      %vm188 = vcmp.gt.s32.totalorder %v186, %v187
      %v189 = vsel %vm188, %v173, 0.0
      %v190 = vlaneseq
      %v191 = vshrl.u32 %v190, 7
      %v192 = vmov %v191
      %v193 = vld [vmem:[#allocation1] sm:$0xff]
      %v195 = vstv %s91
      %vm196 = vcmp.gt.s32.totalorder %v192, %v195
      %v197 = vsel %vm196, %v184, 1.0
      %v198 = vrcp.pop %v197
      %v199 = vmul.f32 %v193, %v198
      %vm200 = vmand %vm196, %vm165
      %v201 = vsel %vm200, %v199, 0.0
      %202 = vadd.xlane.f32.xlu0 %v201
      %v203 = vpop.xlane.xlu0 %202
      %v204 = vmul.f32 %v203, %v189
      %v205 = vsub.f32 %v199, %v204
      %206 = vst [vmem:[#allocation1] sm:$0xff] %v205
      %s207 = scalar_lea.vmem [#allocation1], 8
      %v208 = vld [vmem:[%s207] sm:$0xff]
      %v209 = vadd.s32 %v192, 8
      %v210 = vstv %s91
      %vm211 = vcmp.gt.s32.totalorder %v209, %v210
      %v212 = vsel %vm211, %v184, 1.0
      %v213 = vrcp.pop %v212
      %v214 = vmul.f32 %v208, %v213
      %vm215 = vmand %vm211, %vm165
      %v216 = vsel %vm215, %v214, 0.0
      %217 = vadd.xlane.f32.xlu0 %v216
      %v218 = vpop.xlane.xlu0 %217
      %v219 = vmul.f32 %v218, %v189
      %v220 = vsub.f32 %v214, %v219
      %221 = vst [vmem:[%s207] sm:$0xff] %v220
    $region35: #{custom-call.29} parent=1 // loop_footer
      %s95 = sadd.s32 1, %s91
    $region36: #{custom-call.29} parent=1 // loop_footer_branch
      %90 = sbr.rel target = $region32
    $region37: #{custom-call.29} parent=1 // loop_exit
      _
    %v222 = vld [vmem:[#allocation7] sm:$0xff]
    %s223 = scalar_lea.vmem [#allocation7], 8
    %v224 = vld [vmem:[%s223] sm:$0xff]
    %s225 = scalar_lea.vmem [#allocation7], 16
    %s226 = scalar_lea.vmem [#allocation7], 24
    %s227 = scalar_lea.vmem [#allocation7], 32
    %s228 = scalar_lea.vmem [#allocation7], 40
    %s229 = scalar_lea.vmem [#allocation7], 48
    %s230 = scalar_lea.vmem [#allocation7], 56
    %s231 = scalar_lea.vmem [#allocation7], 64
    %s232 = scalar_lea.vmem [#allocation7], 72
    %s233 = scalar_lea.vmem [#allocation7], 80
    %s234 = scalar_lea.vmem [#allocation7], 88
    %s235 = scalar_lea.vmem [#allocation7], 96
    %s236 = scalar_lea.vmem [#allocation7], 104
    %s237 = scalar_lea.vmem [#allocation7], 112
    %s238 = scalar_lea.vmem [#allocation7], 120
    %239 = vxpose.xlu0.b32.start [1/16] %v222, 128
    %240 = vxpose.xlu0.b32.cont [2/16] %v224, 128
    %241 = vxpose.xlu0.b32.cont [3/16] 0, 128
    %242 = vxpose.xlu0.b32.cont [4/16] 0, 128
    %243 = vxpose.xlu0.b32.cont [5/16] 0, 128
    %244 = vxpose.xlu0.b32.cont [6/16] 0, 128
    %245 = vxpose.xlu0.b32.cont [7/16] 0, 128
    %246 = vxpose.xlu0.b32.cont [8/16] 0, 128
    %247 = vxpose.xlu0.b32.cont [9/16] 0, 128
    %248 = vxpose.xlu0.b32.cont [10/16] 0, 128
    %249 = vxpose.xlu0.b32.cont [11/16] 0, 128
    %250 = vxpose.xlu0.b32.cont [12/16] 0, 128
    %251 = vxpose.xlu0.b32.cont [13/16] 0, 128
    %252 = vxpose.xlu0.b32.cont [14/16] 0, 128
    %253 = vxpose.xlu0.b32.cont [15/16] 0, 128
    %254 = vxpose.xlu0.b32.end [16/16] 0, 128
    %v255 = vpop.trf.xlu0
    %v256 = vpop.trf.xlu0
    %v257 = vpop.trf.xlu0
    %v258 = vpop.trf.xlu0
    %v259 = vpop.trf.xlu0
    %v260 = vpop.trf.xlu0
    %v261 = vpop.trf.xlu0
    %v262 = vpop.trf.xlu0
    %v263 = vpop.trf.xlu0
    %v264 = vpop.trf.xlu0
    %v265 = vpop.trf.xlu0
    %v266 = vpop.trf.xlu0
    %v267 = vpop.trf.xlu0
    %v268 = vpop.trf.xlu0
    %v269 = vpop.trf.xlu0
    %v270 = vpop.trf.xlu0
    %271 = vst [vmem:[#allocation5] sm:$0x1] %v255
    %s273 = sshllo.u32 0, 1
    %v275 = vld [vmem:[#allocation2] sm:%s273]
    %s276 = sshllo.u32 0, 1
    %277 = vst [vmem:[#allocation3] sm:%s276] %v275
    %s279 = sshllo.u32 0, 1
    %v281 = vld [vmem:[#allocation5] sm:%s279]
    %s282 = sshllo.u32 0, 1
    %283 = vst [vmem:[#allocation6] sm:%s282] %v281
    %p285 = scmp.gt.s32.totalorder 16, 0
    // Predicated region
    $region38: #{custom-call.29} parent=1 // pred_check
      %p286 = pneg %p285
    $region39: #{custom-call.29} parent=1 // pred_check_branch
      %288 = sbr.rel (%p286) target = $region41
    $region40: #{custom-call.29} parent=1 // pred_region
      %s289 = sshra.s32 16, 3
      %p290 = scmp.gt.s32.totalorder %s289, 0
      // Predicated region
      $region42: #{custom-call.29} parent=40 // pred_check
        %p291 = pneg %p290
      $region43: #{custom-call.29} parent=40 // pred_check_branch
        %293 = sbr.rel (%p291) target = $region45
      $region44: #{custom-call.29} parent=40 // pred_region
        %s294 = ssub.s32 %s289, 1
        %s295 = smul.u32 %s294, 128
        %s296 = sshra.s32 %s295, 4
        %s297 = scalar_lea.vmem [#allocation1], %s296
        %v298 = vld [vmem:[#allocation1] sm:$0xff]
        // While loop
        $region46: #{custom-call.29} parent=44 // loop_pre_header
          _
        $region47: #{custom-call.29} parent=44 // loop_header
          %s299 = sphi [#allocation1], %s321
          %s300 = sphi %s1, %s322
          %v301 = vphi %v298, %v323
          %s302 = ssub.s32 %s297, 64
          %p303 = scmp.gt.s32.totalorder %s299, %s302
        $region48: #{custom-call.29} parent=44 // loop_header_branch
          %305 = sbr.rel (%p303) target = $region52
        $region49: #{custom-call.29} parent=44 // loop_body
          %306 = vst [vmem:[%s300] sm:$0xff] %v301
          %v307 = vld [vmem:[%s299 + $0x8] sm:$0xff]
          %308 = vst [vmem:[%s300 + $0x8] sm:$0xff] %v307
          %v309 = vld [vmem:[%s299 + $0x10] sm:$0xff]
          %310 = vst [vmem:[%s300 + $0x10] sm:$0xff] %v309
          %v311 = vld [vmem:[%s299 + $0x18] sm:$0xff]
          %312 = vst [vmem:[%s300 + $0x18] sm:$0xff] %v311
          %v313 = vld [vmem:[%s299 + $0x20] sm:$0xff]
          %314 = vst [vmem:[%s300 + $0x20] sm:$0xff] %v313
          %v315 = vld [vmem:[%s299 + $0x28] sm:$0xff]
          %316 = vst [vmem:[%s300 + $0x28] sm:$0xff] %v315
          %v317 = vld [vmem:[%s299 + $0x30] sm:$0xff]
          %318 = vst [vmem:[%s300 + $0x30] sm:$0xff] %v317
          %v319 = vld [vmem:[%s299 + $0x38] sm:$0xff]
          %320 = vst [vmem:[%s300 + $0x38] sm:$0xff] %v319
        $region50: #{custom-call.29} parent=44 // loop_footer
          %s321 = scalar_lea.vmem %s299, 64
          %s322 = scalar_lea.vmem %s300, 64
          %v323 = vld [vmem:[%s299 + $0x40] sm:$0xff]
        $region51: #{custom-call.29} parent=44 // loop_footer_branch
          %324 = sbr.rel target = $region47
        $region52: #{custom-call.29} parent=44 // loop_exit
          _
        // While loop
        $region53: #{custom-call.29} parent=44 // loop_pre_header
          _
        $region54: #{custom-call.29} parent=44 // loop_header
          %s325 = sphi %s299, %s333
          %s326 = sphi %s300, %s334
          %v327 = vphi %v301, %v327
          %p328 = scmp.gt.s32.totalorder %s325, %s297
        $region55: #{custom-call.29} parent=44 // loop_header_branch
          %330 = sbr.rel (%p328) target = $region59
        $region56: #{custom-call.29} parent=44 // loop_body
          %v331 = vld [vmem:[%s325] sm:$0xff]
          %332 = vst [vmem:[%s326] sm:$0xff] %v331
        $region57: #{custom-call.29} parent=44 // loop_footer
          %s333 = scalar_lea.vmem %s325, 8
          %s334 = scalar_lea.vmem %s326, 8
        $region58: #{custom-call.29} parent=44 // loop_footer_branch
          %335 = sbr.rel target = $region54
        $region59: #{custom-call.29} parent=44 // loop_exit
          _
      $region45: #{custom-call.29} parent=40 // pred_fallthru
        _
      %s336 = sand.u32 16, 7
      %s337 = sshllo.u32 0, %s336
      %s338 = smul.u32 %s289, 128
      %s339 = sshra.s32 %s338, 4
      %s340 = scalar_lea.vmem %s1, %s339
      %s341 = smul.u32 %s289, 128
      %s342 = sshra.s32 %s341, 4
      %s343 = scalar_lea.vmem [#allocation1], %s342
      %v344 = vld [vmem:[%s343] sm:%s337]
      %345 = vst [vmem:[%s340] sm:%s337] %v344
    $region41: #{custom-call.29} parent=1 // pred_fallthru
      _
    // Predicated region
    $region60: #{custom-call.29} parent=1 // pred_check
      _
    $region61: #{custom-call.29} parent=1 // pred_check_branch
      %347 = sbr.rel (0) target = $region63
    $region62: #{custom-call.29} parent=1 // pred_region
      %s349 = ssub.s32 16, 16
      %350 = vsyncadd [#allocation4], %s349
      %s351 = sshll.u32 [#allocation3], 4
      %s352 = int_to_ptr.vmem [resolvable:$true] %s351
      %354 = dma.vmem_to_hbm [thread:$0]  %s352, 16, %s2, [#allocation4]
    $region63: #{custom-call.29} parent=1 // pred_fallthru
      _
    // Predicated region
    $region64: #{custom-call.29} parent=1 // pred_check
      _
    $region65: #{custom-call.29} parent=1 // pred_check_branch
      %356 = sbr.rel (0) target = $region67
    $region66: #{custom-call.29} parent=1 // pred_region
      %p358 = scmp.gt.s32.totalorder 1, 0
      // Predicated region
      $region68: #{custom-call.29} parent=66 // pred_check
        %p359 = pneg %p358
      $region69: #{custom-call.29} parent=66 // pred_check_branch
        %361 = sbr.rel (%p359) target = $region71
      $region70: #{custom-call.29} parent=66 // pred_region
        %s362 = sshra.s32 1, 3
        %p363 = scmp.gt.s32.totalorder %s362, 0
        // Predicated region
        $region72: #{custom-call.29} parent=70 // pred_check
          %p364 = pneg %p363
        $region73: #{custom-call.29} parent=70 // pred_check_branch
          %366 = sbr.rel (%p364) target = $region75
        $region74: #{custom-call.29} parent=70 // pred_region
          %s367 = ssub.s32 %s362, 1
          %s368 = smul.u32 %s367, 128
          %s369 = sshra.s32 %s368, 4
          %s370 = scalar_lea.vmem [#allocation6], %s369
          %v371 = vld [vmem:[#allocation6] sm:$0xff]
          // While loop
          $region76: #{custom-call.29} parent=74 // loop_pre_header
            _
          $region77: #{custom-call.29} parent=74 // loop_header
            %s372 = sphi [#allocation6], %s394
            %s373 = sphi %s3, %s395
            %v374 = vphi %v371, %v396
            %s375 = ssub.s32 %s370, 64
            %p376 = scmp.gt.s32.totalorder %s372, %s375
          $region78: #{custom-call.29} parent=74 // loop_header_branch
            %378 = sbr.rel (%p376) target = $region82
          $region79: #{custom-call.29} parent=74 // loop_body
            %379 = vst [vmem:[%s373] sm:$0xff] %v374
            %v380 = vld [vmem:[%s372 + $0x8] sm:$0xff]
            %381 = vst [vmem:[%s373 + $0x8] sm:$0xff] %v380
            %v382 = vld [vmem:[%s372 + $0x10] sm:$0xff]
            %383 = vst [vmem:[%s373 + $0x10] sm:$0xff] %v382
            %v384 = vld [vmem:[%s372 + $0x18] sm:$0xff]
            %385 = vst [vmem:[%s373 + $0x18] sm:$0xff] %v384
            %v386 = vld [vmem:[%s372 + $0x20] sm:$0xff]
            %387 = vst [vmem:[%s373 + $0x20] sm:$0xff] %v386
            %v388 = vld [vmem:[%s372 + $0x28] sm:$0xff]
            %389 = vst [vmem:[%s373 + $0x28] sm:$0xff] %v388
            %v390 = vld [vmem:[%s372 + $0x30] sm:$0xff]
            %391 = vst [vmem:[%s373 + $0x30] sm:$0xff] %v390
            %v392 = vld [vmem:[%s372 + $0x38] sm:$0xff]
            %393 = vst [vmem:[%s373 + $0x38] sm:$0xff] %v392
          $region80: #{custom-call.29} parent=74 // loop_footer
            %s394 = scalar_lea.vmem %s372, 64
            %s395 = scalar_lea.vmem %s373, 64
            %v396 = vld [vmem:[%s372 + $0x40] sm:$0xff]
          $region81: #{custom-call.29} parent=74 // loop_footer_branch
            %397 = sbr.rel target = $region77
          $region82: #{custom-call.29} parent=74 // loop_exit
            _
          // While loop
          $region83: #{custom-call.29} parent=74 // loop_pre_header
            _
          $region84: #{custom-call.29} parent=74 // loop_header
            %s398 = sphi %s372, %s406
            %s399 = sphi %s373, %s407
            %v400 = vphi %v374, %v400
            %p401 = scmp.gt.s32.totalorder %s398, %s370
          $region85: #{custom-call.29} parent=74 // loop_header_branch
            %403 = sbr.rel (%p401) target = $region89
          $region86: #{custom-call.29} parent=74 // loop_body
            %v404 = vld [vmem:[%s398] sm:$0xff]
            %405 = vst [vmem:[%s399] sm:$0xff] %v404
          $region87: #{custom-call.29} parent=74 // loop_footer
            %s406 = scalar_lea.vmem %s398, 8
            %s407 = scalar_lea.vmem %s399, 8
          $region88: #{custom-call.29} parent=74 // loop_footer_branch
            %408 = sbr.rel target = $region84
          $region89: #{custom-call.29} parent=74 // loop_exit
            _
        $region75: #{custom-call.29} parent=70 // pred_fallthru
          _
        %s409 = sand.u32 1, 7
        %s410 = sshllo.u32 0, %s409
        %s411 = smul.u32 %s362, 128
        %s412 = sshra.s32 %s411, 4
        %s413 = scalar_lea.vmem %s3, %s412
        %s414 = smul.u32 %s362, 128
        %s415 = sshra.s32 %s414, 4
        %s416 = scalar_lea.vmem [#allocation6], %s415
        %v417 = vld [vmem:[%s416] sm:%s410]
        %418 = vst [vmem:[%s413] sm:%s410] %v417
      $region71: #{custom-call.29} parent=66 // pred_fallthru
        _
    $region67: #{custom-call.29} parent=1 // pred_fallthru
      _
    // Predicated region
    $region90: #{custom-call.29} parent=1 // pred_check
      _
    $region91: #{custom-call.29} parent=1 // pred_check_branch
      %420 = sbr.rel (0) target = $region93
    $region92: #{custom-call.29} parent=1 // pred_region
      %421 = dma.done [#allocation4], 16
    $region93: #{custom-call.29} parent=1 // pred_fallthru
      _
    // Predicated region
    $region94: #{custom-call.29} parent=1 // pred_check
      _
    $region95: #{custom-call.29} parent=1 // pred_check_branch
      %423 = sbr.rel (0) target = $region97
    $region96: #{custom-call.29} parent=1 // pred_region
      _
    $region97: #{custom-call.29} parent=1 // pred_fallthru
      _
    %424 = vsyncpa [#allocation4], 1

// kernel: custom-call.31
$region0: #{custom-call.31}
  %s0 = inlined_call_operand.vmem [shape: f32[1,16,16], index: 0, kind: input, shape index: {}]
  %s1 = inlined_call_operand.vmem [shape: f32[1,16,16], index: 1, kind: output, shape index: {}]
  $region1: #{custom-call.31} parent=0
    #allocation0 [shape = 'u8[8192]{0}', space=vmem, size = 0x2000, scoped, tag = 'operand span for operand 0']
    #allocation1 [shape = 'u8[8192]{0}', space=vmem, size = 0x2000, scoped, tag = 'operand span for operand 1']
    #allocation2 [shape = 'f32[16,16]{1,0}', space=vmem, size = 0x2000, scoped, tag = 'rescaled input a']
    // Predicated region
    $region2: #{custom-call.31} parent=1 // pred_check
      _
    $region3: #{custom-call.31} parent=1 // pred_check_branch
      %3 = sbr.rel (0) target = $region5
    $region4: #{custom-call.31} parent=1 // pred_region
      // Predicated region
      $region6: #{custom-call.31} parent=4 // pred_check
        _
      $region7: #{custom-call.31} parent=4 // pred_check_branch
        %5 = sbr.rel (0) target = $region9
      $region8: #{custom-call.31} parent=4 // pred_region
        // Predicated region
        $region21: #{custom-call.31} parent=8 // pred_check
          _
        $region22: #{custom-call.31} parent=8 // pred_check_branch
          %22 = sbr.rel (0) target = $region24
        $region23: #{custom-call.31} parent=8 // pred_region
          loop: start=0, step=1, limit=1
          $region25: #{custom-call.31} parent=23 // loop_pre_header
            _
          $region26: #{custom-call.31} parent=23 // loop_header
            %s24 = sphi 0, %s28
            %p25 = scmp.ge.s32.totalorder %s24, 1
            %s29 = sphi %s0, %s0
            %s30 = sphi [#allocation0], [#allocation0]
          $region27: #{custom-call.31} parent=23 // loop_header_branch
            %27 = sbr.rel (%p25) target = $region31
          $region28: #{custom-call.31} parent=23 // loop_body
            %v31 = vld [vmem:[%s29] sm:$0xff]
            %32 = vst [vmem:[%s30] sm:$0xff] %v31
            %v33 = vld [vmem:[%s29 + $0x8] sm:$0xff]
            %34 = vst [vmem:[%s30 + $0x8] sm:$0xff] %v33
          $region29: #{custom-call.31} parent=23 // loop_footer
            %s28 = sadd.s32 1, %s24
          $region30: #{custom-call.31} parent=23 // loop_footer_branch
            %23 = sbr.rel target = $region26
          $region31: #{custom-call.31} parent=23 // loop_exit
            _
        $region24: #{custom-call.31} parent=8 // pred_fallthru
          _
        // Predicated region
        $region32: #{custom-call.31} parent=8 // pred_check
          _
        $region33: #{custom-call.31} parent=8 // pred_check_branch
          %36 = sbr.rel target = $region35
        $region34: #{custom-call.31} parent=8 // pred_region
          _
        $region35: #{custom-call.31} parent=8 // pred_fallthru
          _
      $region9: #{custom-call.31} parent=4 // pred_fallthru
        _
      // Predicated region
      $region10: #{custom-call.31} parent=4 // pred_check
        _
      $region11: #{custom-call.31} parent=4 // pred_check_branch
        %7 = sbr.rel target = $region13
      $region12: #{custom-call.31} parent=4 // pred_region
        loop: start=0, step=1, limit=1
        $region14: #{custom-call.31} parent=12 // loop_pre_header
          _
        $region15: #{custom-call.31} parent=12 // loop_header
          %s10 = sphi 0, %s14
          %p11 = scmp.ge.s32.totalorder %s10, 1
          %s15 = sphi %s0, %s0
          %s16 = sphi [#allocation0], [#allocation0]
        $region16: #{custom-call.31} parent=12 // loop_header_branch
          %13 = sbr.rel (%p11) target = $region20
        $region17: #{custom-call.31} parent=12 // loop_body
          %v17 = vld [vmem:[%s15] sm:$0xff]
          %18 = vst [vmem:[%s16] sm:$0xff] %v17
          %v19 = vld [vmem:[%s15 + $0x8] sm:$0xff]
          %20 = vst [vmem:[%s16 + $0x8] sm:$0xff] %v19
        $region18: #{custom-call.31} parent=12 // loop_footer
          %s14 = sadd.s32 1, %s10
        $region19: #{custom-call.31} parent=12 // loop_footer_branch
          %9 = sbr.rel target = $region15
        $region20: #{custom-call.31} parent=12 // loop_exit
          _
      $region13: #{custom-call.31} parent=4 // pred_fallthru
        _
    $region5: #{custom-call.31} parent=1 // pred_fallthru
      _
    %37 = vnop
    %v38 = vlaneseq
    %v39 = vand.u32 %v38, 127
    %vm40 = vcmp.lt.s32.totalorder %v39, 16
    %v41 = vlaneseq
    %v42 = vshrl.u32 %v41, 7
    %vm44 = vcmp.eq.s32.totalorder %v42, %v39
    %v45 = vld [vmem:[#allocation0] sm:$0xff]
    %v46 = vsel %vm44, %v45, 0.0
    %47 = vadd.xlane.f32.xlu0 %v46
    %v48 = vpop.xlane.xlu0 %47
    %vm49 = vcmp.ge.s32.totalorder %v42, %v39
    %vm50 = vmand %vm49, %vm40
    %v51 = vsel %vm50, %v45, 0.0
    %v52 = vrcp.pop %v48
    %v53 = vmul.f32 %v51, %v52
    %54 = vst [vmem:[#allocation2] sm:$0xff] %v53
    %s55 = scalar_lea.vmem [#allocation0], 8
    %s56 = scalar_lea.vmem [#allocation2], 8
    %v57 = vlaneseq
    %v58 = vshrl.u32 %v57, 7
    %v59 = vadd.s32 %v58, 8
    %vm60 = vcmp.eq.s32.totalorder %v59, %v39
    %v61 = vld [vmem:[%s55] sm:$0xff]
    %v62 = vsel %vm60, %v61, 0.0
    %63 = vadd.xlane.f32.xlu0 %v62
    %v64 = vpop.xlane.xlu0 %63
    %vm65 = vcmp.ge.s32.totalorder %v59, %v39
    %vm66 = vmand %vm65, %vm40
    %v67 = vsel %vm66, %v61, 0.0
    %v68 = vrcp.pop %v64
    %v69 = vmul.f32 %v67, %v68
    %70 = vst [vmem:[%s56] sm:$0xff] %v69
    %v71 = vlaneseq
    %v72 = vand.u32 %v71, 127
    %v73 = vlaneseq
    %v74 = vshrl.u32 %v73, 7
    %vm76 = vcmp.eq.s32.totalorder %v72, %v74
    %v77 = vlaneseq
    %v78 = vand.u32 %v77, 127
    %vm79 = vcmp.eq.s32.totalorder %v78, 0
    %v80 = vsel %vm79, 1.0, -1.0
    %v81 = vsel %vm76, %v80, 0.0
    %v82 = vlaneseq
    %v83 = vand.u32 %v82, 127
    %v84 = vlaneseq
    %v85 = vshrl.u32 %v84, 7
    %v86 = vadd.s32 %v85, 8
    %vm87 = vcmp.eq.s32.totalorder %v83, %v86
    %v88 = vsel %vm87, -1.0, 0.0
    %s89 = scalar_lea.vmem [#allocation2], 1
    %v90 = vld [vmem:[%s89] ss:$0 sm:$0xff]
    %v91 = vxor.u32 %v90, 2147483648
    %v92 = vlaneseq
    %v93 = vand.u32 %v92, 127
    %vm94 = vcmp.eq.s32.totalorder %v93, 1
    %v95 = vmul.f32 %v91, %v81
    %96 = vadd.xlane.f32.xlu0 %v95
    %v97 = vpop.xlane.xlu0 %96
    %v98 = vsel %vm94, %v97, %v81
    %s99 = scalar_lea.vmem [#allocation2], 2
    %v100 = vld [vmem:[%s99] ss:$0 sm:$0xff]
    %v101 = vxor.u32 %v100, 2147483648
    %v102 = vlaneseq
    %v103 = vand.u32 %v102, 127
    %vm104 = vcmp.eq.s32.totalorder %v103, 2
    %v105 = vmul.f32 %v101, %v98
    %106 = vadd.xlane.f32.xlu0 %v105
    %v107 = vpop.xlane.xlu0 %106
    %v108 = vsel %vm104, %v107, %v98
    %s109 = scalar_lea.vmem [#allocation2], 3
    %v110 = vld [vmem:[%s109] ss:$0 sm:$0xff]
    %v111 = vxor.u32 %v110, 2147483648
    %v112 = vlaneseq
    %v113 = vand.u32 %v112, 127
    %vm114 = vcmp.eq.s32.totalorder %v113, 3
    %v115 = vmul.f32 %v111, %v108
    %116 = vadd.xlane.f32.xlu0 %v115
    %v117 = vpop.xlane.xlu0 %116
    %v118 = vsel %vm114, %v117, %v108
    %s119 = scalar_lea.vmem [#allocation2], 4
    %v120 = vld [vmem:[%s119] ss:$0 sm:$0xff]
    %v121 = vxor.u32 %v120, 2147483648
    %v122 = vlaneseq
    %v123 = vand.u32 %v122, 127
    %vm124 = vcmp.eq.s32.totalorder %v123, 4
    %v125 = vmul.f32 %v121, %v118
    %126 = vadd.xlane.f32.xlu0 %v125
    %v127 = vpop.xlane.xlu0 %126
    %v128 = vsel %vm124, %v127, %v118
    %s129 = scalar_lea.vmem [#allocation2], 5
    %v130 = vld [vmem:[%s129] ss:$0 sm:$0xff]
    %v131 = vxor.u32 %v130, 2147483648
    %v132 = vlaneseq
    %v133 = vand.u32 %v132, 127
    %vm134 = vcmp.eq.s32.totalorder %v133, 5
    %v135 = vmul.f32 %v131, %v128
    %136 = vadd.xlane.f32.xlu0 %v135
    %v137 = vpop.xlane.xlu0 %136
    %v138 = vsel %vm134, %v137, %v128
    %s139 = scalar_lea.vmem [#allocation2], 6
    %v140 = vld [vmem:[%s139] ss:$0 sm:$0xff]
    %v141 = vxor.u32 %v140, 2147483648
    %v142 = vlaneseq
    %v143 = vand.u32 %v142, 127
    %vm144 = vcmp.eq.s32.totalorder %v143, 6
    %v145 = vmul.f32 %v141, %v138
    %146 = vadd.xlane.f32.xlu0 %v145
    %v147 = vpop.xlane.xlu0 %146
    %v148 = vsel %vm144, %v147, %v138
    %s149 = scalar_lea.vmem [#allocation2], 7
    %v150 = vld [vmem:[%s149] ss:$0 sm:$0xff]
    %v151 = vxor.u32 %v150, 2147483648
    %v152 = vlaneseq
    %v153 = vand.u32 %v152, 127
    %vm154 = vcmp.eq.s32.totalorder %v153, 7
    %v155 = vmul.f32 %v151, %v148
    %156 = vadd.xlane.f32.xlu0 %v155
    %v157 = vpop.xlane.xlu0 %156
    %v158 = vsel %vm154, %v157, %v148
    %s159 = scalar_lea.vmem [#allocation2], 8
    %v160 = vld [vmem:[%s159] ss:$0 sm:$0xff]
    %v161 = vxor.u32 %v160, 2147483648
    %v162 = vlaneseq
    %v163 = vand.u32 %v162, 127
    %vm164 = vcmp.eq.s32.totalorder %v163, 8
    %v165 = vmul.f32 %v161, %v158
    %166 = vadd.xlane.f32.xlu0 %v165
    %v167 = vpop.xlane.xlu0 %166
    %v168 = vsel %vm164, %v167, %v158
    %v169 = vmul.f32 %v161, %v88
    %170 = vadd.xlane.f32.xlu0 %v169
    %v171 = vpop.xlane.xlu0 %170
    %v172 = vsel %vm164, %v171, %v88
    %s173 = scalar_lea.vmem [#allocation2], 9
    %v174 = vld [vmem:[%s173] ss:$0 sm:$0xff]
    %v175 = vxor.u32 %v174, 2147483648
    %v176 = vlaneseq
    %v177 = vand.u32 %v176, 127
    %vm178 = vcmp.eq.s32.totalorder %v177, 9
    %v179 = vmul.f32 %v175, %v168
    %180 = vadd.xlane.f32.xlu0 %v179
    %v181 = vpop.xlane.xlu0 %180
    %v182 = vsel %vm178, %v181, %v168
    %v183 = vmul.f32 %v175, %v172
    %184 = vadd.xlane.f32.xlu0 %v183
    %v185 = vpop.xlane.xlu0 %184
    %v186 = vsel %vm178, %v185, %v172
    %s187 = scalar_lea.vmem [#allocation2], 10
    %v188 = vld [vmem:[%s187] ss:$0 sm:$0xff]
    %v189 = vxor.u32 %v188, 2147483648
    %v190 = vlaneseq
    %v191 = vand.u32 %v190, 127
    %vm192 = vcmp.eq.s32.totalorder %v191, 10
    %v193 = vmul.f32 %v189, %v182
    %194 = vadd.xlane.f32.xlu0 %v193
    %v195 = vpop.xlane.xlu0 %194
    %v196 = vsel %vm192, %v195, %v182
    %v197 = vmul.f32 %v189, %v186
    %198 = vadd.xlane.f32.xlu0 %v197
    %v199 = vpop.xlane.xlu0 %198
    %v200 = vsel %vm192, %v199, %v186
    %s201 = scalar_lea.vmem [#allocation2], 11
    %v202 = vld [vmem:[%s201] ss:$0 sm:$0xff]
    %v203 = vxor.u32 %v202, 2147483648
    %v204 = vlaneseq
    %v205 = vand.u32 %v204, 127
    %vm206 = vcmp.eq.s32.totalorder %v205, 11
    %v207 = vmul.f32 %v203, %v196
    %208 = vadd.xlane.f32.xlu0 %v207
    %v209 = vpop.xlane.xlu0 %208
    %v210 = vsel %vm206, %v209, %v196
    %v211 = vmul.f32 %v203, %v200
    %212 = vadd.xlane.f32.xlu0 %v211
    %v213 = vpop.xlane.xlu0 %212
    %v214 = vsel %vm206, %v213, %v200
    %s215 = scalar_lea.vmem [#allocation2], 12
    %v216 = vld [vmem:[%s215] ss:$0 sm:$0xff]
    %v217 = vxor.u32 %v216, 2147483648
    %v218 = vlaneseq
    %v219 = vand.u32 %v218, 127
    %vm220 = vcmp.eq.s32.totalorder %v219, 12
    %v221 = vmul.f32 %v217, %v210
    %222 = vadd.xlane.f32.xlu0 %v221
    %v223 = vpop.xlane.xlu0 %222
    %v224 = vsel %vm220, %v223, %v210
    %v225 = vmul.f32 %v217, %v214
    %226 = vadd.xlane.f32.xlu0 %v225
    %v227 = vpop.xlane.xlu0 %226
    %v228 = vsel %vm220, %v227, %v214
    %s229 = scalar_lea.vmem [#allocation2], 13
    %v230 = vld [vmem:[%s229] ss:$0 sm:$0xff]
    %v231 = vxor.u32 %v230, 2147483648
    %v232 = vlaneseq
    %v233 = vand.u32 %v232, 127
    %vm234 = vcmp.eq.s32.totalorder %v233, 13
    %v235 = vmul.f32 %v231, %v224
    %236 = vadd.xlane.f32.xlu0 %v235
    %v237 = vpop.xlane.xlu0 %236
    %v238 = vsel %vm234, %v237, %v224
    %v239 = vmul.f32 %v231, %v228
    %240 = vadd.xlane.f32.xlu0 %v239
    %v241 = vpop.xlane.xlu0 %240
    %v242 = vsel %vm234, %v241, %v228
    %s243 = scalar_lea.vmem [#allocation2], 14
    %v244 = vld [vmem:[%s243] ss:$0 sm:$0xff]
    %v245 = vxor.u32 %v244, 2147483648
    %v246 = vlaneseq
    %v247 = vand.u32 %v246, 127
    %vm248 = vcmp.eq.s32.totalorder %v247, 14
    %v249 = vmul.f32 %v245, %v238
    %250 = vadd.xlane.f32.xlu0 %v249
    %v251 = vpop.xlane.xlu0 %250
    %v252 = vsel %vm248, %v251, %v238
    %v253 = vmul.f32 %v245, %v242
    %254 = vadd.xlane.f32.xlu0 %v253
    %v255 = vpop.xlane.xlu0 %254
    %v256 = vsel %vm248, %v255, %v242
    %s257 = scalar_lea.vmem [#allocation2], 15
    %v258 = vld [vmem:[%s257] ss:$0 sm:$0xff]
    %v259 = vxor.u32 %v258, 2147483648
    %v260 = vlaneseq
    %v261 = vand.u32 %v260, 127
    %vm262 = vcmp.eq.s32.totalorder %v261, 15
    %v263 = vmul.f32 %v259, %v252
    %264 = vadd.xlane.f32.xlu0 %v263
    %v265 = vpop.xlane.xlu0 %264
    %v266 = vsel %vm262, %v265, %v252
    %v267 = vmul.f32 %v259, %v256
    %268 = vadd.xlane.f32.xlu0 %v267
    %v269 = vpop.xlane.xlu0 %268
    %v270 = vsel %vm262, %v269, %v256
    %v271 = vrcp.pop %v48
    %v272 = vmul.f32 %v266, %v271
    %vm273 = vweird.f32 %v48
    %v274 = vsel %vm273, %v266, %v272
    %275 = vst [vmem:[#allocation1] sm:$0xff] %v274
    %v276 = vrcp.pop %v64
    %v277 = vmul.f32 %v270, %v276
    %vm278 = vweird.f32 %v64
    %v279 = vsel %vm278, %v270, %v277
    %s280 = scalar_lea.vmem [#allocation1], 8
    %281 = vst [vmem:[%s280] sm:$0xff] %v279
    // Predicated region
    $region36: #{custom-call.31} parent=1 // pred_check
      _
    $region37: #{custom-call.31} parent=1 // pred_check_branch
      %283 = sbr.rel (0) target = $region39
    $region38: #{custom-call.31} parent=1 // pred_region
      // Predicated region
      $region40: #{custom-call.31} parent=38 // pred_check
        _
      $region41: #{custom-call.31} parent=38 // pred_check_branch
        %285 = sbr.rel (0) target = $region43
      $region42: #{custom-call.31} parent=38 // pred_region
        // Predicated region
        $region55: #{custom-call.31} parent=42 // pred_check
          _
        $region56: #{custom-call.31} parent=42 // pred_check_branch
          %302 = sbr.rel (0) target = $region58
        $region57: #{custom-call.31} parent=42 // pred_region
          loop: start=0, step=1, limit=1
          $region59: #{custom-call.31} parent=57 // loop_pre_header
            _
          $region60: #{custom-call.31} parent=57 // loop_header
            %s304 = sphi 0, %s308
            %p305 = scmp.ge.s32.totalorder %s304, 1
            %s309 = sphi [#allocation1], [#allocation1]
            %s310 = sphi %s1, %s1
          $region61: #{custom-call.31} parent=57 // loop_header_branch
            %307 = sbr.rel (%p305) target = $region65
          $region62: #{custom-call.31} parent=57 // loop_body
            %v311 = vld [vmem:[%s309] sm:$0xff]
            %312 = vst [vmem:[%s310] sm:$0xff] %v311
            %v313 = vld [vmem:[%s309 + $0x8] sm:$0xff]
            %314 = vst [vmem:[%s310 + $0x8] sm:$0xff] %v313
          $region63: #{custom-call.31} parent=57 // loop_footer
            %s308 = sadd.s32 1, %s304
          $region64: #{custom-call.31} parent=57 // loop_footer_branch
            %303 = sbr.rel target = $region60
          $region65: #{custom-call.31} parent=57 // loop_exit
            _
        $region58: #{custom-call.31} parent=42 // pred_fallthru
          _
        // Predicated region
        $region66: #{custom-call.31} parent=42 // pred_check
          _
        $region67: #{custom-call.31} parent=42 // pred_check_branch
          %316 = sbr.rel target = $region69
        $region68: #{custom-call.31} parent=42 // pred_region
          _
        $region69: #{custom-call.31} parent=42 // pred_fallthru
          _
      $region43: #{custom-call.31} parent=38 // pred_fallthru
        _
      // Predicated region
      $region44: #{custom-call.31} parent=38 // pred_check
        _
      $region45: #{custom-call.31} parent=38 // pred_check_branch
        %287 = sbr.rel target = $region47
      $region46: #{custom-call.31} parent=38 // pred_region
        loop: start=0, step=1, limit=1
        $region48: #{custom-call.31} parent=46 // loop_pre_header
          _
        $region49: #{custom-call.31} parent=46 // loop_header
          %s290 = sphi 0, %s294
          %p291 = scmp.ge.s32.totalorder %s290, 1
          %s295 = sphi [#allocation1], [#allocation1]
          %s296 = sphi %s1, %s1
        $region50: #{custom-call.31} parent=46 // loop_header_branch
          %293 = sbr.rel (%p291) target = $region54
        $region51: #{custom-call.31} parent=46 // loop_body
          %v297 = vld [vmem:[%s295] sm:$0xff]
          %298 = vst [vmem:[%s296] sm:$0xff] %v297
          %v299 = vld [vmem:[%s295 + $0x8] sm:$0xff]
          %300 = vst [vmem:[%s296 + $0x8] sm:$0xff] %v299
        $region52: #{custom-call.31} parent=46 // loop_footer
          %s294 = sadd.s32 1, %s290
        $region53: #{custom-call.31} parent=46 // loop_footer_branch
          %289 = sbr.rel target = $region49
        $region54: #{custom-call.31} parent=46 // loop_exit
          _
      $region47: #{custom-call.31} parent=38 // pred_fallthru
        _
    $region39: #{custom-call.31} parent=1 // pred_fallthru
      _
    %317 = vnop

// kernel: custom-call.30
$region0: #{custom-call.30}
  %s0 = inlined_call_operand.vmem [shape: f32[1,16,16], index: 0, kind: input, shape index: {}]
  %s1 = inlined_call_operand.vmem [shape: f32[1,16,16], index: 1, kind: output, shape index: {}]
  $region1: #{custom-call.30} parent=0
    #allocation0 [shape = 'u8[8192]{0}', space=vmem, size = 0x2000, scoped, tag = 'operand span for operand 0']
    #allocation1 [shape = 'u8[8192]{0}', space=vmem, size = 0x2000, scoped, tag = 'operand span for operand 1']
    #allocation2 [shape = 'f32[16,16]{1,0}', space=vmem, size = 0x2000, scoped, tag = 'rescaled input a']
    // Predicated region
    $region2: #{custom-call.30} parent=1 // pred_check
      _
    $region3: #{custom-call.30} parent=1 // pred_check_branch
      %3 = sbr.rel (0) target = $region5
    $region4: #{custom-call.30} parent=1 // pred_region
      // Predicated region
      $region6: #{custom-call.30} parent=4 // pred_check
        _
      $region7: #{custom-call.30} parent=4 // pred_check_branch
        %5 = sbr.rel (0) target = $region9
      $region8: #{custom-call.30} parent=4 // pred_region
        // Predicated region
        $region21: #{custom-call.30} parent=8 // pred_check
          _
        $region22: #{custom-call.30} parent=8 // pred_check_branch
          %22 = sbr.rel (0) target = $region24
        $region23: #{custom-call.30} parent=8 // pred_region
          loop: start=0, step=1, limit=1
          $region25: #{custom-call.30} parent=23 // loop_pre_header
            _
          $region26: #{custom-call.30} parent=23 // loop_header
            %s24 = sphi 0, %s28
            %p25 = scmp.ge.s32.totalorder %s24, 1
            %s29 = sphi %s0, %s0
            %s30 = sphi [#allocation0], [#allocation0]
          $region27: #{custom-call.30} parent=23 // loop_header_branch
            %27 = sbr.rel (%p25) target = $region31
          $region28: #{custom-call.30} parent=23 // loop_body
            %v31 = vld [vmem:[%s29] sm:$0xff]
            %32 = vst [vmem:[%s30] sm:$0xff] %v31
            %v33 = vld [vmem:[%s29 + $0x8] sm:$0xff]
            %34 = vst [vmem:[%s30 + $0x8] sm:$0xff] %v33
          $region29: #{custom-call.30} parent=23 // loop_footer
            %s28 = sadd.s32 1, %s24
          $region30: #{custom-call.30} parent=23 // loop_footer_branch
            %23 = sbr.rel target = $region26
          $region31: #{custom-call.30} parent=23 // loop_exit
            _
        $region24: #{custom-call.30} parent=8 // pred_fallthru
          _
        // Predicated region
        $region32: #{custom-call.30} parent=8 // pred_check
          _
        $region33: #{custom-call.30} parent=8 // pred_check_branch
          %36 = sbr.rel target = $region35
        $region34: #{custom-call.30} parent=8 // pred_region
          _
        $region35: #{custom-call.30} parent=8 // pred_fallthru
          _
      $region9: #{custom-call.30} parent=4 // pred_fallthru
        _
      // Predicated region
      $region10: #{custom-call.30} parent=4 // pred_check
        _
      $region11: #{custom-call.30} parent=4 // pred_check_branch
        %7 = sbr.rel target = $region13
      $region12: #{custom-call.30} parent=4 // pred_region
        loop: start=0, step=1, limit=1
        $region14: #{custom-call.30} parent=12 // loop_pre_header
          _
        $region15: #{custom-call.30} parent=12 // loop_header
          %s10 = sphi 0, %s14
          %p11 = scmp.ge.s32.totalorder %s10, 1
          %s15 = sphi %s0, %s0
          %s16 = sphi [#allocation0], [#allocation0]
        $region16: #{custom-call.30} parent=12 // loop_header_branch
          %13 = sbr.rel (%p11) target = $region20
        $region17: #{custom-call.30} parent=12 // loop_body
          %v17 = vld [vmem:[%s15] sm:$0xff]
          %18 = vst [vmem:[%s16] sm:$0xff] %v17
          %v19 = vld [vmem:[%s15 + $0x8] sm:$0xff]
          %20 = vst [vmem:[%s16 + $0x8] sm:$0xff] %v19
        $region18: #{custom-call.30} parent=12 // loop_footer
          %s14 = sadd.s32 1, %s10
        $region19: #{custom-call.30} parent=12 // loop_footer_branch
          %9 = sbr.rel target = $region15
        $region20: #{custom-call.30} parent=12 // loop_exit
          _
      $region13: #{custom-call.30} parent=4 // pred_fallthru
        _
    $region5: #{custom-call.30} parent=1 // pred_fallthru
      _
    %37 = vnop
    %v38 = vlaneseq
    %v39 = vand.u32 %v38, 127
    %vm40 = vcmp.lt.s32.totalorder %v39, 16
    %v41 = vlaneseq
    %v42 = vshrl.u32 %v41, 7
    %vm44 = vcmp.eq.s32.totalorder %v42, %v39
    %v45 = vld [vmem:[#allocation0] sm:$0xff]
    %v46 = vsel %vm44, %v45, 0.0
    %47 = vadd.xlane.f32.xlu0 %v46
    %v48 = vpop.xlane.xlu0 %47
    %vm49 = vcmp.le.s32.totalorder %v42, %v39
    %vm50 = vmand %vm49, %vm40
    %v51 = vsel %vm50, %v45, 0.0
    %v52 = vrcp.pop %v48
    %v53 = vmul.f32 %v51, %v52
    %54 = vst [vmem:[#allocation2] sm:$0xff] %v53
    %s55 = scalar_lea.vmem [#allocation0], 8
    %s56 = scalar_lea.vmem [#allocation2], 8
    %v57 = vlaneseq
    %v58 = vshrl.u32 %v57, 7
    %v59 = vadd.s32 %v58, 8
    %vm60 = vcmp.eq.s32.totalorder %v59, %v39
    %v61 = vld [vmem:[%s55] sm:$0xff]
    %v62 = vsel %vm60, %v61, 0.0
    %63 = vadd.xlane.f32.xlu0 %v62
    %v64 = vpop.xlane.xlu0 %63
    %vm65 = vcmp.le.s32.totalorder %v59, %v39
    %vm66 = vmand %vm65, %vm40
    %v67 = vsel %vm66, %v61, 0.0
    %v68 = vrcp.pop %v64
    %v69 = vmul.f32 %v67, %v68
    %70 = vst [vmem:[%s56] sm:$0xff] %v69
    %v71 = vlaneseq
    %v72 = vand.u32 %v71, 127
    %v73 = vlaneseq
    %v74 = vshrl.u32 %v73, 7
    %vm76 = vcmp.eq.s32.totalorder %v72, %v74
    %v77 = vsel %vm76, -1.0, 0.0
    %v78 = vlaneseq
    %v79 = vand.u32 %v78, 127
    %v80 = vlaneseq
    %v81 = vshrl.u32 %v80, 7
    %v82 = vadd.s32 %v81, 8
    %vm83 = vcmp.eq.s32.totalorder %v79, %v82
    %v84 = vlaneseq
    %v85 = vand.u32 %v84, 127
    %vm86 = vcmp.eq.s32.totalorder %v85, 15
    %v87 = vsel %vm86, 1.0, -1.0
    %v88 = vsel %vm83, %v87, 0.0
    %s89 = scalar_lea.vmem [#allocation2], 14
    %v90 = vld [vmem:[%s89] ss:$0 sm:$0xff]
    %v91 = vxor.u32 %v90, 2147483648
    %v92 = vlaneseq
    %v93 = vand.u32 %v92, 127
    %vm94 = vcmp.eq.s32.totalorder %v93, 14
    %v95 = vmul.f32 %v91, %v88
    %96 = vadd.xlane.f32.xlu0 %v95
    %v97 = vpop.xlane.xlu0 %96
    %v98 = vsel %vm94, %v97, %v88
    %s99 = scalar_lea.vmem [#allocation2], 13
    %v100 = vld [vmem:[%s99] ss:$0 sm:$0xff]
    %v101 = vxor.u32 %v100, 2147483648
    %v102 = vlaneseq
    %v103 = vand.u32 %v102, 127
    %vm104 = vcmp.eq.s32.totalorder %v103, 13
    %v105 = vmul.f32 %v101, %v98
    %106 = vadd.xlane.f32.xlu0 %v105
    %v107 = vpop.xlane.xlu0 %106
    %v108 = vsel %vm104, %v107, %v98
    %s109 = scalar_lea.vmem [#allocation2], 12
    %v110 = vld [vmem:[%s109] ss:$0 sm:$0xff]
    %v111 = vxor.u32 %v110, 2147483648
    %v112 = vlaneseq
    %v113 = vand.u32 %v112, 127
    %vm114 = vcmp.eq.s32.totalorder %v113, 12
    %v115 = vmul.f32 %v111, %v108
    %116 = vadd.xlane.f32.xlu0 %v115
    %v117 = vpop.xlane.xlu0 %116
    %v118 = vsel %vm114, %v117, %v108
    %s119 = scalar_lea.vmem [#allocation2], 11
    %v120 = vld [vmem:[%s119] ss:$0 sm:$0xff]
    %v121 = vxor.u32 %v120, 2147483648
    %v122 = vlaneseq
    %v123 = vand.u32 %v122, 127
    %vm124 = vcmp.eq.s32.totalorder %v123, 11
    %v125 = vmul.f32 %v121, %v118
    %126 = vadd.xlane.f32.xlu0 %v125
    %v127 = vpop.xlane.xlu0 %126
    %v128 = vsel %vm124, %v127, %v118
    %s129 = scalar_lea.vmem [#allocation2], 10
    %v130 = vld [vmem:[%s129] ss:$0 sm:$0xff]
    %v131 = vxor.u32 %v130, 2147483648
    %v132 = vlaneseq
    %v133 = vand.u32 %v132, 127
    %vm134 = vcmp.eq.s32.totalorder %v133, 10
    %v135 = vmul.f32 %v131, %v128
    %136 = vadd.xlane.f32.xlu0 %v135
    %v137 = vpop.xlane.xlu0 %136
    %v138 = vsel %vm134, %v137, %v128
    %s139 = scalar_lea.vmem [#allocation2], 9
    %v140 = vld [vmem:[%s139] ss:$0 sm:$0xff]
    %v141 = vxor.u32 %v140, 2147483648
    %v142 = vlaneseq
    %v143 = vand.u32 %v142, 127
    %vm144 = vcmp.eq.s32.totalorder %v143, 9
    %v145 = vmul.f32 %v141, %v138
    %146 = vadd.xlane.f32.xlu0 %v145
    %v147 = vpop.xlane.xlu0 %146
    %v148 = vsel %vm144, %v147, %v138
    %s149 = scalar_lea.vmem [#allocation2], 8
    %v150 = vld [vmem:[%s149] ss:$0 sm:$0xff]
    %v151 = vxor.u32 %v150, 2147483648
    %v152 = vlaneseq
    %v153 = vand.u32 %v152, 127
    %vm154 = vcmp.eq.s32.totalorder %v153, 8
    %v155 = vmul.f32 %v151, %v148
    %156 = vadd.xlane.f32.xlu0 %v155
    %v157 = vpop.xlane.xlu0 %156
    %v158 = vsel %vm154, %v157, %v148
    %s159 = scalar_lea.vmem [#allocation2], 7
    %v160 = vld [vmem:[%s159] ss:$0 sm:$0xff]
    %v161 = vxor.u32 %v160, 2147483648
    %v162 = vlaneseq
    %v163 = vand.u32 %v162, 127
    %vm164 = vcmp.eq.s32.totalorder %v163, 7
    %v165 = vmul.f32 %v161, %v77
    %166 = vadd.xlane.f32.xlu0 %v165
    %v167 = vpop.xlane.xlu0 %166
    %v168 = vsel %vm164, %v167, %v77
    %v169 = vmul.f32 %v161, %v158
    %170 = vadd.xlane.f32.xlu0 %v169
    %v171 = vpop.xlane.xlu0 %170
    %v172 = vsel %vm164, %v171, %v158
    %s173 = scalar_lea.vmem [#allocation2], 6
    %v174 = vld [vmem:[%s173] ss:$0 sm:$0xff]
    %v175 = vxor.u32 %v174, 2147483648
    %v176 = vlaneseq
    %v177 = vand.u32 %v176, 127
    %vm178 = vcmp.eq.s32.totalorder %v177, 6
    %v179 = vmul.f32 %v175, %v168
    %180 = vadd.xlane.f32.xlu0 %v179
    %v181 = vpop.xlane.xlu0 %180
    %v182 = vsel %vm178, %v181, %v168
    %v183 = vmul.f32 %v175, %v172
    %184 = vadd.xlane.f32.xlu0 %v183
    %v185 = vpop.xlane.xlu0 %184
    %v186 = vsel %vm178, %v185, %v172
    %s187 = scalar_lea.vmem [#allocation2], 5
    %v188 = vld [vmem:[%s187] ss:$0 sm:$0xff]
    %v189 = vxor.u32 %v188, 2147483648
    %v190 = vlaneseq
    %v191 = vand.u32 %v190, 127
    %vm192 = vcmp.eq.s32.totalorder %v191, 5
    %v193 = vmul.f32 %v189, %v182
    %194 = vadd.xlane.f32.xlu0 %v193
    %v195 = vpop.xlane.xlu0 %194
    %v196 = vsel %vm192, %v195, %v182
    %v197 = vmul.f32 %v189, %v186
    %198 = vadd.xlane.f32.xlu0 %v197
    %v199 = vpop.xlane.xlu0 %198
    %v200 = vsel %vm192, %v199, %v186
    %s201 = scalar_lea.vmem [#allocation2], 4
    %v202 = vld [vmem:[%s201] ss:$0 sm:$0xff]
    %v203 = vxor.u32 %v202, 2147483648
    %v204 = vlaneseq
    %v205 = vand.u32 %v204, 127
    %vm206 = vcmp.eq.s32.totalorder %v205, 4
    %v207 = vmul.f32 %v203, %v196
    %208 = vadd.xlane.f32.xlu0 %v207
    %v209 = vpop.xlane.xlu0 %208
    %v210 = vsel %vm206, %v209, %v196
    %v211 = vmul.f32 %v203, %v200
    %212 = vadd.xlane.f32.xlu0 %v211
    %v213 = vpop.xlane.xlu0 %212
    %v214 = vsel %vm206, %v213, %v200
    %s215 = scalar_lea.vmem [#allocation2], 3
    %v216 = vld [vmem:[%s215] ss:$0 sm:$0xff]
    %v217 = vxor.u32 %v216, 2147483648
    %v218 = vlaneseq
    %v219 = vand.u32 %v218, 127
    %vm220 = vcmp.eq.s32.totalorder %v219, 3
    %v221 = vmul.f32 %v217, %v210
    %222 = vadd.xlane.f32.xlu0 %v221
    %v223 = vpop.xlane.xlu0 %222
    %v224 = vsel %vm220, %v223, %v210
    %v225 = vmul.f32 %v217, %v214
    %226 = vadd.xlane.f32.xlu0 %v225
    %v227 = vpop.xlane.xlu0 %226
    %v228 = vsel %vm220, %v227, %v214
    %s229 = scalar_lea.vmem [#allocation2], 2
    %v230 = vld [vmem:[%s229] ss:$0 sm:$0xff]
    %v231 = vxor.u32 %v230, 2147483648
    %v232 = vlaneseq
    %v233 = vand.u32 %v232, 127
    %vm234 = vcmp.eq.s32.totalorder %v233, 2
    %v235 = vmul.f32 %v231, %v224
    %236 = vadd.xlane.f32.xlu0 %v235
    %v237 = vpop.xlane.xlu0 %236
    %v238 = vsel %vm234, %v237, %v224
    %v239 = vmul.f32 %v231, %v228
    %240 = vadd.xlane.f32.xlu0 %v239
    %v241 = vpop.xlane.xlu0 %240
    %v242 = vsel %vm234, %v241, %v228
    %s243 = scalar_lea.vmem [#allocation2], 1
    %v244 = vld [vmem:[%s243] ss:$0 sm:$0xff]
    %v245 = vxor.u32 %v244, 2147483648
    %v246 = vlaneseq
    %v247 = vand.u32 %v246, 127
    %vm248 = vcmp.eq.s32.totalorder %v247, 1
    %v249 = vmul.f32 %v245, %v238
    %250 = vadd.xlane.f32.xlu0 %v249
    %v251 = vpop.xlane.xlu0 %250
    %v252 = vsel %vm248, %v251, %v238
    %v253 = vmul.f32 %v245, %v242
    %254 = vadd.xlane.f32.xlu0 %v253
    %v255 = vpop.xlane.xlu0 %254
    %v256 = vsel %vm248, %v255, %v242
    %v257 = vld [vmem:[#allocation2] ss:$0 sm:$0xff]
    %v258 = vxor.u32 %v257, 2147483648
    %v259 = vlaneseq
    %v260 = vand.u32 %v259, 127
    %vm261 = vcmp.eq.s32.totalorder %v260, 0
    %v262 = vmul.f32 %v258, %v252
    %263 = vadd.xlane.f32.xlu0 %v262
    %v264 = vpop.xlane.xlu0 %263
    %v265 = vsel %vm261, %v264, %v252
    %v266 = vmul.f32 %v258, %v256
    %267 = vadd.xlane.f32.xlu0 %v266
    %v268 = vpop.xlane.xlu0 %267
    %v269 = vsel %vm261, %v268, %v256
    %v270 = vrcp.pop %v48
    %v271 = vmul.f32 %v265, %v270
    %vm272 = vweird.f32 %v48
    %v273 = vsel %vm272, %v265, %v271
    %274 = vst [vmem:[#allocation1] sm:$0xff] %v273
    %v275 = vrcp.pop %v64
    %v276 = vmul.f32 %v269, %v275
    %vm277 = vweird.f32 %v64
    %v278 = vsel %vm277, %v269, %v276
    %s279 = scalar_lea.vmem [#allocation1], 8
    %280 = vst [vmem:[%s279] sm:$0xff] %v278
    // Predicated region
    $region36: #{custom-call.30} parent=1 // pred_check
      _
    $region37: #{custom-call.30} parent=1 // pred_check_branch
      %282 = sbr.rel (0) target = $region39
    $region38: #{custom-call.30} parent=1 // pred_region
      // Predicated region
      $region40: #{custom-call.30} parent=38 // pred_check
        _
      $region41: #{custom-call.30} parent=38 // pred_check_branch
        %284 = sbr.rel (0) target = $region43
      $region42: #{custom-call.30} parent=38 // pred_region
        // Predicated region
        $region55: #{custom-call.30} parent=42 // pred_check
          _
        $region56: #{custom-call.30} parent=42 // pred_check_branch
          %301 = sbr.rel (0) target = $region58
        $region57: #{custom-call.30} parent=42 // pred_region
          loop: start=0, step=1, limit=1
          $region59: #{custom-call.30} parent=57 // loop_pre_header
            _
          $region60: #{custom-call.30} parent=57 // loop_header
            %s303 = sphi 0, %s307
            %p304 = scmp.ge.s32.totalorder %s303, 1
            %s308 = sphi [#allocation1], [#allocation1]
            %s309 = sphi %s1, %s1
          $region61: #{custom-call.30} parent=57 // loop_header_branch
            %306 = sbr.rel (%p304) target = $region65
          $region62: #{custom-call.30} parent=57 // loop_body
            %v310 = vld [vmem:[%s308] sm:$0xff]
            %311 = vst [vmem:[%s309] sm:$0xff] %v310
            %v312 = vld [vmem:[%s308 + $0x8] sm:$0xff]
            %313 = vst [vmem:[%s309 + $0x8] sm:$0xff] %v312
          $region63: #{custom-call.30} parent=57 // loop_footer
            %s307 = sadd.s32 1, %s303
          $region64: #{custom-call.30} parent=57 // loop_footer_branch
            %302 = sbr.rel target = $region60
          $region65: #{custom-call.30} parent=57 // loop_exit
            _
        $region58: #{custom-call.30} parent=42 // pred_fallthru
          _
        // Predicated region
        $region66: #{custom-call.30} parent=42 // pred_check
          _
        $region67: #{custom-call.30} parent=42 // pred_check_branch
          %315 = sbr.rel target = $region69
        $region68: #{custom-call.30} parent=42 // pred_region
          _
        $region69: #{custom-call.30} parent=42 // pred_fallthru
          _
      $region43: #{custom-call.30} parent=38 // pred_fallthru
        _
      // Predicated region
      $region44: #{custom-call.30} parent=38 // pred_check
        _
      $region45: #{custom-call.30} parent=38 // pred_check_branch
        %286 = sbr.rel target = $region47
      $region46: #{custom-call.30} parent=38 // pred_region
        loop: start=0, step=1, limit=1
        $region48: #{custom-call.30} parent=46 // loop_pre_header
          _
        $region49: #{custom-call.30} parent=46 // loop_header
          %s289 = sphi 0, %s293
          %p290 = scmp.ge.s32.totalorder %s289, 1
          %s294 = sphi [#allocation1], [#allocation1]
          %s295 = sphi %s1, %s1
        $region50: #{custom-call.30} parent=46 // loop_header_branch
          %292 = sbr.rel (%p290) target = $region54
        $region51: #{custom-call.30} parent=46 // loop_body
          %v296 = vld [vmem:[%s294] sm:$0xff]
          %297 = vst [vmem:[%s295] sm:$0xff] %v296
          %v298 = vld [vmem:[%s294 + $0x8] sm:$0xff]
          %299 = vst [vmem:[%s295 + $0x8] sm:$0xff] %v298
        $region52: #{custom-call.30} parent=46 // loop_footer
          %s293 = sadd.s32 1, %s289
        $region53: #{custom-call.30} parent=46 // loop_footer_branch
          %288 = sbr.rel target = $region49
        $region54: #{custom-call.30} parent=46 // loop_exit
          _
      $region47: #{custom-call.30} parent=38 // pred_fallthru
        _
    $region39: #{custom-call.30} parent=1 // pred_fallthru
      _
    %316 = vnop

// kernel: custom-call.26
$region0: #{custom-call.26}
  %s0 = inlined_call_operand.vmem [shape: f32[8,8], index: 0, kind: input, shape index: {}]
  %s1 = inlined_call_operand.vmem [shape: f32[8,8], index: 1, kind: input, shape index: {}]
  %s2 = inlined_call_operand.vmem [shape: f32[8,8], index: 2, kind: input, shape index: {}]
  %s3 = inlined_call_operand.vmem [shape: f32[8,8], index: 3, kind: input, shape index: {}]
  %s4 = inlined_call_operand.vmem [shape: f32[8], index: 4, kind: output, shape index: {0}]
  %s5 = inlined_call_operand.vmem [shape: f32[8], index: 5, kind: output, shape index: {1}]
  %s6 = inlined_call_operand.hbm [shape: f32[8,8], index: 6, kind: output, shape index: {2}]
  %s7 = inlined_call_operand.hbm [shape: f32[8,8], index: 7, kind: output, shape index: {3}]
  %s8 = inlined_call_operand.hbm [shape: f32[8,8], index: 8, kind: output, shape index: {4}]
  %s9 = inlined_call_operand.hbm [shape: f32[8,8], index: 9, kind: output, shape index: {5}]
  %10 = xla_tuple %s4, %s5, %s6, %s7, %s8, %s9
  $region1: #{custom-call.26} parent=0
    #allocation0 [shape = 'u8[4096]{0}', space=vmem, size = 0x1000, scoped, tag = 'operand span for operand 0']
    #allocation1 [shape = 'u8[4096]{0}', space=vmem, size = 0x1000, scoped, tag = 'operand span for operand 1']
    #allocation2 [shape = 'u8[4096]{0}', space=vmem, size = 0x1000, scoped, tag = 'operand span for operand 2']
    #allocation3 [shape = 'u8[4096]{0}', space=vmem, size = 0x1000, scoped, tag = 'operand span for operand 3']
    #allocation4 [shape = 'u8[4096]{0}', space=vmem, size = 0x1000, scoped, tag = 'operand span for operand 4']
    #allocation5 [shape = 'u8[512]{0}', space=vmem, size = 0x400, scoped, tag = 'packed  for operand 4']
    #allocation6 [shape = 'u8[4096]{0}', space=vmem, size = 0x1000, scoped, tag = 'operand span for operand 5']
    #allocation7 [shape = 'u8[512]{0}', space=vmem, size = 0x400, scoped, tag = 'packed  for operand 5']
    #allocation8 [shape = 'u8[4096]{0}', space=vmem, size = 0x1000, scoped, tag = 'operand span for operand 6']
    #allocation9 [shape = 's32[1]{0}', space=sflag, size = 0x4, scoped, tag = 'scoped memory for custom-call.26']
    #allocation10 [shape = 'u8[4096]{0}', space=vmem, size = 0x1000, scoped, tag = 'operand span for operand 7']
    #allocation11 [shape = 's32[1]{0}', space=sflag, size = 0x4, scoped, tag = 'scoped memory for custom-call.26']
    #allocation12 [shape = 'u8[4096]{0}', space=vmem, size = 0x1000, scoped, tag = 'operand span for operand 8']
    #allocation13 [shape = 'u8[4096]{0}', space=vmem, size = 0x1000, scoped, tag = 'operand span for operand 9']
    #allocation14 [shape = 's32[1]{0}', space=sflag, size = 0x4, scoped, tag = 'scoped memory for custom-call.26']
    #allocation15 [shape = 'f32[8,8]{1,0}', space=vmem, size = 0x1000, scoped, tag = 'a top-left matrix']
    #allocation16 [shape = 'f32[8,8]{1,0}', space=vmem, size = 0x1000, scoped, tag = 'a top-right matrix']
    #allocation17 [shape = 'f32[8,8]{1,0}', space=vmem, size = 0x1000, scoped, tag = 'a bottom-left matrix']
    #allocation18 [shape = 'f32[8,8]{1,0}', space=vmem, size = 0x1000, scoped, tag = 'a bottom-right matrix']
    %11 = vsyncpa [#allocation9], 0
    %12 = vsyncpa [#allocation11], 0
    %13 = vsyncpa [#allocation14], 0
    %p15 = scmp.gt.s32.totalorder 8, 0
    // Predicated region
    $region2: #{custom-call.26} parent=1 // pred_check
      %p16 = pneg %p15
    $region3: #{custom-call.26} parent=1 // pred_check_branch
      %18 = sbr.rel (%p16) target = $region5
    $region4: #{custom-call.26} parent=1 // pred_region
      %s19 = sshra.s32 8, 3
      %p20 = scmp.gt.s32.totalorder %s19, 0
      // Predicated region
      $region6: #{custom-call.26} parent=4 // pred_check
        %p21 = pneg %p20
      $region7: #{custom-call.26} parent=4 // pred_check_branch
        %23 = sbr.rel (%p21) target = $region9
      $region8: #{custom-call.26} parent=4 // pred_region
        %s24 = ssub.s32 %s19, 1
        %s25 = smul.u32 %s24, 128
        %s26 = sshra.s32 %s25, 4
        %s27 = scalar_lea.vmem %s0, %s26
        %v28 = vld [vmem:[%s0] sm:$0xff]
        // While loop
        $region10: #{custom-call.26} parent=8 // loop_pre_header
          _
        $region11: #{custom-call.26} parent=8 // loop_header
          %s29 = sphi %s0, %s51
          %s30 = sphi [#allocation0], %s52
          %v31 = vphi %v28, %v53
          %s32 = ssub.s32 %s27, 64
          %p33 = scmp.gt.s32.totalorder %s29, %s32
        $region12: #{custom-call.26} parent=8 // loop_header_branch
          %35 = sbr.rel (%p33) target = $region16
        $region13: #{custom-call.26} parent=8 // loop_body
          %36 = vst [vmem:[%s30] sm:$0xff] %v31
          %v37 = vld [vmem:[%s29 + $0x8] sm:$0xff]
          %38 = vst [vmem:[%s30 + $0x8] sm:$0xff] %v37
          %v39 = vld [vmem:[%s29 + $0x10] sm:$0xff]
          %40 = vst [vmem:[%s30 + $0x10] sm:$0xff] %v39
          %v41 = vld [vmem:[%s29 + $0x18] sm:$0xff]
          %42 = vst [vmem:[%s30 + $0x18] sm:$0xff] %v41
          %v43 = vld [vmem:[%s29 + $0x20] sm:$0xff]
          %44 = vst [vmem:[%s30 + $0x20] sm:$0xff] %v43
          %v45 = vld [vmem:[%s29 + $0x28] sm:$0xff]
          %46 = vst [vmem:[%s30 + $0x28] sm:$0xff] %v45
          %v47 = vld [vmem:[%s29 + $0x30] sm:$0xff]
          %48 = vst [vmem:[%s30 + $0x30] sm:$0xff] %v47
          %v49 = vld [vmem:[%s29 + $0x38] sm:$0xff]
          %50 = vst [vmem:[%s30 + $0x38] sm:$0xff] %v49
        $region14: #{custom-call.26} parent=8 // loop_footer
          %s51 = scalar_lea.vmem %s29, 64
          %s52 = scalar_lea.vmem %s30, 64
          %v53 = vld [vmem:[%s29 + $0x40] sm:$0xff]
        $region15: #{custom-call.26} parent=8 // loop_footer_branch
          %54 = sbr.rel target = $region11
        $region16: #{custom-call.26} parent=8 // loop_exit
          _
        // While loop
        $region17: #{custom-call.26} parent=8 // loop_pre_header
          _
        $region18: #{custom-call.26} parent=8 // loop_header
          %s55 = sphi %s29, %s63
          %s56 = sphi %s30, %s64
          %v57 = vphi %v31, %v57
          %p58 = scmp.gt.s32.totalorder %s55, %s27
        $region19: #{custom-call.26} parent=8 // loop_header_branch
          %60 = sbr.rel (%p58) target = $region23
        $region20: #{custom-call.26} parent=8 // loop_body
          %v61 = vld [vmem:[%s55] sm:$0xff]
          %62 = vst [vmem:[%s56] sm:$0xff] %v61
        $region21: #{custom-call.26} parent=8 // loop_footer
          %s63 = scalar_lea.vmem %s55, 8
          %s64 = scalar_lea.vmem %s56, 8
        $region22: #{custom-call.26} parent=8 // loop_footer_branch
          %65 = sbr.rel target = $region18
        $region23: #{custom-call.26} parent=8 // loop_exit
          _
      $region9: #{custom-call.26} parent=4 // pred_fallthru
        _
      %s66 = sand.u32 8, 7
      %s67 = sshllo.u32 0, %s66
      %s68 = smul.u32 %s19, 128
      %s69 = sshra.s32 %s68, 4
      %s70 = scalar_lea.vmem [#allocation0], %s69
      %s71 = smul.u32 %s19, 128
      %s72 = sshra.s32 %s71, 4
      %s73 = scalar_lea.vmem %s0, %s72
      %v74 = vld [vmem:[%s73] sm:%s67]
      %75 = vst [vmem:[%s70] sm:%s67] %v74
    $region5: #{custom-call.26} parent=1 // pred_fallthru
      _
    %p77 = scmp.gt.s32.totalorder 8, 0
    // Predicated region
    $region24: #{custom-call.26} parent=1 // pred_check
      %p78 = pneg %p77
    $region25: #{custom-call.26} parent=1 // pred_check_branch
      %80 = sbr.rel (%p78) target = $region27
    $region26: #{custom-call.26} parent=1 // pred_region
      %s81 = sshra.s32 8, 3
      %p82 = scmp.gt.s32.totalorder %s81, 0
      // Predicated region
      $region28: #{custom-call.26} parent=26 // pred_check
        %p83 = pneg %p82
      $region29: #{custom-call.26} parent=26 // pred_check_branch
        %85 = sbr.rel (%p83) target = $region31
      $region30: #{custom-call.26} parent=26 // pred_region
        %s86 = ssub.s32 %s81, 1
        %s87 = smul.u32 %s86, 128
        %s88 = sshra.s32 %s87, 4
        %s89 = scalar_lea.vmem %s1, %s88
        %v90 = vld [vmem:[%s1] sm:$0xff]
        // While loop
        $region32: #{custom-call.26} parent=30 // loop_pre_header
          _
        $region33: #{custom-call.26} parent=30 // loop_header
          %s91 = sphi %s1, %s113
          %s92 = sphi [#allocation1], %s114
          %v93 = vphi %v90, %v115
          %s94 = ssub.s32 %s89, 64
          %p95 = scmp.gt.s32.totalorder %s91, %s94
        $region34: #{custom-call.26} parent=30 // loop_header_branch
          %97 = sbr.rel (%p95) target = $region38
        $region35: #{custom-call.26} parent=30 // loop_body
          %98 = vst [vmem:[%s92] sm:$0xff] %v93
          %v99 = vld [vmem:[%s91 + $0x8] sm:$0xff]
          %100 = vst [vmem:[%s92 + $0x8] sm:$0xff] %v99
          %v101 = vld [vmem:[%s91 + $0x10] sm:$0xff]
          %102 = vst [vmem:[%s92 + $0x10] sm:$0xff] %v101
          %v103 = vld [vmem:[%s91 + $0x18] sm:$0xff]
          %104 = vst [vmem:[%s92 + $0x18] sm:$0xff] %v103
          %v105 = vld [vmem:[%s91 + $0x20] sm:$0xff]
          %106 = vst [vmem:[%s92 + $0x20] sm:$0xff] %v105
          %v107 = vld [vmem:[%s91 + $0x28] sm:$0xff]
          %108 = vst [vmem:[%s92 + $0x28] sm:$0xff] %v107
          %v109 = vld [vmem:[%s91 + $0x30] sm:$0xff]
          %110 = vst [vmem:[%s92 + $0x30] sm:$0xff] %v109
          %v111 = vld [vmem:[%s91 + $0x38] sm:$0xff]
          %112 = vst [vmem:[%s92 + $0x38] sm:$0xff] %v111
        $region36: #{custom-call.26} parent=30 // loop_footer
          %s113 = scalar_lea.vmem %s91, 64
          %s114 = scalar_lea.vmem %s92, 64
          %v115 = vld [vmem:[%s91 + $0x40] sm:$0xff]
        $region37: #{custom-call.26} parent=30 // loop_footer_branch
          %116 = sbr.rel target = $region33
        $region38: #{custom-call.26} parent=30 // loop_exit
          _
        // While loop
        $region39: #{custom-call.26} parent=30 // loop_pre_header
          _
        $region40: #{custom-call.26} parent=30 // loop_header
          %s117 = sphi %s91, %s125
          %s118 = sphi %s92, %s126
          %v119 = vphi %v93, %v119
          %p120 = scmp.gt.s32.totalorder %s117, %s89
        $region41: #{custom-call.26} parent=30 // loop_header_branch
          %122 = sbr.rel (%p120) target = $region45
        $region42: #{custom-call.26} parent=30 // loop_body
          %v123 = vld [vmem:[%s117] sm:$0xff]
          %124 = vst [vmem:[%s118] sm:$0xff] %v123
        $region43: #{custom-call.26} parent=30 // loop_footer
          %s125 = scalar_lea.vmem %s117, 8
          %s126 = scalar_lea.vmem %s118, 8
        $region44: #{custom-call.26} parent=30 // loop_footer_branch
          %127 = sbr.rel target = $region40
        $region45: #{custom-call.26} parent=30 // loop_exit
          _
      $region31: #{custom-call.26} parent=26 // pred_fallthru
        _
      %s128 = sand.u32 8, 7
      %s129 = sshllo.u32 0, %s128
      %s130 = smul.u32 %s81, 128
      %s131 = sshra.s32 %s130, 4
      %s132 = scalar_lea.vmem [#allocation1], %s131
      %s133 = smul.u32 %s81, 128
      %s134 = sshra.s32 %s133, 4
      %s135 = scalar_lea.vmem %s1, %s134
      %v136 = vld [vmem:[%s135] sm:%s129]
      %137 = vst [vmem:[%s132] sm:%s129] %v136
    $region27: #{custom-call.26} parent=1 // pred_fallthru
      _
    %p139 = scmp.gt.s32.totalorder 8, 0
    // Predicated region
    $region46: #{custom-call.26} parent=1 // pred_check
      %p140 = pneg %p139
    $region47: #{custom-call.26} parent=1 // pred_check_branch
      %142 = sbr.rel (%p140) target = $region49
    $region48: #{custom-call.26} parent=1 // pred_region
      %s143 = sshra.s32 8, 3
      %p144 = scmp.gt.s32.totalorder %s143, 0
      // Predicated region
      $region50: #{custom-call.26} parent=48 // pred_check
        %p145 = pneg %p144
      $region51: #{custom-call.26} parent=48 // pred_check_branch
        %147 = sbr.rel (%p145) target = $region53
      $region52: #{custom-call.26} parent=48 // pred_region
        %s148 = ssub.s32 %s143, 1
        %s149 = smul.u32 %s148, 128
        %s150 = sshra.s32 %s149, 4
        %s151 = scalar_lea.vmem %s2, %s150
        %v152 = vld [vmem:[%s2] sm:$0xff]
        // While loop
        $region54: #{custom-call.26} parent=52 // loop_pre_header
          _
        $region55: #{custom-call.26} parent=52 // loop_header
          %s153 = sphi %s2, %s175
          %s154 = sphi [#allocation2], %s176
          %v155 = vphi %v152, %v177
          %s156 = ssub.s32 %s151, 64
          %p157 = scmp.gt.s32.totalorder %s153, %s156
        $region56: #{custom-call.26} parent=52 // loop_header_branch
          %159 = sbr.rel (%p157) target = $region60
        $region57: #{custom-call.26} parent=52 // loop_body
          %160 = vst [vmem:[%s154] sm:$0xff] %v155
          %v161 = vld [vmem:[%s153 + $0x8] sm:$0xff]
          %162 = vst [vmem:[%s154 + $0x8] sm:$0xff] %v161
          %v163 = vld [vmem:[%s153 + $0x10] sm:$0xff]
          %164 = vst [vmem:[%s154 + $0x10] sm:$0xff] %v163
          %v165 = vld [vmem:[%s153 + $0x18] sm:$0xff]
          %166 = vst [vmem:[%s154 + $0x18] sm:$0xff] %v165
          %v167 = vld [vmem:[%s153 + $0x20] sm:$0xff]
          %168 = vst [vmem:[%s154 + $0x20] sm:$0xff] %v167
          %v169 = vld [vmem:[%s153 + $0x28] sm:$0xff]
          %170 = vst [vmem:[%s154 + $0x28] sm:$0xff] %v169
          %v171 = vld [vmem:[%s153 + $0x30] sm:$0xff]
          %172 = vst [vmem:[%s154 + $0x30] sm:$0xff] %v171
          %v173 = vld [vmem:[%s153 + $0x38] sm:$0xff]
          %174 = vst [vmem:[%s154 + $0x38] sm:$0xff] %v173
        $region58: #{custom-call.26} parent=52 // loop_footer
          %s175 = scalar_lea.vmem %s153, 64
          %s176 = scalar_lea.vmem %s154, 64
          %v177 = vld [vmem:[%s153 + $0x40] sm:$0xff]
        $region59: #{custom-call.26} parent=52 // loop_footer_branch
          %178 = sbr.rel target = $region55
        $region60: #{custom-call.26} parent=52 // loop_exit
          _
        // While loop
        $region61: #{custom-call.26} parent=52 // loop_pre_header
          _
        $region62: #{custom-call.26} parent=52 // loop_header
          %s179 = sphi %s153, %s187
          %s180 = sphi %s154, %s188
          %v181 = vphi %v155, %v181
          %p182 = scmp.gt.s32.totalorder %s179, %s151
        $region63: #{custom-call.26} parent=52 // loop_header_branch
          %184 = sbr.rel (%p182) target = $region67
        $region64: #{custom-call.26} parent=52 // loop_body
          %v185 = vld [vmem:[%s179] sm:$0xff]
          %186 = vst [vmem:[%s180] sm:$0xff] %v185
        $region65: #{custom-call.26} parent=52 // loop_footer
          %s187 = scalar_lea.vmem %s179, 8
          %s188 = scalar_lea.vmem %s180, 8
        $region66: #{custom-call.26} parent=52 // loop_footer_branch
          %189 = sbr.rel target = $region62
        $region67: #{custom-call.26} parent=52 // loop_exit
          _
      $region53: #{custom-call.26} parent=48 // pred_fallthru
        _
      %s190 = sand.u32 8, 7
      %s191 = sshllo.u32 0, %s190
      %s192 = smul.u32 %s143, 128
      %s193 = sshra.s32 %s192, 4
      %s194 = scalar_lea.vmem [#allocation2], %s193
      %s195 = smul.u32 %s143, 128
      %s196 = sshra.s32 %s195, 4
      %s197 = scalar_lea.vmem %s2, %s196
      %v198 = vld [vmem:[%s197] sm:%s191]
      %199 = vst [vmem:[%s194] sm:%s191] %v198
    $region49: #{custom-call.26} parent=1 // pred_fallthru
      _
    %p201 = scmp.gt.s32.totalorder 8, 0
    // Predicated region
    $region68: #{custom-call.26} parent=1 // pred_check
      %p202 = pneg %p201
    $region69: #{custom-call.26} parent=1 // pred_check_branch
      %204 = sbr.rel (%p202) target = $region71
    $region70: #{custom-call.26} parent=1 // pred_region
      %s205 = sshra.s32 8, 3
      %p206 = scmp.gt.s32.totalorder %s205, 0
      // Predicated region
      $region72: #{custom-call.26} parent=70 // pred_check
        %p207 = pneg %p206
      $region73: #{custom-call.26} parent=70 // pred_check_branch
        %209 = sbr.rel (%p207) target = $region75
      $region74: #{custom-call.26} parent=70 // pred_region
        %s210 = ssub.s32 %s205, 1
        %s211 = smul.u32 %s210, 128
        %s212 = sshra.s32 %s211, 4
        %s213 = scalar_lea.vmem %s3, %s212
        %v214 = vld [vmem:[%s3] sm:$0xff]
        // While loop
        $region76: #{custom-call.26} parent=74 // loop_pre_header
          _
        $region77: #{custom-call.26} parent=74 // loop_header
          %s215 = sphi %s3, %s237
          %s216 = sphi [#allocation3], %s238
          %v217 = vphi %v214, %v239
          %s218 = ssub.s32 %s213, 64
          %p219 = scmp.gt.s32.totalorder %s215, %s218
        $region78: #{custom-call.26} parent=74 // loop_header_branch
          %221 = sbr.rel (%p219) target = $region82
        $region79: #{custom-call.26} parent=74 // loop_body
          %222 = vst [vmem:[%s216] sm:$0xff] %v217
          %v223 = vld [vmem:[%s215 + $0x8] sm:$0xff]
          %224 = vst [vmem:[%s216 + $0x8] sm:$0xff] %v223
          %v225 = vld [vmem:[%s215 + $0x10] sm:$0xff]
          %226 = vst [vmem:[%s216 + $0x10] sm:$0xff] %v225
          %v227 = vld [vmem:[%s215 + $0x18] sm:$0xff]
          %228 = vst [vmem:[%s216 + $0x18] sm:$0xff] %v227
          %v229 = vld [vmem:[%s215 + $0x20] sm:$0xff]
          %230 = vst [vmem:[%s216 + $0x20] sm:$0xff] %v229
          %v231 = vld [vmem:[%s215 + $0x28] sm:$0xff]
          %232 = vst [vmem:[%s216 + $0x28] sm:$0xff] %v231
          %v233 = vld [vmem:[%s215 + $0x30] sm:$0xff]
          %234 = vst [vmem:[%s216 + $0x30] sm:$0xff] %v233
          %v235 = vld [vmem:[%s215 + $0x38] sm:$0xff]
          %236 = vst [vmem:[%s216 + $0x38] sm:$0xff] %v235
        $region80: #{custom-call.26} parent=74 // loop_footer
          %s237 = scalar_lea.vmem %s215, 64
          %s238 = scalar_lea.vmem %s216, 64
          %v239 = vld [vmem:[%s215 + $0x40] sm:$0xff]
        $region81: #{custom-call.26} parent=74 // loop_footer_branch
          %240 = sbr.rel target = $region77
        $region82: #{custom-call.26} parent=74 // loop_exit
          _
        // While loop
        $region83: #{custom-call.26} parent=74 // loop_pre_header
          _
        $region84: #{custom-call.26} parent=74 // loop_header
          %s241 = sphi %s215, %s249
          %s242 = sphi %s216, %s250
          %v243 = vphi %v217, %v243
          %p244 = scmp.gt.s32.totalorder %s241, %s213
        $region85: #{custom-call.26} parent=74 // loop_header_branch
          %246 = sbr.rel (%p244) target = $region89
        $region86: #{custom-call.26} parent=74 // loop_body
          %v247 = vld [vmem:[%s241] sm:$0xff]
          %248 = vst [vmem:[%s242] sm:$0xff] %v247
        $region87: #{custom-call.26} parent=74 // loop_footer
          %s249 = scalar_lea.vmem %s241, 8
          %s250 = scalar_lea.vmem %s242, 8
        $region88: #{custom-call.26} parent=74 // loop_footer_branch
          %251 = sbr.rel target = $region84
        $region89: #{custom-call.26} parent=74 // loop_exit
          _
      $region75: #{custom-call.26} parent=70 // pred_fallthru
        _
      %s252 = sand.u32 8, 7
      %s253 = sshllo.u32 0, %s252
      %s254 = smul.u32 %s205, 128
      %s255 = sshra.s32 %s254, 4
      %s256 = scalar_lea.vmem [#allocation3], %s255
      %s257 = smul.u32 %s205, 128
      %s258 = sshra.s32 %s257, 4
      %s259 = scalar_lea.vmem %s3, %s258
      %v260 = vld [vmem:[%s259] sm:%s253]
      %261 = vst [vmem:[%s256] sm:%s253] %v260
    $region71: #{custom-call.26} parent=1 // pred_fallthru
      _
    %s262 = smov [#allocation15]
    %v263 = vld [vmem:[#allocation0] sm:$0xff]
    %264 = vst [vmem:[%s262] sm:$0xff] %v263
    %s265 = smov [#allocation16]
    %v266 = vld [vmem:[#allocation1] sm:$0xff]
    %267 = vst [vmem:[%s265] sm:$0xff] %v266
    %s268 = smov [#allocation17]
    %v269 = vld [vmem:[#allocation2] sm:$0xff]
    %270 = vst [vmem:[%s268] sm:$0xff] %v269
    %s271 = smov [#allocation18]
    %v272 = vld [vmem:[#allocation3] sm:$0xff]
    %273 = vst [vmem:[%s271] sm:$0xff] %v272
    %274 = vst [vmem:[#allocation8] sm:$0xff] 0.0
    %275 = vst [vmem:[#allocation10] sm:$0xff] 0.0
    %276 = vst [vmem:[#allocation12] sm:$0xff] 0.0
    %277 = vst [vmem:[#allocation13] sm:$0xff] 0.0
    %s278 = smov [#allocation8]
    %v279 = vlaneseq
    %v280 = vand.u32 %v279, 127
    %v281 = vmov %v280
    %v282 = vlaneseq
    %v283 = vshrl.u32 %v282, 7
    %v284 = vmov %v283
    %v285 = vld [vmem:[%s278] sm:$0xff]
    %vm288 = vcmp.eq.s32.totalorder %v284, %v281
    %v289 = vsel %vm288, 1.0, %v285
    %290 = vst [vmem:[%s278] sm:$0xff] %v289
    %s291 = smov [#allocation13]
    %v292 = vlaneseq
    %v293 = vand.u32 %v292, 127
    %v294 = vmov %v293
    %v295 = vlaneseq
    %v296 = vshrl.u32 %v295, 7
    %v297 = vmov %v296
    %v298 = vld [vmem:[%s291] sm:$0xff]
    %vm301 = vcmp.eq.s32.totalorder %v297, %v294
    %v302 = vsel %vm301, 1.0, %v298
    %303 = vst [vmem:[%s291] sm:$0xff] %v302
    // While loop
    $region90: #{custom-call.26} parent=1 // loop_pre_header
      _
    $region91: #{custom-call.26} parent=1 // loop_header
      %s305 = sphi 0, %s847
      %v306 = vlaneseq
      %v307 = vand.u32 %v306, 127
      %v308 = vmov %v307
      %v309 = vlaneseq
      %v310 = vshrl.u32 %v309, 7
      %v311 = vmov %v310
      %s312 = smov [#allocation15]
      %v313 = vlaneseq
      %v314 = vand.u32 %v313, 127
      %vm315 = vcmp.ge.s32.totalorder %v314, 0
      %vm316 = vcmp.lt.s32.totalorder %v314, 8
      %vm317 = vmand %vm315, %vm316
      %v318 = vld [vmem:[%s312] sm:$0xff]
      %v319 = vsel %vm317, %v318, 0.0
      %v320 = vmul.f32 %v319, %v319
      %vm323 = vcmp.eq.s32.totalorder %v311, %v308
      %v324 = vsel %vm323, 0.0, %v320
      %v325 = vlaneseq
      %v326 = vand.u32 %v325, 127
      %v327 = vmov %v326
      %v328 = vlaneseq
      %v329 = vshrl.u32 %v328, 7
      %v330 = vmov %v329
      %s331 = smov [#allocation16]
      %v332 = vlaneseq
      %v333 = vand.u32 %v332, 127
      %vm334 = vcmp.ge.s32.totalorder %v333, 0
      %vm335 = vcmp.lt.s32.totalorder %v333, 8
      %vm336 = vmand %vm334, %vm335
      %v337 = vld [vmem:[%s331] sm:$0xff]
      %v338 = vsel %vm336, %v337, 0.0
      %v339 = vmul.f32 %v338, %v338
      %v340 = vadd.f32 %v324, %v339
      %v341 = vadd.f32 %v320, %v339
      %v342 = vlaneseq
      %v343 = vand.u32 %v342, 127
      %v344 = vmov %v343
      %v345 = vlaneseq
      %v346 = vshrl.u32 %v345, 7
      %v347 = vmov %v346
      %s348 = smov [#allocation17]
      %v349 = vlaneseq
      %v350 = vand.u32 %v349, 127
      %vm351 = vcmp.ge.s32.totalorder %v350, 0
      %vm352 = vcmp.lt.s32.totalorder %v350, 8
      %vm353 = vmand %vm351, %vm352
      %v354 = vld [vmem:[%s348] sm:$0xff]
      %v355 = vsel %vm353, %v354, 0.0
      %v356 = vmul.f32 %v355, %v355
      %v357 = vadd.f32 %v340, %v356
      %v358 = vadd.f32 %v341, %v356
      %v359 = vlaneseq
      %v360 = vand.u32 %v359, 127
      %v361 = vmov %v360
      %v362 = vlaneseq
      %v363 = vshrl.u32 %v362, 7
      %v364 = vmov %v363
      %s365 = smov [#allocation18]
      %v366 = vlaneseq
      %v367 = vand.u32 %v366, 127
      %vm368 = vcmp.ge.s32.totalorder %v367, 0
      %vm369 = vcmp.lt.s32.totalorder %v367, 8
      %vm370 = vmand %vm368, %vm369
      %v371 = vld [vmem:[%s365] sm:$0xff]
      %v372 = vsel %vm370, %v371, 0.0
      %v373 = vmul.f32 %v372, %v372
      %vm376 = vcmp.eq.s32.totalorder %v364, %v361
      %v377 = vsel %vm376, 0.0, %v373
      %v378 = vadd.f32 %v357, %v377
      %v379 = vadd.f32 %v358, %v373
      %380 = vadd.xlane.f32.xlu0 %v379
      %v381 = vpop.xlane.xlu0 %380
      %v382 = vrot.slane %v381, 4
      %v383 = vadd.f32 %v381, %v382
      %v384 = vrot.slane %v383, 2
      %v385 = vadd.f32 %v383, %v384
      %v386 = vrot.slane %v385, 1
      %v387 = vadd.f32 %v385, %v386
      %388 = vadd.xlane.f32.xlu0 %v378
      %v389 = vpop.xlane.xlu0 %388
      %v390 = vrot.slane %v389, 4
      %v391 = vadd.f32 %v389, %v390
      %v392 = vrot.slane %v391, 2
      %v393 = vadd.f32 %v391, %v392
      %v394 = vrot.slane %v393, 1
      %v395 = vadd.f32 %v393, %v394
      %s396 = vtos %v395
      %s397 = vtos %v387
      %s398 = smul.f32 1e-10, %s397
      %p399 = scmp.le.f32.partialorder %s396, %s398
      %p400 = scmp.ge.s32.totalorder %s305, 15
      %p401 = por %p399, %p400
    $region92: #{custom-call.26} parent=1 // loop_header_branch
      %849 = sbr.rel (%p401) target = $region96
    $region93: #{custom-call.26} parent=1 // loop_body
      loop: start=0, step=1, limit=15
      $region97: #{custom-call.26} parent=93 // loop_pre_header
        _
      $region98: #{custom-call.26} parent=93 // loop_header
        %s403 = sphi 0, %s407
        %p404 = scmp.ge.s32.totalorder %s403, 15
      $region99: #{custom-call.26} parent=93 // loop_header_branch
        %406 = sbr.rel (%p404) target = $region103
      $region100: #{custom-call.26} parent=93 // loop_body
        #allocation19 [shape = 'f32[1024]{0}', space=vmem, size = 0x1000, scoped, tag = 'a_tl_diag vmem']
        #allocation20 [shape = 'f32[1024]{0}', space=vmem, size = 0x1000, scoped, tag = 'a_tr_diag vmem']
        #allocation21 [shape = 'f32[1024]{0}', space=vmem, size = 0x1000, scoped, tag = 'a_br_diag vmem']
        #allocation22 [shape = 'f32[1024]{0}', space=vmem, size = 0x1000, scoped, tag = 'rt1 vmem']
        #allocation23 [shape = 'f32[1024]{0}', space=vmem, size = 0x1000, scoped, tag = 'rt2 vmem']
        #allocation24 [shape = 'f32[1024]{0}', space=vmem, size = 0x1000, scoped, tag = 'c vmem']
        #allocation25 [shape = 'f32[1024]{0}', space=vmem, size = 0x1000, scoped, tag = 's vmem']
        #allocation26 [shape = 'f32[4096]{0}', space=vmem, size = 0x4000, scoped, tag = 'c broadcast']
        #allocation27 [shape = 'f32[4096]{0}', space=vmem, size = 0x4000, scoped, tag = 's broadcast']
        %s408 = smov [#allocation15]
        %s409 = smov [#allocation19]
        %v410 = vlaneseq
        %v411 = vand.u32 %v410, 127
        %v412 = vmov %v411
        %v413 = vlaneseq
        %v414 = vshrl.u32 %v413, 7
        %v415 = vmov %v414
        %v416 = vld [vmem:[%s408] sm:$0xff]
        %vm419 = vcmp.eq.s32.totalorder %v415, %v412
        %v420 = vsel %vm419, %v416, 0.0
        %v421 = vrot.slane %v420, 4
        %v422 = vadd.f32 %v420, %v421
        %v423 = vrot.slane %v422, 2
        %v424 = vadd.f32 %v422, %v423
        %v425 = vrot.slane %v424, 1
        %v426 = vadd.f32 %v424, %v425
        %427 = vst [vmem:[%s409] sm:$0x1] %v426
        %s428 = smov [#allocation16]
        %s429 = smov [#allocation20]
        %v430 = vlaneseq
        %v431 = vand.u32 %v430, 127
        %v432 = vmov %v431
        %v433 = vlaneseq
        %v434 = vshrl.u32 %v433, 7
        %v435 = vmov %v434
        %v436 = vld [vmem:[%s428] sm:$0xff]
        %vm439 = vcmp.eq.s32.totalorder %v435, %v432
        %v440 = vsel %vm439, %v436, 0.0
        %v441 = vrot.slane %v440, 4
        %v442 = vadd.f32 %v440, %v441
        %v443 = vrot.slane %v442, 2
        %v444 = vadd.f32 %v442, %v443
        %v445 = vrot.slane %v444, 1
        %v446 = vadd.f32 %v444, %v445
        %447 = vst [vmem:[%s429] sm:$0x1] %v446
        %s448 = smov [#allocation18]
        %s449 = smov [#allocation21]
        %v450 = vlaneseq
        %v451 = vand.u32 %v450, 127
        %v452 = vmov %v451
        %v453 = vlaneseq
        %v454 = vshrl.u32 %v453, 7
        %v455 = vmov %v454
        %v456 = vld [vmem:[%s448] sm:$0xff]
        %vm459 = vcmp.eq.s32.totalorder %v455, %v452
        %v460 = vsel %vm459, %v456, 0.0
        %v461 = vrot.slane %v460, 4
        %v462 = vadd.f32 %v460, %v461
        %v463 = vrot.slane %v462, 2
        %v464 = vadd.f32 %v462, %v463
        %v465 = vrot.slane %v464, 1
        %v466 = vadd.f32 %v464, %v465
        %467 = vst [vmem:[%s449] sm:$0x1] %v466
        %s468 = smov [#allocation24]
        %s469 = smov [#allocation25]
        %s470 = smov [#allocation19]
        %v471 = vld [vmem:[%s470] sm:$0xff]
        %s472 = smov [#allocation20]
        %v473 = vld [vmem:[%s472] sm:$0xff]
        %s474 = smov [#allocation21]
        %v475 = vld [vmem:[%s474] sm:$0xff]
        %v476 = vsub.f32 %v475, %v471
        %v477 = vmul.f32 2.0, %v473
        %v478 = vrcp.pop %v477
        %v479 = vmul.f32 %v476, %v478
        %vm480 = vcmp.ge.f32.partialorder %v479, 0.0
        %v481 = vmul.f32 %v479, %v479
        %v482 = vadd.f32 1.0, %v481
        %v483 = vrsqrt.pop %v482
        %v484 = vmul.f32 %v482, %v483
        %vm485 = vcmp.eq.f32.partialorder %v482, inf
        %v486 = vsel %vm485, %v482, %v484
        %vm487 = vcmp.eq.f32.partialorder %v482, 0.0
        %v488 = vand.u32 %v482, 2147483648
        %v489 = vsel %vm487, %v488, %v486
        %v490 = vxor.u32 %v489, 2147483648
        %v491 = vsel %vm480, %v489, %v490
        %v492 = vadd.f32 %v479, %v491
        %v493 = vrcp.pop %v492
        %v494 = vand.u32 2147483647, %v471
        %v495 = vand.u32 2147483647, %v473
        %v496 = vand.u32 2147483647, %v475
        %v497 = vmin.f32 %v494, %v496
        %v498 = vmul.f32 1.1920929e-08, %v497
        %vm499 = vcmp.le.f32.partialorder %v495, %v498
        %v500 = vsel %vm499, 0.0, %v493
        %v501 = vmul.f32 %v500, %v500
        %v502 = vadd.f32 1.0, %v501
        %v503 = vrsqrt.pop %v502
        %v504 = vmul.f32 %v500, %v503
        %v505 = vmul.f32 %v500, %v473
        %v506 = vsub.f32 %v471, %v505
        %v507 = vmul.f32 %v500, %v473
        %v508 = vadd.f32 %v475, %v507
        %s509 = smov [#allocation22]
        %510 = vst [vmem:[%s509] sm:$0xff] %v506
        %s511 = smov [#allocation23]
        %512 = vst [vmem:[%s511] sm:$0xff] %v508
        %s513 = smov %s468
        %514 = vst [vmem:[%s513] sm:$0xff] %v503
        %s515 = smov %s469
        %516 = vst [vmem:[%s515] sm:$0xff] %v504
        %s517 = smov [#allocation24]
        %v518 = vld [vmem:[%s517] ss:$0 sm:$0xff]
        %v519 = vlaneseq
        %v520 = vand.u32 %v519, 127
        %v521 = vmov %v520
        %v522 = vlaneseq
        %v523 = vshrl.u32 %v522, 7
        %v524 = vmov %v523
        %vm526 = vcmp.eq.s32.totalorder %v524, %v521
        %v527 = vsel %vm526, %v518, 0.0
        %528 = vadd.xlane.f32.xlu0 %v527
        %v529 = vpop.xlane.xlu0 %528
        %s530 = smov [#allocation26]
        %531 = vst [vmem:[%s530] sm:$0xff] %v529
        %s532 = smov [#allocation25]
        %v533 = vld [vmem:[%s532] ss:$0 sm:$0xff]
        %v534 = vlaneseq
        %v535 = vand.u32 %v534, 127
        %v536 = vmov %v535
        %v537 = vlaneseq
        %v538 = vshrl.u32 %v537, 7
        %v539 = vmov %v538
        %vm541 = vcmp.eq.s32.totalorder %v539, %v536
        %v542 = vsel %vm541, %v533, 0.0
        %543 = vadd.xlane.f32.xlu0 %v542
        %v544 = vpop.xlane.xlu0 %543
        %s545 = smov [#allocation27]
        %546 = vst [vmem:[%s545] sm:$0xff] %v544
        %s547 = smov [#allocation26]
        %v548 = vld [vmem:[%s547] sm:$0xff]
        %s549 = smov [#allocation27]
        %v550 = vld [vmem:[%s549] sm:$0xff]
        %s551 = smov [#allocation15]
        %s552 = smov [#allocation16]
        %s553 = smov [#allocation17]
        %s554 = smov [#allocation18]
        %v555 = vld [vmem:[%s551] sm:$0xff]
        %v556 = vld [vmem:[%s552] sm:$0xff]
        %v557 = vld [vmem:[%s553] sm:$0xff]
        %v558 = vld [vmem:[%s554] sm:$0xff]
        %v559 = vmul.f32 %v548, %v555
        %v560 = vmul.f32 %v550, %v557
        %v561 = vsub.f32 %v559, %v560
        %v562 = vmul.f32 %v548, %v556
        %v563 = vmul.f32 %v550, %v558
        %v564 = vsub.f32 %v562, %v563
        %v565 = vmul.f32 %v550, %v555
        %v566 = vmul.f32 %v548, %v557
        %v567 = vadd.f32 %v565, %v566
        %v568 = vmul.f32 %v550, %v556
        %v569 = vmul.f32 %v548, %v558
        %v570 = vadd.f32 %v568, %v569
        %571 = vst [vmem:[%s551] sm:$0xff] %v561
        %572 = vst [vmem:[%s552] sm:$0xff] %v564
        %573 = vst [vmem:[%s553] sm:$0xff] %v567
        %574 = vst [vmem:[%s554] sm:$0xff] %v570
        %s575 = smov [#allocation24]
        %v576 = vld [vmem:[%s575] ss:$0 sm:$0xff]
        %s577 = smov [#allocation25]
        %v578 = vld [vmem:[%s577] ss:$0 sm:$0xff]
        %s579 = smov [#allocation15]
        %s580 = smov [#allocation16]
        %s581 = smov [#allocation17]
        %s582 = smov [#allocation18]
        %v583 = vld [vmem:[%s579] sm:$0xff]
        %v584 = vld [vmem:[%s580] sm:$0xff]
        %v585 = vld [vmem:[%s581] sm:$0xff]
        %v586 = vld [vmem:[%s582] sm:$0xff]
        %v587 = vmul.f32 %v576, %v583
        %v588 = vmul.f32 %v578, %v584
        %v589 = vsub.f32 %v587, %v588
        %v590 = vmul.f32 %v578, %v583
        %v591 = vmul.f32 %v576, %v584
        %v592 = vadd.f32 %v590, %v591
        %v593 = vmul.f32 %v576, %v585
        %v594 = vmul.f32 %v578, %v586
        %v595 = vsub.f32 %v593, %v594
        %v596 = vmul.f32 %v578, %v585
        %v597 = vmul.f32 %v576, %v586
        %v598 = vadd.f32 %v596, %v597
        %599 = vst [vmem:[%s579] sm:$0xff] %v589
        %600 = vst [vmem:[%s580] sm:$0xff] %v592
        %601 = vst [vmem:[%s581] sm:$0xff] %v595
        %602 = vst [vmem:[%s582] sm:$0xff] %v598
        %s603 = smov [#allocation15]
        %s604 = smov [#allocation22]
        %v605 = vlaneseq
        %v606 = vand.u32 %v605, 127
        %v607 = vmov %v606
        %v608 = vlaneseq
        %v609 = vshrl.u32 %v608, 7
        %v610 = vmov %v609
        %v611 = vld [vmem:[%s604] ss:$0 sm:$0xff]
        %v612 = vld [vmem:[%s603] sm:$0xff]
        %vm615 = vcmp.eq.s32.totalorder %v610, %v607
        %v616 = vsel %vm615, %v611, %v612
        %617 = vst [vmem:[%s603] sm:$0xff] %v616
        %s618 = smov [#allocation16]
        %v619 = vlaneseq
        %v620 = vand.u32 %v619, 127
        %v621 = vmov %v620
        %v622 = vlaneseq
        %v623 = vshrl.u32 %v622, 7
        %v624 = vmov %v623
        %v625 = vld [vmem:[%s618] sm:$0xff]
        %vm628 = vcmp.eq.s32.totalorder %v624, %v621
        %v629 = vsel %vm628, 0.0, %v625
        %630 = vst [vmem:[%s618] sm:$0xff] %v629
        %s631 = smov [#allocation17]
        %v632 = vlaneseq
        %v633 = vand.u32 %v632, 127
        %v634 = vmov %v633
        %v635 = vlaneseq
        %v636 = vshrl.u32 %v635, 7
        %v637 = vmov %v636
        %v638 = vld [vmem:[%s631] sm:$0xff]
        %vm641 = vcmp.eq.s32.totalorder %v637, %v634
        %v642 = vsel %vm641, 0.0, %v638
        %643 = vst [vmem:[%s631] sm:$0xff] %v642
        %s644 = smov [#allocation18]
        %s645 = smov [#allocation23]
        %v646 = vlaneseq
        %v647 = vand.u32 %v646, 127
        %v648 = vmov %v647
        %v649 = vlaneseq
        %v650 = vshrl.u32 %v649, 7
        %v651 = vmov %v650
        %v652 = vld [vmem:[%s645] ss:$0 sm:$0xff]
        %v653 = vld [vmem:[%s644] sm:$0xff]
        %vm656 = vcmp.eq.s32.totalorder %v651, %v648
        %v657 = vsel %vm656, %v652, %v653
        %658 = vst [vmem:[%s644] sm:$0xff] %v657
        %s659 = smov [#allocation15]
        %s660 = smov [#allocation16]
        %v661 = vld [vmem:[%s660] sm:$0xff]
        %662 = vrot.lane.b32.xlu0 %v661, 1
        %v663 = vpop.permute.xlu0 %662
        %v664 = vld [vmem:[%s659] sm:$0xff]
        %v665 = vld [vmem:[%s659] sm:$0xff]
        %666 = vrot.lane.b32.xlu0 %v665, 1
        %v667 = vpop.permute.xlu0 %666
        %v668 = vlaneseq
        %v669 = vand.u32 %v668, 127
        %vm670 = vcmp.eq.s32.totalorder %v669, 0
        %v671 = vsel %vm670, %v665, %v667
        %v672 = vlaneseq
        %v673 = vand.u32 %v672, 127
        %vm674 = vcmp.eq.s32.totalorder %v673, 1
        %v675 = vsel %vm674, %v663, %v671
        %v676 = vlaneseq
        %v677 = vand.u32 %v676, 127
        %vm678 = vcmp.ge.s32.totalorder %v677, 0
        %vm679 = vcmp.lt.s32.totalorder %v677, 8
        %vm680 = vmand %vm678, %vm679
        %v681 = vsel %vm680, %v675, 0.0
        %v682 = vld [vmem:[%s660] sm:$0xff]
        %683 = vrot.lane.b32.xlu0 %v682, 127
        %v684 = vpop.permute.xlu0 %683
        %v685 = vlaneseq
        %v686 = vand.u32 %v685, 127
        %vm687 = vcmp.eq.s32.totalorder %v686, 7
        %v688 = vsel %vm687, %v664, %v684
        %689 = vst [vmem:[%s659] sm:$0xff] %v681
        %690 = vst [vmem:[%s660] sm:$0xff] %v688
        %s691 = smov [#allocation17]
        %s692 = smov [#allocation18]
        %v693 = vld [vmem:[%s692] sm:$0xff]
        %694 = vrot.lane.b32.xlu0 %v693, 1
        %v695 = vpop.permute.xlu0 %694
        %v696 = vld [vmem:[%s691] sm:$0xff]
        %v697 = vld [vmem:[%s691] sm:$0xff]
        %698 = vrot.lane.b32.xlu0 %v697, 1
        %v699 = vpop.permute.xlu0 %698
        %v700 = vlaneseq
        %v701 = vand.u32 %v700, 127
        %vm702 = vcmp.eq.s32.totalorder %v701, 0
        %v703 = vsel %vm702, %v697, %v699
        %v704 = vlaneseq
        %v705 = vand.u32 %v704, 127
        %vm706 = vcmp.eq.s32.totalorder %v705, 1
        %v707 = vsel %vm706, %v695, %v703
        %v708 = vlaneseq
        %v709 = vand.u32 %v708, 127
        %vm710 = vcmp.ge.s32.totalorder %v709, 0
        %vm711 = vcmp.lt.s32.totalorder %v709, 8
        %vm712 = vmand %vm710, %vm711
        %v713 = vsel %vm712, %v707, 0.0
        %v714 = vld [vmem:[%s692] sm:$0xff]
        %715 = vrot.lane.b32.xlu0 %v714, 127
        %v716 = vpop.permute.xlu0 %715
        %v717 = vlaneseq
        %v718 = vand.u32 %v717, 127
        %vm719 = vcmp.eq.s32.totalorder %v718, 7
        %v720 = vsel %vm719, %v696, %v716
        %721 = vst [vmem:[%s691] sm:$0xff] %v713
        %722 = vst [vmem:[%s692] sm:$0xff] %v720
        %s723 = smov [#allocation15]
        %s724 = smov [#allocation17]
        %v725 = vld [vmem:[%s723] ss:$0 sm:$0xff]
        %s727 = scalar_lea.vmem %s723, 4294967295
        %v728 = vld [vmem:[%s727] sm:$0xfe]
        %v729 = vlaneseq
        %v730 = vshrl.u32 %v729, 7
        %vm731 = vcmp.eq.s32.totalorder %v730, 0
        %v732 = vsel %vm731, %v725, %v728
        %s733 = scalar_lea.vmem %s723, 7
        %v734 = vld [vmem:[%s733] ss:$0 sm:$0xff]
        %735 = vst [vmem:[%s723] sm:$0xff] %v732
        %v736 = vld [vmem:[%s724] ss:$0 sm:$0xff]
        %s737 = scalar_lea.vmem %s723, 1
        %738 = vst [vmem:[%s737] sm:$0x1] %v736
        %s739 = scalar_lea.vmem %s724, 1
        %v740 = vld [vmem:[%s739] sm:$0x7f]
        %v741 = vlaneseq
        %v742 = vshrl.u32 %v741, 7
        %vm743 = vcmp.eq.s32.totalorder %v742, 7
        %v744 = vsel %vm743, %v734, %v740
        %v745 = vld [vmem:[%s724] ss:$0 sm:$0xff]
        %746 = vst [vmem:[%s724] sm:$0xff] %v744
        %s747 = smov [#allocation16]
        %s748 = smov [#allocation18]
        %v749 = vld [vmem:[%s747] ss:$0 sm:$0xff]
        %s751 = scalar_lea.vmem %s747, 4294967295
        %v752 = vld [vmem:[%s751] sm:$0xfe]
        %v753 = vlaneseq
        %v754 = vshrl.u32 %v753, 7
        %vm755 = vcmp.eq.s32.totalorder %v754, 0
        %v756 = vsel %vm755, %v749, %v752
        %s757 = scalar_lea.vmem %s747, 7
        %v758 = vld [vmem:[%s757] ss:$0 sm:$0xff]
        %759 = vst [vmem:[%s747] sm:$0xff] %v756
        %v760 = vld [vmem:[%s748] ss:$0 sm:$0xff]
        %s761 = scalar_lea.vmem %s747, 1
        %762 = vst [vmem:[%s761] sm:$0x1] %v760
        %s763 = scalar_lea.vmem %s748, 1
        %v764 = vld [vmem:[%s763] sm:$0x7f]
        %v765 = vlaneseq
        %v766 = vshrl.u32 %v765, 7
        %vm767 = vcmp.eq.s32.totalorder %v766, 7
        %v768 = vsel %vm767, %v758, %v764
        %v769 = vld [vmem:[%s748] ss:$0 sm:$0xff]
        %770 = vst [vmem:[%s748] sm:$0xff] %v768
        %s771 = smov [#allocation26]
        %v772 = vld [vmem:[%s771] sm:$0xff]
        %s773 = smov [#allocation27]
        %v774 = vld [vmem:[%s773] sm:$0xff]
        %s775 = smov [#allocation8]
        %s776 = smov [#allocation10]
        %s777 = smov [#allocation12]
        %s778 = smov [#allocation13]
        %v779 = vld [vmem:[%s775] sm:$0xff]
        %v780 = vld [vmem:[%s776] sm:$0xff]
        %v781 = vld [vmem:[%s777] sm:$0xff]
        %v782 = vld [vmem:[%s778] sm:$0xff]
        %v783 = vmul.f32 %v772, %v779
        %v784 = vmul.f32 %v774, %v781
        %v785 = vsub.f32 %v783, %v784
        %v786 = vmul.f32 %v772, %v780
        %v787 = vmul.f32 %v774, %v782
        %v788 = vsub.f32 %v786, %v787
        %v789 = vmul.f32 %v774, %v779
        %v790 = vmul.f32 %v772, %v781
        %v791 = vadd.f32 %v789, %v790
        %v792 = vmul.f32 %v774, %v780
        %v793 = vmul.f32 %v772, %v782
        %v794 = vadd.f32 %v792, %v793
        %795 = vst [vmem:[%s775] sm:$0xff] %v785
        %796 = vst [vmem:[%s776] sm:$0xff] %v788
        %797 = vst [vmem:[%s777] sm:$0xff] %v791
        %798 = vst [vmem:[%s778] sm:$0xff] %v794
        %s799 = smov [#allocation8]
        %s800 = smov [#allocation12]
        %v801 = vld [vmem:[%s799] ss:$0 sm:$0xff]
        %s803 = scalar_lea.vmem %s799, 4294967295
        %v804 = vld [vmem:[%s803] sm:$0xfe]
        %v805 = vlaneseq
        %v806 = vshrl.u32 %v805, 7
        %vm807 = vcmp.eq.s32.totalorder %v806, 0
        %v808 = vsel %vm807, %v801, %v804
        %s809 = scalar_lea.vmem %s799, 7
        %v810 = vld [vmem:[%s809] ss:$0 sm:$0xff]
        %811 = vst [vmem:[%s799] sm:$0xff] %v808
        %v812 = vld [vmem:[%s800] ss:$0 sm:$0xff]
        %s813 = scalar_lea.vmem %s799, 1
        %814 = vst [vmem:[%s813] sm:$0x1] %v812
        %s815 = scalar_lea.vmem %s800, 1
        %v816 = vld [vmem:[%s815] sm:$0x7f]
        %v817 = vlaneseq
        %v818 = vshrl.u32 %v817, 7
        %vm819 = vcmp.eq.s32.totalorder %v818, 7
        %v820 = vsel %vm819, %v810, %v816
        %v821 = vld [vmem:[%s800] ss:$0 sm:$0xff]
        %822 = vst [vmem:[%s800] sm:$0xff] %v820
        %s823 = smov [#allocation10]
        %s824 = smov [#allocation13]
        %v825 = vld [vmem:[%s823] ss:$0 sm:$0xff]
        %s827 = scalar_lea.vmem %s823, 4294967295
        %v828 = vld [vmem:[%s827] sm:$0xfe]
        %v829 = vlaneseq
        %v830 = vshrl.u32 %v829, 7
        %vm831 = vcmp.eq.s32.totalorder %v830, 0
        %v832 = vsel %vm831, %v825, %v828
        %s833 = scalar_lea.vmem %s823, 7
        %v834 = vld [vmem:[%s833] ss:$0 sm:$0xff]
        %835 = vst [vmem:[%s823] sm:$0xff] %v832
        %v836 = vld [vmem:[%s824] ss:$0 sm:$0xff]
        %s837 = scalar_lea.vmem %s823, 1
        %838 = vst [vmem:[%s837] sm:$0x1] %v836
        %s839 = scalar_lea.vmem %s824, 1
        %v840 = vld [vmem:[%s839] sm:$0x7f]
        %v841 = vlaneseq
        %v842 = vshrl.u32 %v841, 7
        %vm843 = vcmp.eq.s32.totalorder %v842, 7
        %v844 = vsel %vm843, %v834, %v840
        %v845 = vld [vmem:[%s824] ss:$0 sm:$0xff]
        %846 = vst [vmem:[%s824] sm:$0xff] %v844
      $region101: #{custom-call.26} parent=93 // loop_footer
        %s407 = sadd.s32 1, %s403
      $region102: #{custom-call.26} parent=93 // loop_footer_branch
        %402 = sbr.rel target = $region98
      $region103: #{custom-call.26} parent=93 // loop_exit
        _
      %s847 = sadd.s32 %s305, 1
    $region94: #{custom-call.26} parent=1 // loop_footer
      _
    $region95: #{custom-call.26} parent=1 // loop_footer_branch
      %304 = sbr.rel target = $region91
    $region96: #{custom-call.26} parent=1 // loop_exit
      _
    %s850 = smov [#allocation15]
    %s851 = smov [#allocation4]
    %v852 = vlaneseq
    %v853 = vand.u32 %v852, 127
    %v854 = vmov %v853
    %v855 = vlaneseq
    %v856 = vshrl.u32 %v855, 7
    %v857 = vmov %v856
    %v858 = vld [vmem:[%s850] sm:$0xff]
    %vm861 = vcmp.eq.s32.totalorder %v857, %v854
    %v862 = vsel %vm861, %v858, 0.0
    %v863 = vrot.slane %v862, 4
    %v864 = vadd.f32 %v862, %v863
    %v865 = vrot.slane %v864, 2
    %v866 = vadd.f32 %v864, %v865
    %v867 = vrot.slane %v866, 1
    %v868 = vadd.f32 %v866, %v867
    %869 = vst [vmem:[%s851] sm:$0x1] %v868
    %s870 = smov [#allocation18]
    %s871 = smov [#allocation6]
    %v872 = vlaneseq
    %v873 = vand.u32 %v872, 127
    %v874 = vmov %v873
    %v875 = vlaneseq
    %v876 = vshrl.u32 %v875, 7
    %v877 = vmov %v876
    %v878 = vld [vmem:[%s870] sm:$0xff]
    %vm881 = vcmp.eq.s32.totalorder %v877, %v874
    %v882 = vsel %vm881, %v878, 0.0
    %v883 = vrot.slane %v882, 4
    %v884 = vadd.f32 %v882, %v883
    %v885 = vrot.slane %v884, 2
    %v886 = vadd.f32 %v884, %v885
    %v887 = vrot.slane %v886, 1
    %v888 = vadd.f32 %v886, %v887
    %889 = vst [vmem:[%s871] sm:$0x1] %v888
    %s891 = sshllo.u32 0, 1
    %v893 = vld [vmem:[#allocation4] sm:%s891]
    %s894 = sshllo.u32 0, 1
    %895 = vst [vmem:[#allocation5] sm:%s894] %v893
    %s897 = sshllo.u32 0, 1
    %v899 = vld [vmem:[#allocation6] sm:%s897]
    %s900 = sshllo.u32 0, 1
    %901 = vst [vmem:[#allocation7] sm:%s900] %v899
    // Predicated region
    $region104: #{custom-call.26} parent=1 // pred_check
      _
    $region105: #{custom-call.26} parent=1 // pred_check_branch
      %903 = sbr.rel (0) target = $region107
    $region106: #{custom-call.26} parent=1 // pred_region
      %p905 = scmp.gt.s32.totalorder 1, 0
      // Predicated region
      $region108: #{custom-call.26} parent=106 // pred_check
        %p906 = pneg %p905
      $region109: #{custom-call.26} parent=106 // pred_check_branch
        %908 = sbr.rel (%p906) target = $region111
      $region110: #{custom-call.26} parent=106 // pred_region
        %s909 = sshra.s32 1, 3
        %p910 = scmp.gt.s32.totalorder %s909, 0
        // Predicated region
        $region112: #{custom-call.26} parent=110 // pred_check
          %p911 = pneg %p910
        $region113: #{custom-call.26} parent=110 // pred_check_branch
          %913 = sbr.rel (%p911) target = $region115
        $region114: #{custom-call.26} parent=110 // pred_region
          %s914 = ssub.s32 %s909, 1
          %s915 = smul.u32 %s914, 128
          %s916 = sshra.s32 %s915, 4
          %s917 = scalar_lea.vmem [#allocation5], %s916
          %v918 = vld [vmem:[#allocation5] sm:$0xff]
          // While loop
          $region116: #{custom-call.26} parent=114 // loop_pre_header
            _
          $region117: #{custom-call.26} parent=114 // loop_header
            %s919 = sphi [#allocation5], %s941
            %s920 = sphi %s4, %s942
            %v921 = vphi %v918, %v943
            %s922 = ssub.s32 %s917, 64
            %p923 = scmp.gt.s32.totalorder %s919, %s922
          $region118: #{custom-call.26} parent=114 // loop_header_branch
            %925 = sbr.rel (%p923) target = $region122
          $region119: #{custom-call.26} parent=114 // loop_body
            %926 = vst [vmem:[%s920] sm:$0xff] %v921
            %v927 = vld [vmem:[%s919 + $0x8] sm:$0xff]
            %928 = vst [vmem:[%s920 + $0x8] sm:$0xff] %v927
            %v929 = vld [vmem:[%s919 + $0x10] sm:$0xff]
            %930 = vst [vmem:[%s920 + $0x10] sm:$0xff] %v929
            %v931 = vld [vmem:[%s919 + $0x18] sm:$0xff]
            %932 = vst [vmem:[%s920 + $0x18] sm:$0xff] %v931
            %v933 = vld [vmem:[%s919 + $0x20] sm:$0xff]
            %934 = vst [vmem:[%s920 + $0x20] sm:$0xff] %v933
            %v935 = vld [vmem:[%s919 + $0x28] sm:$0xff]
            %936 = vst [vmem:[%s920 + $0x28] sm:$0xff] %v935
            %v937 = vld [vmem:[%s919 + $0x30] sm:$0xff]
            %938 = vst [vmem:[%s920 + $0x30] sm:$0xff] %v937
            %v939 = vld [vmem:[%s919 + $0x38] sm:$0xff]
            %940 = vst [vmem:[%s920 + $0x38] sm:$0xff] %v939
          $region120: #{custom-call.26} parent=114 // loop_footer
            %s941 = scalar_lea.vmem %s919, 64
            %s942 = scalar_lea.vmem %s920, 64
            %v943 = vld [vmem:[%s919 + $0x40] sm:$0xff]
          $region121: #{custom-call.26} parent=114 // loop_footer_branch
            %944 = sbr.rel target = $region117
          $region122: #{custom-call.26} parent=114 // loop_exit
            _
          // While loop
          $region123: #{custom-call.26} parent=114 // loop_pre_header
            _
          $region124: #{custom-call.26} parent=114 // loop_header
            %s945 = sphi %s919, %s953
            %s946 = sphi %s920, %s954
            %v947 = vphi %v921, %v947
            %p948 = scmp.gt.s32.totalorder %s945, %s917
          $region125: #{custom-call.26} parent=114 // loop_header_branch
            %950 = sbr.rel (%p948) target = $region129
          $region126: #{custom-call.26} parent=114 // loop_body
            %v951 = vld [vmem:[%s945] sm:$0xff]
            %952 = vst [vmem:[%s946] sm:$0xff] %v951
          $region127: #{custom-call.26} parent=114 // loop_footer
            %s953 = scalar_lea.vmem %s945, 8
            %s954 = scalar_lea.vmem %s946, 8
          $region128: #{custom-call.26} parent=114 // loop_footer_branch
            %955 = sbr.rel target = $region124
          $region129: #{custom-call.26} parent=114 // loop_exit
            _
        $region115: #{custom-call.26} parent=110 // pred_fallthru
          _
        %s956 = sand.u32 1, 7
        %s957 = sshllo.u32 0, %s956
        %s958 = smul.u32 %s909, 128
        %s959 = sshra.s32 %s958, 4
        %s960 = scalar_lea.vmem %s4, %s959
        %s961 = smul.u32 %s909, 128
        %s962 = sshra.s32 %s961, 4
        %s963 = scalar_lea.vmem [#allocation5], %s962
        %v964 = vld [vmem:[%s963] sm:%s957]
        %965 = vst [vmem:[%s960] sm:%s957] %v964
      $region111: #{custom-call.26} parent=106 // pred_fallthru
        _
    $region107: #{custom-call.26} parent=1 // pred_fallthru
      _
    // Predicated region
    $region130: #{custom-call.26} parent=1 // pred_check
      _
    $region131: #{custom-call.26} parent=1 // pred_check_branch
      %967 = sbr.rel (0) target = $region133
    $region132: #{custom-call.26} parent=1 // pred_region
      %p969 = scmp.gt.s32.totalorder 1, 0
      // Predicated region
      $region134: #{custom-call.26} parent=132 // pred_check
        %p970 = pneg %p969
      $region135: #{custom-call.26} parent=132 // pred_check_branch
        %972 = sbr.rel (%p970) target = $region137
      $region136: #{custom-call.26} parent=132 // pred_region
        %s973 = sshra.s32 1, 3
        %p974 = scmp.gt.s32.totalorder %s973, 0
        // Predicated region
        $region138: #{custom-call.26} parent=136 // pred_check
          %p975 = pneg %p974
        $region139: #{custom-call.26} parent=136 // pred_check_branch
          %977 = sbr.rel (%p975) target = $region141
        $region140: #{custom-call.26} parent=136 // pred_region
          %s978 = ssub.s32 %s973, 1
          %s979 = smul.u32 %s978, 128
          %s980 = sshra.s32 %s979, 4
          %s981 = scalar_lea.vmem [#allocation7], %s980
          %v982 = vld [vmem:[#allocation7] sm:$0xff]
          // While loop
          $region142: #{custom-call.26} parent=140 // loop_pre_header
            _
          $region143: #{custom-call.26} parent=140 // loop_header
            %s983 = sphi [#allocation7], %s1005
            %s984 = sphi %s5, %s1006
            %v985 = vphi %v982, %v1007
            %s986 = ssub.s32 %s981, 64
            %p987 = scmp.gt.s32.totalorder %s983, %s986
          $region144: #{custom-call.26} parent=140 // loop_header_branch
            %989 = sbr.rel (%p987) target = $region148
          $region145: #{custom-call.26} parent=140 // loop_body
            %990 = vst [vmem:[%s984] sm:$0xff] %v985
            %v991 = vld [vmem:[%s983 + $0x8] sm:$0xff]
            %992 = vst [vmem:[%s984 + $0x8] sm:$0xff] %v991
            %v993 = vld [vmem:[%s983 + $0x10] sm:$0xff]
            %994 = vst [vmem:[%s984 + $0x10] sm:$0xff] %v993
            %v995 = vld [vmem:[%s983 + $0x18] sm:$0xff]
            %996 = vst [vmem:[%s984 + $0x18] sm:$0xff] %v995
            %v997 = vld [vmem:[%s983 + $0x20] sm:$0xff]
            %998 = vst [vmem:[%s984 + $0x20] sm:$0xff] %v997
            %v999 = vld [vmem:[%s983 + $0x28] sm:$0xff]
            %1000 = vst [vmem:[%s984 + $0x28] sm:$0xff] %v999
            %v1001 = vld [vmem:[%s983 + $0x30] sm:$0xff]
            %1002 = vst [vmem:[%s984 + $0x30] sm:$0xff] %v1001
            %v1003 = vld [vmem:[%s983 + $0x38] sm:$0xff]
            %1004 = vst [vmem:[%s984 + $0x38] sm:$0xff] %v1003
          $region146: #{custom-call.26} parent=140 // loop_footer
            %s1005 = scalar_lea.vmem %s983, 64
            %s1006 = scalar_lea.vmem %s984, 64
            %v1007 = vld [vmem:[%s983 + $0x40] sm:$0xff]
          $region147: #{custom-call.26} parent=140 // loop_footer_branch
            %1008 = sbr.rel target = $region143
          $region148: #{custom-call.26} parent=140 // loop_exit
            _
          // While loop
          $region149: #{custom-call.26} parent=140 // loop_pre_header
            _
          $region150: #{custom-call.26} parent=140 // loop_header
            %s1009 = sphi %s983, %s1017
            %s1010 = sphi %s984, %s1018
            %v1011 = vphi %v985, %v1011
            %p1012 = scmp.gt.s32.totalorder %s1009, %s981
          $region151: #{custom-call.26} parent=140 // loop_header_branch
            %1014 = sbr.rel (%p1012) target = $region155
          $region152: #{custom-call.26} parent=140 // loop_body
            %v1015 = vld [vmem:[%s1009] sm:$0xff]
            %1016 = vst [vmem:[%s1010] sm:$0xff] %v1015
          $region153: #{custom-call.26} parent=140 // loop_footer
            %s1017 = scalar_lea.vmem %s1009, 8
            %s1018 = scalar_lea.vmem %s1010, 8
          $region154: #{custom-call.26} parent=140 // loop_footer_branch
            %1019 = sbr.rel target = $region150
          $region155: #{custom-call.26} parent=140 // loop_exit
            _
        $region141: #{custom-call.26} parent=136 // pred_fallthru
          _
        %s1020 = sand.u32 1, 7
        %s1021 = sshllo.u32 0, %s1020
        %s1022 = smul.u32 %s973, 128
        %s1023 = sshra.s32 %s1022, 4
        %s1024 = scalar_lea.vmem %s5, %s1023
        %s1025 = smul.u32 %s973, 128
        %s1026 = sshra.s32 %s1025, 4
        %s1027 = scalar_lea.vmem [#allocation7], %s1026
        %v1028 = vld [vmem:[%s1027] sm:%s1021]
        %1029 = vst [vmem:[%s1024] sm:%s1021] %v1028
      $region137: #{custom-call.26} parent=132 // pred_fallthru
        _
    $region133: #{custom-call.26} parent=1 // pred_fallthru
      _
    %s1031 = ssub.s32 128, 128
    %1032 = vsyncadd [#allocation9], %s1031
    %s1033 = sshll.u32 [#allocation8], 4
    %s1034 = int_to_ptr.vmem [resolvable:$true] %s1033
    %1036 = dma.vmem_to_hbm [thread:$0]  %s1034, 128, %s6, [#allocation9]
    %s1038 = ssub.s32 128, 128
    %1039 = vsyncadd [#allocation11], %s1038
    %s1040 = sshll.u32 [#allocation10], 4
    %s1041 = int_to_ptr.vmem [resolvable:$true] %s1040
    %1043 = dma.vmem_to_hbm [thread:$0]  %s1041, 128, %s7, [#allocation11]
    %s1045 = ssub.s32 128, 128
    %1046 = vsyncadd [#allocation11], %s1045
    %s1047 = sshll.u32 [#allocation12], 4
    %s1048 = int_to_ptr.vmem [resolvable:$true] %s1047
    %1050 = dma.vmem_to_hbm [thread:$0]  %s1048, 128, %s8, [#allocation11]
    %s1052 = ssub.s32 128, 128
    %1053 = vsyncadd [#allocation14], %s1052
    %s1054 = sshll.u32 [#allocation13], 4
    %s1055 = int_to_ptr.vmem [resolvable:$true] %s1054
    %1057 = dma.vmem_to_hbm [thread:$0]  %s1055, 128, %s9, [#allocation14]
    // Predicated region
    $region156: #{custom-call.26} parent=1 // pred_check
      _
    $region157: #{custom-call.26} parent=1 // pred_check_branch
      %1059 = sbr.rel (0) target = $region159
    $region158: #{custom-call.26} parent=1 // pred_region
      _
    $region159: #{custom-call.26} parent=1 // pred_fallthru
      _
    // Predicated region
    $region160: #{custom-call.26} parent=1 // pred_check
      _
    $region161: #{custom-call.26} parent=1 // pred_check_branch
      %1061 = sbr.rel (0) target = $region163
    $region162: #{custom-call.26} parent=1 // pred_region
      _
    $region163: #{custom-call.26} parent=1 // pred_fallthru
      _
    %1062 = dma.done [#allocation9], 128
    %1063 = dma.done [#allocation11], 128
    %1064 = dma.done [#allocation11], 128
    %1065 = dma.done [#allocation14], 128
    %1066 = vsyncpa [#allocation9], 1
    %1067 = vsyncpa [#allocation11], 1
    %1068 = vsyncpa [#allocation14], 1

// kernel: nct_forward.4
$region0: #{nct_forward.4}
  #allocation0 [shape = 'u32[]', space=smem, size = 0x4, offset = 0x4, fixed_abs, tag = 'smem constant byte address 0x4 - core index']
  #allocation1 [shape = 'u32[144,128]{1,0:T(1,128)}', space=vmem, size = 0x12000, scoped, tag = 'internal scratch']
  %s0 = inlined_call_operand.vmem [shape: f32[16,32], index: 0, kind: input, shape index: {}]
  %s1 = inlined_call_operand.vmem [shape: f32[32,16], index: 1, kind: input, shape index: {}]
  %s2 = inlined_call_operand.vmem [shape: f32[32,16], index: 2, kind: input, shape index: {}]
  %s3 = inlined_call_operand.vmem [shape: f32[16,2], index: 3, kind: input, shape index: {}]
  %s4 = inlined_call_operand.vmem [shape: f32[16,2], index: 4, kind: input, shape index: {}]
  %s5 = inlined_call_operand.vmem [shape: f32[16,2], index: 5, kind: input, shape index: {}]
  %s6 = inlined_call_operand.vmem [shape: f32[16,2], index: 6, kind: input, shape index: {}]
  %s7 = inlined_call_operand.vmem [shape: f32[16,16], index: 7, kind: output, shape index: {0}]
  %s8 = inlined_call_operand.vmem [shape: f32[16,2], index: 8, kind: output, shape index: {1}]
  %9 = xla_tuple %s7, %s8
  %s10 = sld [smem:[#allocation0]]
  $region46: #{nct_forward.4} parent=0
    _
  %s12 = ssub.s32 1, %s10
  %s13 = scalar_select 0, %s12, %s10
  // Predicated region
  $region2: #{nct_forward.4} parent=0 // pred_check
    _
  $region3: #{nct_forward.4} parent=0 // pred_check_branch
    %15 = sbr.rel (0) target = $region5
  $region4: #{nct_forward.4} parent=0 // pred_region
    _
  $region5: #{nct_forward.4} parent=0 // pred_fallthru
    _
  // Predicated region
  $region6: #{nct_forward.4} parent=0 // pred_check
    _
  $region7: #{nct_forward.4} parent=0 // pred_check_branch
    %17 = sbr.rel (0) target = $region9
  $region8: #{nct_forward.4} parent=0 // pred_region
    _
  $region9: #{nct_forward.4} parent=0 // pred_fallthru
    _
  // Predicated region
  $region10: #{nct_forward.4} parent=0 // pred_check
    _
  $region11: #{nct_forward.4} parent=0 // pred_check_branch
    %19 = sbr.rel (0) target = $region13
  $region12: #{nct_forward.4} parent=0 // pred_region
    _
  $region13: #{nct_forward.4} parent=0 // pred_fallthru
    _
  // Predicated region
  $region14: #{nct_forward.4} parent=0 // pred_check
    _
  $region15: #{nct_forward.4} parent=0 // pred_check_branch
    %21 = sbr.rel (0) target = $region17
  $region16: #{nct_forward.4} parent=0 // pred_region
    _
  $region17: #{nct_forward.4} parent=0 // pred_fallthru
    _
  // Predicated region
  $region18: #{nct_forward.4} parent=0 // pred_check
    _
  $region19: #{nct_forward.4} parent=0 // pred_check_branch
    %23 = sbr.rel (0) target = $region21
  $region20: #{nct_forward.4} parent=0 // pred_region
    _
  $region21: #{nct_forward.4} parent=0 // pred_fallthru
    _
  // Predicated region
  $region22: #{nct_forward.4} parent=0 // pred_check
    _
  $region23: #{nct_forward.4} parent=0 // pred_check_branch
    %25 = sbr.rel (0) target = $region25
  $region24: #{nct_forward.4} parent=0 // pred_region
    _
  $region25: #{nct_forward.4} parent=0 // pred_fallthru
    _
  // Predicated region
  $region26: #{nct_forward.4} parent=0 // pred_check
    _
  $region27: #{nct_forward.4} parent=0 // pred_check_branch
    %27 = sbr.rel (0) target = $region29
  $region28: #{nct_forward.4} parent=0 // pred_region
    _
  $region29: #{nct_forward.4} parent=0 // pred_fallthru
    _
  %v28 = vld [vmem:[%s0] sm:$0xff]
  %v29 = vld [vmem:[%s0 + $0x8] sm:$0xff]
  %v30 = vld [vmem:[%s1] sm:$0xff]
  %v31 = vld [vmem:[%s1 + $0x8] sm:$0xff]
  %v32 = vld [vmem:[%s1 + $0x10] sm:$0xff]
  %v33 = vld [vmem:[%s1 + $0x18] sm:$0xff]
  %vm34 = vcmask 261120
  %v36 = vsel %vm34, %v28, 0
  %v39 = vsel %vm34, %v29, 0
  %41 = vmatprep.subr.mxu0 0.0
  %42 = vmatpush1.msra.mxu0 %v30
  %43 = vmatprep.subr.mxu0 0.0
  %44 = vmatpush1.msra.mxu0 %v31
  %45 = vmatprep.subr.mxu0 0.0
  %46 = vmatpush1.msra.mxu0 %v32
  %47 = vmatprep.subr.mxu0 0.0
  %48 = vmatpush1.msra.mxu0 %v33
  %49 = vmatprep.subr.mxu0 0.0
  %50 = vmatpush1.msra.mxu0 0.0
  %51 = vmatprep.subr.mxu0 0.0
  %52 = vmatpush1.msra.mxu0 0.0
  %53 = vmatprep.subr.mxu0 0.0
  %54 = vmatpush1.msra.mxu0 0.0
  %55 = vmatprep.subr.mxu0 0.0
  %56 = vmatpush1.msra.mxu0 0.0
  %57 = vmatprep.subr.mxu0 0.0
  %58 = vmatpush1.msra.mxu0 0.0
  %59 = vmatprep.subr.mxu0 0.0
  %60 = vmatpush1.msra.mxu0 0.0
  %61 = vmatprep.subr.mxu0 0.0
  %62 = vmatpush1.msra.mxu0 0.0
  %63 = vmatprep.subr.mxu0 0.0
  %64 = vmatpush1.msra.mxu0 0.0
  %65 = vmatprep.subr.mxu0 0.0
  %66 = vmatpush1.msra.mxu0 0.0
  %67 = vmatprep.subr.mxu0 0.0
  %68 = vmatpush1.msra.mxu0 0.0
  %69 = vmatprep.subr.mxu0 0.0
  %70 = vmatpush1.msra.mxu0 0.0
  %71 = vmatprep.subr.mxu0 0.0
  %72 = vmatpush1.msra.mxu0 0.0
  %73 = vmatprep.subr.mxu0 0.0
  %74 = vmatpush1.msra.mxu0 0.0
  %75 = vmatprep.subr.mxu0 0.0
  %76 = vmatpush1.msra.mxu0 0.0
  %77 = vmatprep.subr.mxu0 0.0
  %78 = vmatpush1.msra.mxu0 0.0
  %79 = vmatprep.subr.mxu0 0.0
  %80 = vmatpush1.msra.mxu0 0.0
  %81 = vmatprep.subr.mxu0 0.0
  %82 = vmatpush1.msra.mxu0 0.0
  %83 = vmatprep.subr.mxu0 0.0
  %84 = vmatpush1.msra.mxu0 0.0
  %85 = vmatprep.subr.mxu0 0.0
  %86 = vmatpush1.msra.mxu0 0.0
  %87 = vmatprep.subr.mxu0 0.0
  %88 = vmatpush1.msra.mxu0 0.0
  %89 = vmatprep.subr.mxu0 0.0
  %90 = vmatpush1.msra.mxu0 0.0
  %91 = vmatprep.subr.mxu0 0.0
  %92 = vmatpush1.msra.mxu0 0.0
  %93 = vmatprep.subr.mxu0 0.0
  %94 = vmatpush1.msra.mxu0 0.0
  %95 = vmatprep.subr.mxu0 0.0
  %96 = vmatpush1.msra.mxu0 0.0
  %97 = vmatprep.subr.mxu0 0.0
  %98 = vmatpush1.msra.mxu0 0.0
  %99 = vmatprep.subr.mxu0 0.0
  %100 = vmatpush1.msra.mxu0 0.0
  %101 = vmatprep.subr.mxu0 0.0
  %102 = vmatpush1.msra.mxu0 0.0
  %103 = vmatprep.subr.mxu0 0.0
  %104 = vmatpush1.msra.mxu0 0.0
  %105 = vmatprep.mubr.f32.mxu0 0.0
  %106 = vmatmul.mubr.f32.gmra.mrb[0].mxu0 %v36
  %v107 = vpop.f32.mrb[0].mxu0
  %v108 = vadd.f32 0.0, %v107
  %v109 = vpop.f32.mrb[0].mxu0
  %110 = vmatprep.mubr.f32.mxu0 0.0
  %111 = vmatmul.mubr.f32.gmra.mrb[0].mxu0 %v39
  %v112 = vpop.f32.mrb[0].mxu0
  %v113 = vadd.f32 0.0, %v112
  %v114 = vpop.f32.mrb[0].mxu0
  %115 = vdwg.mxu0
  %v116 = vld [vmem:[%s2] sm:$0xff]
  %v117 = vld [vmem:[%s2 + $0x8] sm:$0xff]
  %v118 = vld [vmem:[%s2 + $0x10] sm:$0xff]
  %v119 = vld [vmem:[%s2 + $0x18] sm:$0xff]
  %120 = vmatprep.subr.mxu0 0.0
  %121 = vmatpush1.msra.mxu0 %v116
  %122 = vmatprep.subr.mxu0 0.0
  %123 = vmatpush1.msra.mxu0 %v117
  %124 = vmatprep.subr.mxu0 0.0
  %125 = vmatpush1.msra.mxu0 %v118
  %126 = vmatprep.subr.mxu0 0.0
  %127 = vmatpush1.msra.mxu0 %v119
  %128 = vmatprep.subr.mxu0 0.0
  %129 = vmatpush1.msra.mxu0 0.0
  %130 = vmatprep.subr.mxu0 0.0
  %131 = vmatpush1.msra.mxu0 0.0
  %132 = vmatprep.subr.mxu0 0.0
  %133 = vmatpush1.msra.mxu0 0.0
  %134 = vmatprep.subr.mxu0 0.0
  %135 = vmatpush1.msra.mxu0 0.0
  %136 = vmatprep.subr.mxu0 0.0
  %137 = vmatpush1.msra.mxu0 0.0
  %138 = vmatprep.subr.mxu0 0.0
  %139 = vmatpush1.msra.mxu0 0.0
  %140 = vmatprep.subr.mxu0 0.0
  %141 = vmatpush1.msra.mxu0 0.0
  %142 = vmatprep.subr.mxu0 0.0
  %143 = vmatpush1.msra.mxu0 0.0
  %144 = vmatprep.subr.mxu0 0.0
  %145 = vmatpush1.msra.mxu0 0.0
  %146 = vmatprep.subr.mxu0 0.0
  %147 = vmatpush1.msra.mxu0 0.0
  %148 = vmatprep.subr.mxu0 0.0
  %149 = vmatpush1.msra.mxu0 0.0
  %150 = vmatprep.subr.mxu0 0.0
  %151 = vmatpush1.msra.mxu0 0.0
  %152 = vmatprep.subr.mxu0 0.0
  %153 = vmatpush1.msra.mxu0 0.0
  %154 = vmatprep.subr.mxu0 0.0
  %155 = vmatpush1.msra.mxu0 0.0
  %156 = vmatprep.subr.mxu0 0.0
  %157 = vmatpush1.msra.mxu0 0.0
  %158 = vmatprep.subr.mxu0 0.0
  %159 = vmatpush1.msra.mxu0 0.0
  %160 = vmatprep.subr.mxu0 0.0
  %161 = vmatpush1.msra.mxu0 0.0
  %162 = vmatprep.subr.mxu0 0.0
  %163 = vmatpush1.msra.mxu0 0.0
  %164 = vmatprep.subr.mxu0 0.0
  %165 = vmatpush1.msra.mxu0 0.0
  %166 = vmatprep.subr.mxu0 0.0
  %167 = vmatpush1.msra.mxu0 0.0
  %168 = vmatprep.subr.mxu0 0.0
  %169 = vmatpush1.msra.mxu0 0.0
  %170 = vmatprep.subr.mxu0 0.0
  %171 = vmatpush1.msra.mxu0 0.0
  %172 = vmatprep.subr.mxu0 0.0
  %173 = vmatpush1.msra.mxu0 0.0
  %174 = vmatprep.subr.mxu0 0.0
  %175 = vmatpush1.msra.mxu0 0.0
  %176 = vmatprep.subr.mxu0 0.0
  %177 = vmatpush1.msra.mxu0 0.0
  %178 = vmatprep.subr.mxu0 0.0
  %179 = vmatpush1.msra.mxu0 0.0
  %180 = vmatprep.subr.mxu0 0.0
  %181 = vmatpush1.msra.mxu0 0.0
  %182 = vmatprep.subr.mxu0 0.0
  %183 = vmatpush1.msra.mxu0 0.0
  %184 = vmatprep.mubr.f32.mxu0 0.0
  %185 = vmatmul.mubr.f32.gmra.mrb[0].mxu0 %v36
  %v186 = vpop.f32.mrb[0].mxu0
  %v187 = vadd.f32 0.0, %v186
  %v188 = vpop.f32.mrb[0].mxu0
  %189 = vmatprep.mubr.f32.mxu0 0.0
  %190 = vmatmul.mubr.f32.gmra.mrb[0].mxu0 %v39
  %v191 = vpop.f32.mrb[0].mxu0
  %v192 = vadd.f32 0.0, %v191
  %v193 = vpop.f32.mrb[0].mxu0
  %194 = vdwg.mxu0
  %vm195 = vcmask 130048
  %196 = vst.msk [vmem:[%s7] sm:$0xff] %vm195, %v187
  %197 = vst.msk [vmem:[%s7 + $0x8] sm:$0xff] %vm195, %v192
  %v198 = vlaneseq
  %v199 = vshrl.u32 %v198, 7
  %v200 = vadd.s32 %v199, 8
  %v201 = vlaneseq
  %v202 = vand.u32 %v201, 127
  %vm203 = vcmp.eq.s32.totalorder %v199, %v202
  %vm204 = vcmp.eq.s32.totalorder %v200, %v202
  %v205 = vsel %vm203, 1, 0
  %v206 = vsel %vm204, 1, 0
  %v207 = vcvt.s32.f32 %v205
  %v208 = vcvt.s32.f32 %v206
  %v209 = vld [vmem:[%s4] sm:$0xff]
  %v210 = vld [vmem:[%s4 + $0x8] sm:$0xff]
  %v211 = vld [vmem:[%s3] sm:$0xff]
  %v212 = vld [vmem:[%s3 + $0x8] sm:$0xff]
  %v214 = vsel %vm195, %v108, 0
  %v217 = vsel %vm195, %v113, 0
  %219 = vmatprep.subr.mxu0 0.0
  %220 = vmatpush1.msra.mxu0 %v211
  %221 = vmatprep.subr.mxu0 0.0
  %222 = vmatpush1.msra.mxu0 %v212
  %223 = vmatprep.subr.mxu0 0.0
  %224 = vmatpush1.msra.mxu0 0.0
  %225 = vmatprep.subr.mxu0 0.0
  %226 = vmatpush1.msra.mxu0 0.0
  %227 = vmatprep.subr.mxu0 0.0
  %228 = vmatpush1.msra.mxu0 0.0
  %229 = vmatprep.subr.mxu0 0.0
  %230 = vmatpush1.msra.mxu0 0.0
  %231 = vmatprep.subr.mxu0 0.0
  %232 = vmatpush1.msra.mxu0 0.0
  %233 = vmatprep.subr.mxu0 0.0
  %234 = vmatpush1.msra.mxu0 0.0
  %235 = vmatprep.subr.mxu0 0.0
  %236 = vmatpush1.msra.mxu0 0.0
  %237 = vmatprep.subr.mxu0 0.0
  %238 = vmatpush1.msra.mxu0 0.0
  %239 = vmatprep.subr.mxu0 0.0
  %240 = vmatpush1.msra.mxu0 0.0
  %241 = vmatprep.subr.mxu0 0.0
  %242 = vmatpush1.msra.mxu0 0.0
  %243 = vmatprep.subr.mxu0 0.0
  %244 = vmatpush1.msra.mxu0 0.0
  %245 = vmatprep.subr.mxu0 0.0
  %246 = vmatpush1.msra.mxu0 0.0
  %247 = vmatprep.subr.mxu0 0.0
  %248 = vmatpush1.msra.mxu0 0.0
  %249 = vmatprep.subr.mxu0 0.0
  %250 = vmatpush1.msra.mxu0 0.0
  %251 = vmatprep.subr.mxu0 0.0
  %252 = vmatpush1.msra.mxu0 0.0
  %253 = vmatprep.subr.mxu0 0.0
  %254 = vmatpush1.msra.mxu0 0.0
  %255 = vmatprep.subr.mxu0 0.0
  %256 = vmatpush1.msra.mxu0 0.0
  %257 = vmatprep.subr.mxu0 0.0
  %258 = vmatpush1.msra.mxu0 0.0
  %259 = vmatprep.subr.mxu0 0.0
  %260 = vmatpush1.msra.mxu0 0.0
  %261 = vmatprep.subr.mxu0 0.0
  %262 = vmatpush1.msra.mxu0 0.0
  %263 = vmatprep.subr.mxu0 0.0
  %264 = vmatpush1.msra.mxu0 0.0
  %265 = vmatprep.subr.mxu0 0.0
  %266 = vmatpush1.msra.mxu0 0.0
  %267 = vmatprep.subr.mxu0 0.0
  %268 = vmatpush1.msra.mxu0 0.0
  %269 = vmatprep.subr.mxu0 0.0
  %270 = vmatpush1.msra.mxu0 0.0
  %271 = vmatprep.subr.mxu0 0.0
  %272 = vmatpush1.msra.mxu0 0.0
  %273 = vmatprep.subr.mxu0 0.0
  %274 = vmatpush1.msra.mxu0 0.0
  %275 = vmatprep.subr.mxu0 0.0
  %276 = vmatpush1.msra.mxu0 0.0
  %277 = vmatprep.subr.mxu0 0.0
  %278 = vmatpush1.msra.mxu0 0.0
  %279 = vmatprep.subr.mxu0 0.0
  %280 = vmatpush1.msra.mxu0 0.0
  %281 = vmatprep.subr.mxu0 0.0
  %282 = vmatpush1.msra.mxu0 0.0
  %283 = vmatprep.mubr.f32.mxu0 0.0
  %284 = vmatmul.mubr.f32.gmra.mrb[0].mxu0 %v214
  %v285 = vpop.f32.mrb[0].mxu0
  %v286 = vadd.f32 0.0, %v285
  %v287 = vpop.f32.mrb[0].mxu0
  %288 = vmatprep.mubr.f32.mxu0 0.0
  %289 = vmatmul.mubr.f32.gmra.mrb[0].mxu0 %v217
  %v290 = vpop.f32.mrb[0].mxu0
  %v291 = vadd.f32 0.0, %v290
  %v292 = vpop.f32.mrb[0].mxu0
  %293 = vdwg.mxu0
  %v294 = vsub.f32 %v209, %v286
  %v295 = vsub.f32 %v210, %v291
  %v296 = vsub.f32 %v108, %v207
  %v297 = vsub.f32 %v113, %v208
  %v298 = vld [vmem:[%s5] sm:$0xff]
  %v299 = vld [vmem:[%s5 + $0x8] sm:$0xff]
  %v301 = vsel %vm195, %v296, 0
  %v304 = vsel %vm195, %v297, 0
  %306 = vmatprep.subr.mxu0 0.0
  %307 = vmatpush1.msra.mxu0 %v298
  %308 = vmatprep.subr.mxu0 0.0
  %309 = vmatpush1.msra.mxu0 %v299
  %310 = vmatprep.subr.mxu0 0.0
  %311 = vmatpush1.msra.mxu0 0.0
  %312 = vmatprep.subr.mxu0 0.0
  %313 = vmatpush1.msra.mxu0 0.0
  %314 = vmatprep.subr.mxu0 0.0
  %315 = vmatpush1.msra.mxu0 0.0
  %316 = vmatprep.subr.mxu0 0.0
  %317 = vmatpush1.msra.mxu0 0.0
  %318 = vmatprep.subr.mxu0 0.0
  %319 = vmatpush1.msra.mxu0 0.0
  %320 = vmatprep.subr.mxu0 0.0
  %321 = vmatpush1.msra.mxu0 0.0
  %322 = vmatprep.subr.mxu0 0.0
  %323 = vmatpush1.msra.mxu0 0.0
  %324 = vmatprep.subr.mxu0 0.0
  %325 = vmatpush1.msra.mxu0 0.0
  %326 = vmatprep.subr.mxu0 0.0
  %327 = vmatpush1.msra.mxu0 0.0
  %328 = vmatprep.subr.mxu0 0.0
  %329 = vmatpush1.msra.mxu0 0.0
  %330 = vmatprep.subr.mxu0 0.0
  %331 = vmatpush1.msra.mxu0 0.0
  %332 = vmatprep.subr.mxu0 0.0
  %333 = vmatpush1.msra.mxu0 0.0
  %334 = vmatprep.subr.mxu0 0.0
  %335 = vmatpush1.msra.mxu0 0.0
  %336 = vmatprep.subr.mxu0 0.0
  %337 = vmatpush1.msra.mxu0 0.0
  %338 = vmatprep.subr.mxu0 0.0
  %339 = vmatpush1.msra.mxu0 0.0
  %340 = vmatprep.subr.mxu0 0.0
  %341 = vmatpush1.msra.mxu0 0.0
  %342 = vmatprep.subr.mxu0 0.0
  %343 = vmatpush1.msra.mxu0 0.0
  %344 = vmatprep.subr.mxu0 0.0
  %345 = vmatpush1.msra.mxu0 0.0
  %346 = vmatprep.subr.mxu0 0.0
  %347 = vmatpush1.msra.mxu0 0.0
  %348 = vmatprep.subr.mxu0 0.0
  %349 = vmatpush1.msra.mxu0 0.0
  %350 = vmatprep.subr.mxu0 0.0
  %351 = vmatpush1.msra.mxu0 0.0
  %352 = vmatprep.subr.mxu0 0.0
  %353 = vmatpush1.msra.mxu0 0.0
  %354 = vmatprep.subr.mxu0 0.0
  %355 = vmatpush1.msra.mxu0 0.0
  %356 = vmatprep.subr.mxu0 0.0
  %357 = vmatpush1.msra.mxu0 0.0
  %358 = vmatprep.subr.mxu0 0.0
  %359 = vmatpush1.msra.mxu0 0.0
  %360 = vmatprep.subr.mxu0 0.0
  %361 = vmatpush1.msra.mxu0 0.0
  %362 = vmatprep.subr.mxu0 0.0
  %363 = vmatpush1.msra.mxu0 0.0
  %364 = vmatprep.subr.mxu0 0.0
  %365 = vmatpush1.msra.mxu0 0.0
  %366 = vmatprep.subr.mxu0 0.0
  %367 = vmatpush1.msra.mxu0 0.0
  %368 = vmatprep.subr.mxu0 0.0
  %369 = vmatpush1.msra.mxu0 0.0
  %370 = vmatprep.mubr.f32.mxu0 0.0
  %371 = vmatmul.mubr.f32.gmra.mrb[0].mxu0 %v301
  %v372 = vpop.f32.mrb[0].mxu0
  %v373 = vadd.f32 0.0, %v372
  %v374 = vpop.f32.mrb[0].mxu0
  %375 = vmatprep.mubr.f32.mxu0 0.0
  %376 = vmatmul.mubr.f32.gmra.mrb[0].mxu0 %v304
  %v377 = vpop.f32.mrb[0].mxu0
  %v378 = vadd.f32 0.0, %v377
  %v379 = vpop.f32.mrb[0].mxu0
  %380 = vdwg.mxu0
  %v381 = vsub.f32 %v294, %v373
  %v382 = vsub.f32 %v295, %v378
  %v383 = vld [vmem:[%s6] sm:$0xff]
  %v384 = vld [vmem:[%s6 + $0x8] sm:$0xff]
  %v386 = vsel %vm195, %v187, 0
  %v389 = vsel %vm195, %v192, 0
  %391 = vmatprep.subr.mxu0 0.0
  %392 = vmatpush1.msra.mxu0 %v383
  %393 = vmatprep.subr.mxu0 0.0
  %394 = vmatpush1.msra.mxu0 %v384
  %395 = vmatprep.subr.mxu0 0.0
  %396 = vmatpush1.msra.mxu0 0.0
  %397 = vmatprep.subr.mxu0 0.0
  %398 = vmatpush1.msra.mxu0 0.0
  %399 = vmatprep.subr.mxu0 0.0
  %400 = vmatpush1.msra.mxu0 0.0
  %401 = vmatprep.subr.mxu0 0.0
  %402 = vmatpush1.msra.mxu0 0.0
  %403 = vmatprep.subr.mxu0 0.0
  %404 = vmatpush1.msra.mxu0 0.0
  %405 = vmatprep.subr.mxu0 0.0
  %406 = vmatpush1.msra.mxu0 0.0
  %407 = vmatprep.subr.mxu0 0.0
  %408 = vmatpush1.msra.mxu0 0.0
  %409 = vmatprep.subr.mxu0 0.0
  %410 = vmatpush1.msra.mxu0 0.0
  %411 = vmatprep.subr.mxu0 0.0
  %412 = vmatpush1.msra.mxu0 0.0
  %413 = vmatprep.subr.mxu0 0.0
  %414 = vmatpush1.msra.mxu0 0.0
  %415 = vmatprep.subr.mxu0 0.0
  %416 = vmatpush1.msra.mxu0 0.0
  %417 = vmatprep.subr.mxu0 0.0
  %418 = vmatpush1.msra.mxu0 0.0
  %419 = vmatprep.subr.mxu0 0.0
  %420 = vmatpush1.msra.mxu0 0.0
  %421 = vmatprep.subr.mxu0 0.0
  %422 = vmatpush1.msra.mxu0 0.0
  %423 = vmatprep.subr.mxu0 0.0
  %424 = vmatpush1.msra.mxu0 0.0
  %425 = vmatprep.subr.mxu0 0.0
  %426 = vmatpush1.msra.mxu0 0.0
  %427 = vmatprep.subr.mxu0 0.0
  %428 = vmatpush1.msra.mxu0 0.0
  %429 = vmatprep.subr.mxu0 0.0
  %430 = vmatpush1.msra.mxu0 0.0
  %431 = vmatprep.subr.mxu0 0.0
  %432 = vmatpush1.msra.mxu0 0.0
  %433 = vmatprep.subr.mxu0 0.0
  %434 = vmatpush1.msra.mxu0 0.0
  %435 = vmatprep.subr.mxu0 0.0
  %436 = vmatpush1.msra.mxu0 0.0
  %437 = vmatprep.subr.mxu0 0.0
  %438 = vmatpush1.msra.mxu0 0.0
  %439 = vmatprep.subr.mxu0 0.0
  %440 = vmatpush1.msra.mxu0 0.0
  %441 = vmatprep.subr.mxu0 0.0
  %442 = vmatpush1.msra.mxu0 0.0
  %443 = vmatprep.subr.mxu0 0.0
  %444 = vmatpush1.msra.mxu0 0.0
  %445 = vmatprep.subr.mxu0 0.0
  %446 = vmatpush1.msra.mxu0 0.0
  %447 = vmatprep.subr.mxu0 0.0
  %448 = vmatpush1.msra.mxu0 0.0
  %449 = vmatprep.subr.mxu0 0.0
  %450 = vmatpush1.msra.mxu0 0.0
  %451 = vmatprep.subr.mxu0 0.0
  %452 = vmatpush1.msra.mxu0 0.0
  %453 = vmatprep.subr.mxu0 0.0
  %454 = vmatpush1.msra.mxu0 0.0
  %455 = vmatprep.mubr.f32.mxu0 0.0
  %456 = vmatmul.mubr.f32.gmra.mrb[0].mxu0 %v386
  %v457 = vpop.f32.mrb[0].mxu0
  %v458 = vadd.f32 0.0, %v457
  %v459 = vpop.f32.mrb[0].mxu0
  %460 = vmatprep.mubr.f32.mxu0 0.0
  %461 = vmatmul.mubr.f32.gmra.mrb[0].mxu0 %v389
  %v462 = vpop.f32.mrb[0].mxu0
  %v463 = vadd.f32 0.0, %v462
  %v464 = vpop.f32.mrb[0].mxu0
  %465 = vdwg.mxu0
  %v466 = vsub.f32 %v381, %v458
  %v467 = vsub.f32 %v382, %v463
  %vm468 = vcmask 15360
  %469 = vst.msk [vmem:[%s8] sm:$0xff] %vm468, %v466
  %470 = vst.msk [vmem:[%s8 + $0x8] sm:$0xff] %vm468, %v467
  // Predicated region
  $region30: #{nct_forward.4} parent=0 // pred_check
    _
  $region31: #{nct_forward.4} parent=0 // pred_check_branch
    %472 = sbr.rel (0) target = $region33
  $region32: #{nct_forward.4} parent=0 // pred_region
    _
  $region33: #{nct_forward.4} parent=0 // pred_fallthru
    _
  // Predicated region
  $region34: #{nct_forward.4} parent=0 // pred_check
    _
  $region35: #{nct_forward.4} parent=0 // pred_check_branch
    %474 = sbr.rel (0) target = $region37
  $region36: #{nct_forward.4} parent=0 // pred_region
    _
  $region37: #{nct_forward.4} parent=0 // pred_fallthru
    _
  // Predicated region
  $region38: #{nct_forward.4} parent=0 // pred_check
    _
  $region39: #{nct_forward.4} parent=0 // pred_check_branch
    %476 = sbr.rel (0) target = $region41
  $region40: #{nct_forward.4} parent=0 // pred_region
    _
  $region41: #{nct_forward.4} parent=0 // pred_fallthru
    _
  // Predicated region
  $region42: #{nct_forward.4} parent=0 // pred_check
    _
  $region43: #{nct_forward.4} parent=0 // pred_check_branch
    %478 = sbr.rel (0) target = $region45
  $region44: #{nct_forward.4} parent=0 // pred_region
    _
  $region45: #{nct_forward.4} parent=0 // pred_fallthru
    _

// kernel: nct_forward.5
$region0: #{nct_forward.5}
  #allocation0 [shape = 'u32[]', space=smem, size = 0x4, offset = 0x4, fixed_abs, tag = 'smem constant byte address 0x4 - core index']
  #allocation1 [shape = 'u32[144,128]{1,0:T(1,128)}', space=vmem, size = 0x12000, scoped, tag = 'internal scratch']
  %s0 = inlined_call_operand.vmem [shape: f32[16,16], index: 0, kind: input, shape index: {}]
  %s1 = inlined_call_operand.vmem [shape: f32[16,16], index: 1, kind: input, shape index: {}]
  %s2 = inlined_call_operand.vmem [shape: f32[16,2], index: 2, kind: input, shape index: {}]
  %s3 = inlined_call_operand.vmem [shape: f32[16,2], index: 3, kind: input, shape index: {}]
  %s4 = inlined_call_operand.vmem [shape: f32[16,2], index: 4, kind: input, shape index: {}]
  %s5 = inlined_call_operand.vmem [shape: f32[16,2], index: 5, kind: input, shape index: {}]
  %s6 = inlined_call_operand.vmem [shape: f32[16,2], index: 6, kind: input, shape index: {}]
  %s7 = inlined_call_operand.hbm [shape: f32[1,1], index: 7, kind: output, shape index: {}]
  %s8 = sld [smem:[#allocation0]]
  $region38: #{nct_forward.5} parent=0
    _
  %s10 = ssub.s32 1, %s8
  %s11 = scalar_select 0, %s10, %s8
  $region1: #{nct_forward.5} parent=0
    #allocation2 [shape = 'u8[512]{0}', space=vmem, size = 0x400, scoped, tag = 'output window, operand 0, single buffered']
    #allocation3 [shape = 's32[1]{0}', space=sflag, size = 0x4, scoped, tag = 'scoped memory for nct_forward.5']
    %12 = vsyncpa [#allocation3], 0
    // Predicated region
    $region2: #{nct_forward.5} parent=1 // pred_check
      _
    $region3: #{nct_forward.5} parent=1 // pred_check_branch
      %14 = sbr.rel (0) target = $region5
    $region4: #{nct_forward.5} parent=1 // pred_region
      _
    $region5: #{nct_forward.5} parent=1 // pred_fallthru
      _
    // Predicated region
    $region6: #{nct_forward.5} parent=1 // pred_check
      _
    $region7: #{nct_forward.5} parent=1 // pred_check_branch
      %16 = sbr.rel (0) target = $region9
    $region8: #{nct_forward.5} parent=1 // pred_region
      _
    $region9: #{nct_forward.5} parent=1 // pred_fallthru
      _
    // Predicated region
    $region10: #{nct_forward.5} parent=1 // pred_check
      _
    $region11: #{nct_forward.5} parent=1 // pred_check_branch
      %18 = sbr.rel (0) target = $region13
    $region12: #{nct_forward.5} parent=1 // pred_region
      _
    $region13: #{nct_forward.5} parent=1 // pred_fallthru
      _
    // Predicated region
    $region14: #{nct_forward.5} parent=1 // pred_check
      _
    $region15: #{nct_forward.5} parent=1 // pred_check_branch
      %20 = sbr.rel (0) target = $region17
    $region16: #{nct_forward.5} parent=1 // pred_region
      _
    $region17: #{nct_forward.5} parent=1 // pred_fallthru
      _
    // Predicated region
    $region18: #{nct_forward.5} parent=1 // pred_check
      _
    $region19: #{nct_forward.5} parent=1 // pred_check_branch
      %22 = sbr.rel (0) target = $region21
    $region20: #{nct_forward.5} parent=1 // pred_region
      _
    $region21: #{nct_forward.5} parent=1 // pred_fallthru
      _
    // Predicated region
    $region22: #{nct_forward.5} parent=1 // pred_check
      _
    $region23: #{nct_forward.5} parent=1 // pred_check_branch
      %24 = sbr.rel (0) target = $region25
    $region24: #{nct_forward.5} parent=1 // pred_region
      _
    $region25: #{nct_forward.5} parent=1 // pred_fallthru
      _
    // Predicated region
    $region26: #{nct_forward.5} parent=1 // pred_check
      _
    $region27: #{nct_forward.5} parent=1 // pred_check_branch
      %26 = sbr.rel (0) target = $region29
    $region28: #{nct_forward.5} parent=1 // pred_region
      _
    $region29: #{nct_forward.5} parent=1 // pred_fallthru
      _
    %v27 = vld [vmem:[%s0] sm:$0xff]
    %v28 = vld [vmem:[%s0 + $0x8] sm:$0xff]
    %v29 = vld [vmem:[%s1] sm:$0xff]
    %v30 = vld [vmem:[%s1 + $0x8] sm:$0xff]
    %v31 = vlaneseq
    %v32 = vshrl.u32 %v31, 7
    %v33 = vadd.s32 %v32, 8
    %v34 = vlaneseq
    %v35 = vand.u32 %v34, 127
    %vm36 = vcmp.eq.s32.totalorder %v32, %v35
    %vm37 = vcmp.eq.s32.totalorder %v33, %v35
    %v38 = vsel %vm36, 1, 0
    %v39 = vsel %vm37, 1, 0
    %v40 = vcvt.s32.f32 %v38
    %v41 = vcvt.s32.f32 %v39
    %v42 = vld [vmem:[%s2] sm:$0xff]
    %v43 = vld [vmem:[%s2 + $0x8] sm:$0xff]
    %v44 = vld [vmem:[%s3] sm:$0xff]
    %v45 = vld [vmem:[%s3 + $0x8] sm:$0xff]
    %vm46 = vcmask 130048
    %v48 = vsel %vm46, %v29, 0
    %v51 = vsel %vm46, %v30, 0
    %53 = vmatprep.subr.mxu0 0.0
    %54 = vmatpush1.msra.mxu0 %v44
    %55 = vmatprep.subr.mxu0 0.0
    %56 = vmatpush1.msra.mxu0 %v45
    %57 = vmatprep.subr.mxu0 0.0
    %58 = vmatpush1.msra.mxu0 0.0
    %59 = vmatprep.subr.mxu0 0.0
    %60 = vmatpush1.msra.mxu0 0.0
    %61 = vmatprep.subr.mxu0 0.0
    %62 = vmatpush1.msra.mxu0 0.0
    %63 = vmatprep.subr.mxu0 0.0
    %64 = vmatpush1.msra.mxu0 0.0
    %65 = vmatprep.subr.mxu0 0.0
    %66 = vmatpush1.msra.mxu0 0.0
    %67 = vmatprep.subr.mxu0 0.0
    %68 = vmatpush1.msra.mxu0 0.0
    %69 = vmatprep.subr.mxu0 0.0
    %70 = vmatpush1.msra.mxu0 0.0
    %71 = vmatprep.subr.mxu0 0.0
    %72 = vmatpush1.msra.mxu0 0.0
    %73 = vmatprep.subr.mxu0 0.0
    %74 = vmatpush1.msra.mxu0 0.0
    %75 = vmatprep.subr.mxu0 0.0
    %76 = vmatpush1.msra.mxu0 0.0
    %77 = vmatprep.subr.mxu0 0.0
    %78 = vmatpush1.msra.mxu0 0.0
    %79 = vmatprep.subr.mxu0 0.0
    %80 = vmatpush1.msra.mxu0 0.0
    %81 = vmatprep.subr.mxu0 0.0
    %82 = vmatpush1.msra.mxu0 0.0
    %83 = vmatprep.subr.mxu0 0.0
    %84 = vmatpush1.msra.mxu0 0.0
    %85 = vmatprep.subr.mxu0 0.0
    %86 = vmatpush1.msra.mxu0 0.0
    %87 = vmatprep.subr.mxu0 0.0
    %88 = vmatpush1.msra.mxu0 0.0
    %89 = vmatprep.subr.mxu0 0.0
    %90 = vmatpush1.msra.mxu0 0.0
    %91 = vmatprep.subr.mxu0 0.0
    %92 = vmatpush1.msra.mxu0 0.0
    %93 = vmatprep.subr.mxu0 0.0
    %94 = vmatpush1.msra.mxu0 0.0
    %95 = vmatprep.subr.mxu0 0.0
    %96 = vmatpush1.msra.mxu0 0.0
    %97 = vmatprep.subr.mxu0 0.0
    %98 = vmatpush1.msra.mxu0 0.0
    %99 = vmatprep.subr.mxu0 0.0
    %100 = vmatpush1.msra.mxu0 0.0
    %101 = vmatprep.subr.mxu0 0.0
    %102 = vmatpush1.msra.mxu0 0.0
    %103 = vmatprep.subr.mxu0 0.0
    %104 = vmatpush1.msra.mxu0 0.0
    %105 = vmatprep.subr.mxu0 0.0
    %106 = vmatpush1.msra.mxu0 0.0
    %107 = vmatprep.subr.mxu0 0.0
    %108 = vmatpush1.msra.mxu0 0.0
    %109 = vmatprep.subr.mxu0 0.0
    %110 = vmatpush1.msra.mxu0 0.0
    %111 = vmatprep.subr.mxu0 0.0
    %112 = vmatpush1.msra.mxu0 0.0
    %113 = vmatprep.subr.mxu0 0.0
    %114 = vmatpush1.msra.mxu0 0.0
    %115 = vmatprep.subr.mxu0 0.0
    %116 = vmatpush1.msra.mxu0 0.0
    %117 = vmatprep.mubr.f32.mxu0 0.0
    %118 = vmatmul.mubr.f32.gmra.mrb[0].mxu0 %v48
    %v119 = vpop.f32.mrb[0].mxu0
    %v120 = vadd.f32 0.0, %v119
    %v121 = vpop.f32.mrb[0].mxu0
    %122 = vmatprep.mubr.f32.mxu0 0.0
    %123 = vmatmul.mubr.f32.gmra.mrb[0].mxu0 %v51
    %v124 = vpop.f32.mrb[0].mxu0
    %v125 = vadd.f32 0.0, %v124
    %v126 = vpop.f32.mrb[0].mxu0
    %127 = vdwg.mxu0
    %v129 = vsel %vm46, %v27, 0
    %v132 = vsel %vm46, %v28, 0
    %134 = vmatprep.subr.mxu0 0.0
    %135 = vmatpush1.msra.mxu0 %v42
    %136 = vmatprep.subr.mxu0 0.0
    %137 = vmatpush1.msra.mxu0 %v43
    %138 = vmatprep.subr.mxu0 0.0
    %139 = vmatpush1.msra.mxu0 0.0
    %140 = vmatprep.subr.mxu0 0.0
    %141 = vmatpush1.msra.mxu0 0.0
    %142 = vmatprep.subr.mxu0 0.0
    %143 = vmatpush1.msra.mxu0 0.0
    %144 = vmatprep.subr.mxu0 0.0
    %145 = vmatpush1.msra.mxu0 0.0
    %146 = vmatprep.subr.mxu0 0.0
    %147 = vmatpush1.msra.mxu0 0.0
    %148 = vmatprep.subr.mxu0 0.0
    %149 = vmatpush1.msra.mxu0 0.0
    %150 = vmatprep.subr.mxu0 0.0
    %151 = vmatpush1.msra.mxu0 0.0
    %152 = vmatprep.subr.mxu0 0.0
    %153 = vmatpush1.msra.mxu0 0.0
    %154 = vmatprep.subr.mxu0 0.0
    %155 = vmatpush1.msra.mxu0 0.0
    %156 = vmatprep.subr.mxu0 0.0
    %157 = vmatpush1.msra.mxu0 0.0
    %158 = vmatprep.subr.mxu0 0.0
    %159 = vmatpush1.msra.mxu0 0.0
    %160 = vmatprep.subr.mxu0 0.0
    %161 = vmatpush1.msra.mxu0 0.0
    %162 = vmatprep.subr.mxu0 0.0
    %163 = vmatpush1.msra.mxu0 0.0
    %164 = vmatprep.subr.mxu0 0.0
    %165 = vmatpush1.msra.mxu0 0.0
    %166 = vmatprep.subr.mxu0 0.0
    %167 = vmatpush1.msra.mxu0 0.0
    %168 = vmatprep.subr.mxu0 0.0
    %169 = vmatpush1.msra.mxu0 0.0
    %170 = vmatprep.subr.mxu0 0.0
    %171 = vmatpush1.msra.mxu0 0.0
    %172 = vmatprep.subr.mxu0 0.0
    %173 = vmatpush1.msra.mxu0 0.0
    %174 = vmatprep.subr.mxu0 0.0
    %175 = vmatpush1.msra.mxu0 0.0
    %176 = vmatprep.subr.mxu0 0.0
    %177 = vmatpush1.msra.mxu0 0.0
    %178 = vmatprep.subr.mxu0 0.0
    %179 = vmatpush1.msra.mxu0 0.0
    %180 = vmatprep.subr.mxu0 0.0
    %181 = vmatpush1.msra.mxu0 0.0
    %182 = vmatprep.subr.mxu0 0.0
    %183 = vmatpush1.msra.mxu0 0.0
    %184 = vmatprep.subr.mxu0 0.0
    %185 = vmatpush1.msra.mxu0 0.0
    %186 = vmatprep.subr.mxu0 0.0
    %187 = vmatpush1.msra.mxu0 0.0
    %188 = vmatprep.subr.mxu0 0.0
    %189 = vmatpush1.msra.mxu0 0.0
    %190 = vmatprep.subr.mxu0 0.0
    %191 = vmatpush1.msra.mxu0 0.0
    %192 = vmatprep.subr.mxu0 0.0
    %193 = vmatpush1.msra.mxu0 0.0
    %194 = vmatprep.subr.mxu0 0.0
    %195 = vmatpush1.msra.mxu0 0.0
    %196 = vmatprep.subr.mxu0 0.0
    %197 = vmatpush1.msra.mxu0 0.0
    %198 = vmatprep.mubr.f32.mxu0 0.0
    %199 = vmatmul.mubr.f32.gmra.mrb[0].mxu0 %v129
    %v200 = vpop.f32.mrb[0].mxu0
    %v201 = vadd.f32 %v120, %v200
    %v202 = vpop.f32.mrb[0].mxu0
    %203 = vmatprep.mubr.f32.mxu0 0.0
    %204 = vmatmul.mubr.f32.gmra.mrb[0].mxu0 %v132
    %v205 = vpop.f32.mrb[0].mxu0
    %v206 = vadd.f32 %v125, %v205
    %v207 = vpop.f32.mrb[0].mxu0
    %208 = vdwg.mxu0
    %v209 = vsub.f32 %v27, %v40
    %v210 = vsub.f32 %v28, %v41
    %v211 = vld [vmem:[%s4] sm:$0xff]
    %v212 = vld [vmem:[%s4 + $0x8] sm:$0xff]
    %v214 = vsel %vm46, %v209, 0
    %v217 = vsel %vm46, %v210, 0
    %219 = vmatprep.subr.mxu0 0.0
    %220 = vmatpush1.msra.mxu0 %v211
    %221 = vmatprep.subr.mxu0 0.0
    %222 = vmatpush1.msra.mxu0 %v212
    %223 = vmatprep.subr.mxu0 0.0
    %224 = vmatpush1.msra.mxu0 0.0
    %225 = vmatprep.subr.mxu0 0.0
    %226 = vmatpush1.msra.mxu0 0.0
    %227 = vmatprep.subr.mxu0 0.0
    %228 = vmatpush1.msra.mxu0 0.0
    %229 = vmatprep.subr.mxu0 0.0
    %230 = vmatpush1.msra.mxu0 0.0
    %231 = vmatprep.subr.mxu0 0.0
    %232 = vmatpush1.msra.mxu0 0.0
    %233 = vmatprep.subr.mxu0 0.0
    %234 = vmatpush1.msra.mxu0 0.0
    %235 = vmatprep.subr.mxu0 0.0
    %236 = vmatpush1.msra.mxu0 0.0
    %237 = vmatprep.subr.mxu0 0.0
    %238 = vmatpush1.msra.mxu0 0.0
    %239 = vmatprep.subr.mxu0 0.0
    %240 = vmatpush1.msra.mxu0 0.0
    %241 = vmatprep.subr.mxu0 0.0
    %242 = vmatpush1.msra.mxu0 0.0
    %243 = vmatprep.subr.mxu0 0.0
    %244 = vmatpush1.msra.mxu0 0.0
    %245 = vmatprep.subr.mxu0 0.0
    %246 = vmatpush1.msra.mxu0 0.0
    %247 = vmatprep.subr.mxu0 0.0
    %248 = vmatpush1.msra.mxu0 0.0
    %249 = vmatprep.subr.mxu0 0.0
    %250 = vmatpush1.msra.mxu0 0.0
    %251 = vmatprep.subr.mxu0 0.0
    %252 = vmatpush1.msra.mxu0 0.0
    %253 = vmatprep.subr.mxu0 0.0
    %254 = vmatpush1.msra.mxu0 0.0
    %255 = vmatprep.subr.mxu0 0.0
    %256 = vmatpush1.msra.mxu0 0.0
    %257 = vmatprep.subr.mxu0 0.0
    %258 = vmatpush1.msra.mxu0 0.0
    %259 = vmatprep.subr.mxu0 0.0
    %260 = vmatpush1.msra.mxu0 0.0
    %261 = vmatprep.subr.mxu0 0.0
    %262 = vmatpush1.msra.mxu0 0.0
    %263 = vmatprep.subr.mxu0 0.0
    %264 = vmatpush1.msra.mxu0 0.0
    %265 = vmatprep.subr.mxu0 0.0
    %266 = vmatpush1.msra.mxu0 0.0
    %267 = vmatprep.subr.mxu0 0.0
    %268 = vmatpush1.msra.mxu0 0.0
    %269 = vmatprep.subr.mxu0 0.0
    %270 = vmatpush1.msra.mxu0 0.0
    %271 = vmatprep.subr.mxu0 0.0
    %272 = vmatpush1.msra.mxu0 0.0
    %273 = vmatprep.subr.mxu0 0.0
    %274 = vmatpush1.msra.mxu0 0.0
    %275 = vmatprep.subr.mxu0 0.0
    %276 = vmatpush1.msra.mxu0 0.0
    %277 = vmatprep.subr.mxu0 0.0
    %278 = vmatpush1.msra.mxu0 0.0
    %279 = vmatprep.subr.mxu0 0.0
    %280 = vmatpush1.msra.mxu0 0.0
    %281 = vmatprep.subr.mxu0 0.0
    %282 = vmatpush1.msra.mxu0 0.0
    %283 = vmatprep.mubr.f32.mxu0 0.0
    %284 = vmatmul.mubr.f32.gmra.mrb[0].mxu0 %v214
    %v285 = vpop.f32.mrb[0].mxu0
    %v286 = vadd.f32 0.0, %v285
    %v287 = vpop.f32.mrb[0].mxu0
    %288 = vmatprep.mubr.f32.mxu0 0.0
    %289 = vmatmul.mubr.f32.gmra.mrb[0].mxu0 %v217
    %v290 = vpop.f32.mrb[0].mxu0
    %v291 = vadd.f32 0.0, %v290
    %v292 = vpop.f32.mrb[0].mxu0
    %293 = vdwg.mxu0
    %v294 = vadd.f32 %v201, %v286
    %v295 = vadd.f32 %v206, %v291
    %v296 = vld [vmem:[%s5] sm:$0xff]
    %v297 = vld [vmem:[%s5 + $0x8] sm:$0xff]
    %298 = vmatprep.subr.mxu0 0.0
    %299 = vmatpush1.msra.mxu0 %v296
    %300 = vmatprep.subr.mxu0 0.0
    %301 = vmatpush1.msra.mxu0 %v297
    %302 = vmatprep.subr.mxu0 0.0
    %303 = vmatpush1.msra.mxu0 0.0
    %304 = vmatprep.subr.mxu0 0.0
    %305 = vmatpush1.msra.mxu0 0.0
    %306 = vmatprep.subr.mxu0 0.0
    %307 = vmatpush1.msra.mxu0 0.0
    %308 = vmatprep.subr.mxu0 0.0
    %309 = vmatpush1.msra.mxu0 0.0
    %310 = vmatprep.subr.mxu0 0.0
    %311 = vmatpush1.msra.mxu0 0.0
    %312 = vmatprep.subr.mxu0 0.0
    %313 = vmatpush1.msra.mxu0 0.0
    %314 = vmatprep.subr.mxu0 0.0
    %315 = vmatpush1.msra.mxu0 0.0
    %316 = vmatprep.subr.mxu0 0.0
    %317 = vmatpush1.msra.mxu0 0.0
    %318 = vmatprep.subr.mxu0 0.0
    %319 = vmatpush1.msra.mxu0 0.0
    %320 = vmatprep.subr.mxu0 0.0
    %321 = vmatpush1.msra.mxu0 0.0
    %322 = vmatprep.subr.mxu0 0.0
    %323 = vmatpush1.msra.mxu0 0.0
    %324 = vmatprep.subr.mxu0 0.0
    %325 = vmatpush1.msra.mxu0 0.0
    %326 = vmatprep.subr.mxu0 0.0
    %327 = vmatpush1.msra.mxu0 0.0
    %328 = vmatprep.subr.mxu0 0.0
    %329 = vmatpush1.msra.mxu0 0.0
    %330 = vmatprep.subr.mxu0 0.0
    %331 = vmatpush1.msra.mxu0 0.0
    %332 = vmatprep.subr.mxu0 0.0
    %333 = vmatpush1.msra.mxu0 0.0
    %334 = vmatprep.subr.mxu0 0.0
    %335 = vmatpush1.msra.mxu0 0.0
    %336 = vmatprep.subr.mxu0 0.0
    %337 = vmatpush1.msra.mxu0 0.0
    %338 = vmatprep.subr.mxu0 0.0
    %339 = vmatpush1.msra.mxu0 0.0
    %340 = vmatprep.subr.mxu0 0.0
    %341 = vmatpush1.msra.mxu0 0.0
    %342 = vmatprep.subr.mxu0 0.0
    %343 = vmatpush1.msra.mxu0 0.0
    %344 = vmatprep.subr.mxu0 0.0
    %345 = vmatpush1.msra.mxu0 0.0
    %346 = vmatprep.subr.mxu0 0.0
    %347 = vmatpush1.msra.mxu0 0.0
    %348 = vmatprep.subr.mxu0 0.0
    %349 = vmatpush1.msra.mxu0 0.0
    %350 = vmatprep.subr.mxu0 0.0
    %351 = vmatpush1.msra.mxu0 0.0
    %352 = vmatprep.subr.mxu0 0.0
    %353 = vmatpush1.msra.mxu0 0.0
    %354 = vmatprep.subr.mxu0 0.0
    %355 = vmatpush1.msra.mxu0 0.0
    %356 = vmatprep.subr.mxu0 0.0
    %357 = vmatpush1.msra.mxu0 0.0
    %358 = vmatprep.subr.mxu0 0.0
    %359 = vmatpush1.msra.mxu0 0.0
    %360 = vmatprep.subr.mxu0 0.0
    %361 = vmatpush1.msra.mxu0 0.0
    %362 = vmatprep.mubr.f32.mxu0 0.0
    %363 = vmatmul.mubr.f32.gmra.mrb[0].mxu0 %v48
    %v364 = vpop.f32.mrb[0].mxu0
    %v365 = vadd.f32 0.0, %v364
    %v366 = vpop.f32.mrb[0].mxu0
    %367 = vmatprep.mubr.f32.mxu0 0.0
    %368 = vmatmul.mubr.f32.gmra.mrb[0].mxu0 %v51
    %v369 = vpop.f32.mrb[0].mxu0
    %v370 = vadd.f32 0.0, %v369
    %v371 = vpop.f32.mrb[0].mxu0
    %372 = vdwg.mxu0
    %v373 = vadd.f32 %v294, %v365
    %v374 = vadd.f32 %v295, %v370
    %v375 = vld [vmem:[%s6] sm:$0xff]
    %v376 = vld [vmem:[%s6 + $0x8] sm:$0xff]
    %v377 = vsub.f32 %v373, %v375
    %v378 = vsub.f32 %v374, %v376
    %v379 = vmul.f32 %v377, %v377
    %v380 = vmul.f32 %v378, %v378
    %vm381 = vcmask 15360
    %v382 = vsel %vm381, %v379, 0.0
    %v383 = vsel %vm381, %v380, 0.0
    %v384 = vadd.f32 %v382, %v383
    %v385 = vrot.slane %v384, 4
    %v386 = vadd.f32 %v384, %v385
    %v387 = vrot.slane %v386, 2
    %v388 = vadd.f32 %v386, %v387
    %v389 = vrot.slane %v388, 1
    %v390 = vadd.f32 %v388, %v389
    %v391 = vrsqrt.pop %v390
    %v392 = vmul.f32 %v390, %v391
    %vm393 = vcmp.eq.f32.partialorder %v390, inf
    %v394 = vsel %vm393, %v390, %v392
    %vm395 = vcmp.eq.f32.partialorder %v390, 0.0
    %v396 = vand.u32 %v390, 2147483648
    %v397 = vsel %vm395, %v396, %v394
    %vm398 = vcmask 8192
    %v399 = vsel %vm398, %v397, 0.0
    %400 = vadd.xlane.f32.xlu0 %v399
    %v401 = vpop.xlane.xlu0 %400
    %v402 = vrot.slane %v401, 4
    %v403 = vadd.f32 %v401, %v402
    %v404 = vrot.slane %v403, 2
    %v405 = vadd.f32 %v403, %v404
    %v406 = vrot.slane %v405, 1
    %v407 = vadd.f32 %v405, %v406
    %s408 = vtos %v407
    %v409 = vstv %s408
    %v410 = vmul.f32 %v409, 0.5
    %vm411 = vcmask 0
    %412 = vst.msk [vmem:[#allocation2] sm:$0x1] %vm411, %v410
    // Predicated region
    $region30: #{nct_forward.5} parent=1 // pred_check
      _
    $region31: #{nct_forward.5} parent=1 // pred_check_branch
      %414 = sbr.rel (0) target = $region33
    $region32: #{nct_forward.5} parent=1 // pred_region
      %s416 = ssub.s32 16, 16
      %417 = vsyncadd [#allocation3], %s416
      %s419 = sshll.u32 [#allocation2], 4
      %s420 = int_to_ptr.vmem [resolvable:$true] %s419
      %422 = dma.vmem_to_hbm [thread:$0]  %s420, 16, %s7, [#allocation3]
    $region33: #{nct_forward.5} parent=1 // pred_fallthru
      _
    // Predicated region
    $region34: #{nct_forward.5} parent=1 // pred_check
      _
    $region35: #{nct_forward.5} parent=1 // pred_check_branch
      %424 = sbr.rel (0) target = $region37
    $region36: #{nct_forward.5} parent=1 // pred_region
      %425 = dma.done [#allocation3], 16
    $region37: #{nct_forward.5} parent=1 // pred_fallthru
      _
    %426 = vsyncpa [#allocation3], 1

</llo_original>
